<compile_context>
chip_gen: v5e
topology: v5e:2x2
jax: 0.10.0
libtpu: 0.0.40
codegen_flags: <defaults>
</compile_context>

<pallas_src>
import math

import jax
import jax.numpy as jnp
from jax.experimental import pallas as pl
from jax.experimental.pallas import tpu as pltpu

# ----------------------------------------------------------------------------
# Scaled-down configuration (structure identical to the PyTorch module;
# original values noted in comments).
# ----------------------------------------------------------------------------
ACTION_DIM = 2           # module: 2
ACTION_HORIZON = 30      # module: 30
PATCH_GRID = 4           # module: 14   -> n_obs_steps = PATCH_GRID ** 2
N_OBS_STEPS = PATCH_GRID ** 2
IMG_FEAT_DIM = 96        # module: 768  (MAE ViT-Base feature dim)
HIDDEN_SIZE = 64         # module: 512  (proj_static_img out dim == cond_dim)
N_EMB = 128              # TransformerForDiffusion default: 768
N_HEAD = 4               # default: 12
HEAD_DIM = N_EMB // N_HEAD
N_LAYER = 2              # default: 12
CLIP_TOK_DIM = 32
CLIP_VOCAB = 128
CLIP_CTX = 8
IMG_SIZE = 16            # -> ViT patch size = IMG_SIZE // PATCH_GRID = 4
IMG_CH = 3
NEG_INF = -1e30          # stands in for float('-inf') in the attention masks

T_COND = 1 + N_OBS_STEPS + 1   # time token + patch tokens + language token = 18
T_PAD = 32                      # ACTION_HORIZON padded to a sublane multiple
TC_PAD = 24                     # T_COND padded to a sublane multiple
IN_PAD = 128                    # lane-dense padding for narrow input feature dims
OUT_PAD = 128                   # lane-dense padding for the 2-dim head output
SCALE = 1.0 / math.sqrt(HEAD_DIM)


# ----------------------------------------------------------------------------
# In-kernel helpers (traced inside the Pallas kernel)
# ----------------------------------------------------------------------------
def _ln(x, g, b, eps=1e-5):
    """LayerNorm over the last axis; x:(M,E) f32, g/b:(1,E) f32."""
    mu = jnp.mean(x, axis=-1, keepdims=True)
    var = jnp.mean((x - mu) * (x - mu), axis=-1, keepdims=True)
    return (x - mu) * jax.lax.rsqrt(var + eps) * g + b


def _mha_proj(q, k, v, mask_add, wo):
    """Multi-head attention fused with its output projection (no bias).

    q:(B,T,E) k,v:(B,S,E) f32; mask_add:(T,S) additive f32; wo:(E,E) bf16.
    Returns (B*T, E) f32 == concat_heads(softmax(q k^T * scale + mask) v) @ wo.
    Heads accumulate through sublane row-slices of wo (no lane concat).
    """
    Bq, T, _ = q.shape
    acc = jnp.zeros((Bq * T, N_EMB), jnp.float32)
    for h in range(N_HEAD):
        sl = slice(h * HEAD_DIM, (h + 1) * HEAD_DIM)
        qh = q[..., sl].astype(jnp.bfloat16)
        kh = k[..., sl].astype(jnp.bfloat16)
        vh = v[..., sl].astype(jnp.bfloat16)
        s = jnp.einsum('btd,bsd->bts', qh, kh,
                       preferred_element_type=jnp.float32) * SCALE + mask_add
        s = s - jnp.max(s, axis=-1, keepdims=True)
        p = jnp.exp(s)
        p = p * pl.reciprocal(jnp.sum(p, axis=-1, keepdims=True), approx=True)
        oh = jnp.einsum('bts,bsd->btd', p.astype(jnp.bfloat16), vh,
                        preferred_element_type=jnp.float32)
        acc = acc + jnp.dot(oh.reshape(Bq * T, HEAD_DIM).astype(jnp.bfloat16),
                            wo[sl, :], preferred_element_type=jnp.float32)
    return acc


# ----------------------------------------------------------------------------
# Single fused kernel: prep (layer 0) + N_LAYER decoder layers + head (last)
# ----------------------------------------------------------------------------
def _tfd_kernel(sample_ref, time_ref, cond_ref, pos_ref, cpos_ref,
                emb_w_ref, enc1_w_ref, enc2_w_ref, head_w_ref, psmall_ref,
                dbig_ref, dff2_ref, dsmall_ref,
                out_ref,
                x_scr, mem_scr, mself_scr, mmem_scr):
    E = N_EMB
    l = pl.program_id(1)
    Bb, T, _ = x_scr.shape
    S = TC_PAD
    M = Bb * T
    Mc = Bb * S

    def pcol(a, b):                    # packed prep/head small params, (1, nE) f32
        return psmall_ref[:, a * E:b * E]

    # ---------------- layer 0: masks, token embeddings, cond memory ----------
    @pl.when(l == 0)
    def _prep():
        # additive attention masks built in-kernel, kept in VMEM scratch
        ti = jax.lax.broadcasted_iota(jnp.int32, (T, T), 0)
        tj = jax.lax.broadcasted_iota(jnp.int32, (T, T), 1)
        mself_scr[...] = jnp.where(tj <= ti, 0.0, NEG_INF).astype(jnp.float32)
        mi = jax.lax.broadcasted_iota(jnp.int32, (T, S), 0)
        ms = jax.lax.broadcasted_iota(jnp.int32, (T, S), 1)
        mmem_scr[...] = jnp.where((mi >= ms - 1) & (ms < T_COND),
                                  0.0, NEG_INF).astype(jnp.float32)

        # decoder input tokens: input_emb(sample) + pos_emb
        smp = sample_ref[...].reshape(M, IN_PAD).astype(jnp.bfloat16)
        x0 = jnp.dot(smp, emb_w_ref[:, 0:E],
                     preferred_element_type=jnp.float32) + pcol(0, 1)
        x_scr[...] = x0.reshape(Bb, T, E) + pos_ref[...]

        # cond tokens: [time_emb, cond_obs_emb(obs_features)] + cond_pos_emb
        cnd = cond_ref[...].reshape(Mc, IN_PAD).astype(jnp.bfloat16)
        ce = jnp.dot(cnd, emb_w_ref[:, E:2 * E],
                     preferred_element_type=jnp.float32) + pcol(1, 2)
        ce = ce.reshape(Bb, S, E)
        is_tok0 = (jax.lax.broadcasted_iota(jnp.int32, (S, E), 0) == 0)[None]
        ce = jnp.where(is_tok0, time_ref[...], ce) + cpos_ref[...]

        # cond encoder = Linear -> Mish -> Linear   (n_cond_layers == 0 branch)
        h = jnp.dot(ce.reshape(Mc, E).astype(jnp.bfloat16), enc1_w_ref[...],
                    preferred_element_type=jnp.float32) + pcol(2, 6)
        sp = jnp.maximum(h, 0.0) + jnp.log(1.0 + jnp.exp(-jnp.abs(h)))   # softplus
        h = h * jnp.tanh(sp)                                             # mish
        mem = jnp.dot(h.astype(jnp.bfloat16), enc2_w_ref[...],
                      preferred_element_type=jnp.float32) + pcol(6, 7)
        mem_scr[...] = mem.reshape(Bb, S, E)                             # f32 memory

    # ---------------- decoder layer l (pre-norm) ------------------------------
    def dcol(a, b):                    # packed per-layer LN/bias params, (1, nE) f32
        return dsmall_ref[l, :, a * E:b * E]

    def dbig(a, b):                    # packed per-layer weight slices, (E, nE) bf16
        return dbig_ref[l, :, a * E:b * E]

    xf = x_scr[...].reshape(M, E)                # resident activation, f32
    mask_self = mself_scr[...]
    mask_mem = mmem_scr[...]

    # -- causal self attention --
    h = _ln(xf, dcol(0, 1), dcol(1, 2))
    qkv = (jnp.dot(h.astype(jnp.bfloat16), dbig(0, 3),
                   preferred_element_type=jnp.float32) + dcol(2, 5)
           ).reshape(Bb, T, 3 * E)
    attn = _mha_proj(qkv[..., 0:E], qkv[..., E:2 * E], qkv[..., 2 * E:3 * E],
                     mask_self, dbig(3, 4))
    xf = xf + attn + dcol(5, 6)

    # -- cross attention over the cond memory --
    h = _ln(xf, dcol(6, 7), dcol(7, 8))
    q = (jnp.dot(h.astype(jnp.bfloat16), dbig(4, 5),
                 preferred_element_type=jnp.float32) + dcol(8, 9)).reshape(Bb, T, E)
    kv = (jnp.dot(mem_scr[...].reshape(Mc, E).astype(jnp.bfloat16), dbig(5, 7),
                  preferred_element_type=jnp.float32) + dcol(9, 11)
          ).reshape(Bb, S, 2 * E)
    cross = _mha_proj(q, kv[..., 0:E], kv[..., E:2 * E], mask_mem, dbig(7, 8))
    xf = xf + cross + dcol(11, 12)

    # -- feed forward --
    h = _ln(xf, dcol(12, 13), dcol(13, 14))
    f = jnp.dot(h.astype(jnp.bfloat16), dbig(8, 12),
                preferred_element_type=jnp.float32) + dcol(14, 18)
    # TODO(synk): PyTorch uses exact erf GELU; tanh approximation used here.
    c = math.sqrt(2.0 / math.pi)
    f = 0.5 * f * (1.0 + jnp.tanh(c * (f + 0.044715 * f * f * f)))
    f = jnp.dot(f.astype(jnp.bfloat16), dff2_ref[l],
                preferred_element_type=jnp.float32) + dcol(18, 19)
    xf = xf + f

    x_scr[...] = xf.reshape(Bb, T, E)

    # ---------------- last layer: final LayerNorm + head ----------------------
    @pl.when(l == N_LAYER - 1)
    def _head():
        y = _ln(xf, pcol(7, 8), pcol(8, 9))
        o = jnp.dot(y.astype(jnp.bfloat16), head_w_ref[...],
                    preferred_element_type=jnp.float32) + pcol(9, 10)
        out_ref[...] = o.reshape(Bb, T, OUT_PAD)


# ----------------------------------------------------------------------------
# TransformerForDiffusion wrapper (single pallas_call)
# ----------------------------------------------------------------------------
def sinusoidal_pos_emb(timesteps, dim):
    half = dim // 2
    freqs = jnp.exp(jnp.arange(half, dtype=jnp.float32)
                    * (-math.log(10000.0) / (half - 1)))
    args = timesteps.astype(jnp.float32)[:, None] * freqs[None, :]
    return jnp.concatenate([jnp.sin(args), jnp.cos(args)], axis=-1)


def transformer_for_diffusion(p, sample, timesteps, cond):
    """sample:(B,T,2) timesteps:(B,) cond:(B,To,HIDDEN_SIZE) -> (B,T,2)."""
    B = sample.shape[0]
    E = N_EMB
    # Keep one "parallel" grid axis (uses both TensorCores on v7x); each block
    # carries B // b_split batch elements folded into the matmul M dimension.
    b_split = 2 if (B >= 2 and B % 2 == 0) else 1
    b_blk = B // b_split

    # Host-side: tiny sinusoidal embedding + zero padding for lane/sublane alignment.
    time_emb = sinusoidal_pos_emb(timesteps, E).reshape(B, 1, E)
    sample_p = jnp.zeros((B, T_PAD, IN_PAD), jnp.float32)
    sample_p = sample_p.at[:, :ACTION_HORIZON, :ACTION_DIM].set(sample)
    cond_p = jnp.zeros((B, TC_PAD, IN_PAD), jnp.float32)
    cond_p = cond_p.at[:, 1:1 + cond.shape[1], :HIDDEN_SIZE].set(cond)

    bmap3 = lambda b, l: (b, 0, 0)    # per-batch-block activations / output
    cmap3 = lambda b, l: (0, 0, 0)    # fully VMEM-resident 3-D operands
    cmap2 = lambda b, l: (0, 0)       # fully VMEM-resident 2-D operands

    out = pl.pallas_call(
        _tfd_kernel,
        out_shape=jax.ShapeDtypeStruct((B, T_PAD, OUT_PAD), jnp.float32),
        grid=(b_split, N_LAYER),
        in_specs=[
            pl.BlockSpec((b_blk, T_PAD, IN_PAD), bmap3),     # noisy actions (padded)
            pl.BlockSpec((b_blk, 1, E), bmap3),              # sinusoidal time embedding
            pl.BlockSpec((b_blk, TC_PAD, IN_PAD), bmap3),    # obs cond tokens (padded)
            pl.BlockSpec((1, T_PAD, E), cmap3),              # pos_emb
            pl.BlockSpec((1, TC_PAD, E), cmap3),             # cond_pos_emb
            pl.BlockSpec((IN_PAD, 2 * E), cmap2),            # [input_emb_w | cond_obs_emb_w]
            pl.BlockSpec((E, 4 * E), cmap2),                 # cond encoder linear 1
            pl.BlockSpec((4 * E, E), cmap2),                 # cond encoder linear 2
            pl.BlockSpec((E, OUT_PAD), cmap2),               # head weight
            pl.BlockSpec((1, 10 * E), cmap2),                # packed prep/head small params
            pl.BlockSpec((N_LAYER, E, 12 * E), cmap3),       # packed per-layer big weights
            pl.BlockSpec((N_LAYER, 4 * E, E), cmap3),        # per-layer FFN second weight
            pl.BlockSpec((N_LAYER, 1, 19 * E), cmap3),       # packed per-layer LN/bias params
        ],
        out_specs=pl.BlockSpec((b_blk, T_PAD, OUT_PAD), bmap3),
        scratch_shapes=[
            pltpu.VMEM((b_blk, T_PAD, E), jnp.float32),      # resident decoder activation
            pltpu.VMEM((b_blk, TC_PAD, E), jnp.float32),     # cond-encoder memory (f32)
            pltpu.VMEM((T_PAD, T_PAD), jnp.float32),         # additive causal mask
            pltpu.VMEM((T_PAD, TC_PAD), jnp.float32),        # additive memory mask
        ],
        compiler_params=pltpu.CompilerParams(
            dimension_semantics=("parallel", "arbitrary")),
    )(sample_p, time_emb, cond_p, p["pos_emb"], p["cond_pos_emb"],
      p["prep_emb_w"], p["enc1_w"], p["enc2_w"], p["head_w"], p["prep_small"],
      p["dec_big"], p["dec_ff2"], p["dec_small"])

    return out[:, :ACTION_HORIZON, :ACTION_DIM]


# ----------------------------------------------------------------------------
# Frozen-encoder stand-ins (shapes only; checkpoints unavailable) — plain JAX,
# these matmuls are tiny and do not warrant Pallas launches.
# ----------------------------------------------------------------------------
def clip_text_encode(p, tokens):
    # TODO(synk): frozen CLIP ViT-B/32 text transformer (checkpoint) is replaced by a
    # deterministic token-embedding + mean-pool + linear stand-in of the same shape.
    emb = jnp.take(p["clip_tok_emb"], tokens, axis=0)            # (B, L, CLIP_TOK_DIM)
    pooled = jnp.mean(emb, axis=1)                               # (B, CLIP_TOK_DIM)
    return jnp.dot(pooled, p["clip_proj_w"]) + p["clip_proj_b"]  # (B, HIDDEN_SIZE)


def mae_encode(p, rgb):
    # rgb: (N, C, H, W) NCHW.  Patchify + patch-embedding projection.
    # TODO(synk): the 12-block frozen MAE ViT-Base transformer trunk is omitted.
    N, C, H, W = rgb.shape
    ps = H // PATCH_GRID
    x = rgb.reshape(N, C, PATCH_GRID, ps, PATCH_GRID, ps)
    x = x.transpose(0, 2, 4, 1, 3, 5).reshape(N, N_OBS_STEPS, C * ps * ps)
    feats = jnp.dot(x, p["mae_patch_w"]) + p["mae_patch_b"]      # (N, P, IMG_FEAT_DIM)
    obs_embeddings = jnp.mean(feats, axis=1)                     # CLS-token stand-in
    return obs_embeddings, feats


def traj_predict_policy_forward(p, rgb_static_norm, language, timesteps, noisy_actions,
                                language_embedding=None, obs_embeddings=None,
                                patch_embeddings=None):
    B, S, C, H, W = rgb_static_norm.shape
    rgb = rgb_static_norm.reshape(B * S, C, H, W)
    if language_embedding is None and obs_embeddings is None and patch_embeddings is None:
        language_embedding = clip_text_encode(p, language)[:, None, :]      # (B,1,HIDDEN)
        obs_embeddings, patch_feats = mae_encode(p, rgb)                    # (B*S,F),(B*S,P,F)
        patch_embeddings = jnp.dot(patch_feats, p["proj_w"]) + p["proj_b"]  # (B*S,P,HIDDEN)
    obs_features = jnp.concatenate([patch_embeddings, language_embedding], axis=1)
    obs_cond = obs_features
    noise_pred = transformer_for_diffusion(p["tfd"], noisy_actions, timesteps, obs_cond)
    return noise_pred, language_embedding, obs_embeddings, patch_embeddings


# ----------------------------------------------------------------------------
# Deterministic parameter init (synthetic weights, no checkpoints).
# Per-layer decoder params are packed:
#   dec_big   (L, E, 12E) bf16 = [wqkv 3E | wo E | wq E | wkv 2E | wo2 E | ff1w 4E]
#   dec_ff2   (L, 4E, E)  bf16
#   dec_small (L, 1, 19E) f32  = [ln1_g, ln1_b, bqkv 3E, bo, ln2_g, ln2_b, bq,
#                                 bkv 2E, bo2, ln3_g, ln3_b, ff1b 4E, ff2b]
# prep/head params:
#   prep_emb_w (IN_PAD, 2E) bf16 = [input_emb_w | cond_obs_emb_w]
#   prep_small (1, 10E) f32 = [in_b, cond_b, enc1_b 4E, enc2_b, lnf_g, lnf_b, head_b]
# ----------------------------------------------------------------------------
def init_params(key):
    keys = iter(jax.random.split(key, 64))
    E, L = N_EMB, N_LAYER
    bf = jnp.bfloat16

    def nrm(shape, scale=0.02):
        return scale * jax.random.normal(next(keys), shape, dtype=jnp.float32)

    def zeros(shape):
        return jnp.zeros(shape, jnp.float32)

    def ones(shape):
        return jnp.ones(shape, jnp.float32)

    def pad_rows(w, rows):
        return jnp.zeros((rows, w.shape[1]), jnp.float32).at[:w.shape[0]].set(w)

    def pad_cols(w, cols):
        return jnp.zeros((w.shape[0], cols), jnp.float32).at[:, :w.shape[1]].set(w)

    dec_big = jnp.concatenate([
        nrm((L, E, 3 * E)),        # wqkv
        nrm((L, E, E)),            # wo
        nrm((L, E, E)),            # wq
        nrm((L, E, 2 * E)),        # wkv
        nrm((L, E, E)),            # wo2
        nrm((L, E, 4 * E)),        # ff1w
    ], axis=-1).astype(bf)
    dec_ff2 = nrm((L, 4 * E, E)).astype(bf)
    dec_small = jnp.concatenate([
        ones((L, 1, E)), zeros((L, 1, E)),                 # ln1 gamma/beta
        zeros((L, 1, 3 * E)), zeros((L, 1, E)),            # bqkv, bo
        ones((L, 1, E)), zeros((L, 1, E)),                 # ln2 gamma/beta
        zeros((L, 1, E)), zeros((L, 1, 2 * E)), zeros((L, 1, E)),  # bq, bkv, bo2
        ones((L, 1, E)), zeros((L, 1, E)),                 # ln3 gamma/beta
        zeros((L, 1, 4 * E)), zeros((L, 1, E)),            # ff1b, ff2b
    ], axis=-1)

    prep_emb_w = jnp.concatenate([
        pad_rows(nrm((ACTION_DIM, E)), IN_PAD),
        pad_rows(nrm((HIDDEN_SIZE, E)), IN_PAD),
    ], axis=-1).astype(bf)
    prep_small = jnp.concatenate([
        zeros((1, E)), zeros((1, E)),                      # input_emb_b, cond_obs_emb_b
        zeros((1, 4 * E)), zeros((1, E)),                  # enc1_b, enc2_b
        ones((1, E)), zeros((1, E)),                       # ln_f gamma/beta
        zeros((1, OUT_PAD)),                               # head_b
    ], axis=-1)

    tfd = {
        "prep_emb_w": prep_emb_w,
        "enc1_w": nrm((E, 4 * E)).astype(bf),
        "enc2_w": nrm((4 * E, E)).astype(bf),
        "head_w": pad_cols(nrm((E, ACTION_DIM)), OUT_PAD).astype(bf),
        "prep_small": prep_small,
        "pos_emb": pad_rows(nrm((ACTION_HORIZON, E)), T_PAD)[None],      # (1,T_PAD,E)
        "cond_pos_emb": pad_rows(nrm((T_COND, E)), TC_PAD)[None],        # (1,TC_PAD,E)
        "dec_big": dec_big,
        "dec_ff2": dec_ff2,
        "dec_small": dec_small,
    }

    patch_feat = IMG_CH * (IMG_SIZE // PATCH_GRID) ** 2
    return {
        "clip_tok_emb": nrm((CLIP_VOCAB, CLIP_TOK_DIM)),
        "clip_proj_w": nrm((CLIP_TOK_DIM, HIDDEN_SIZE)), "clip_proj_b": zeros((HIDDEN_SIZE,)),
        "mae_patch_w": nrm((patch_feat, IMG_FEAT_DIM)), "mae_patch_b": zeros((IMG_FEAT_DIM,)),
        "proj_w": nrm((IMG_FEAT_DIM, HIDDEN_SIZE)), "proj_b": zeros((HIDDEN_SIZE,)),
        "tfd": tfd,
    }


# ----------------------------------------------------------------------------
if __name__ == "__main__":
    root = jax.random.PRNGKey(0)
    kp, kr, kl, kt, ka = jax.random.split(root, 5)
    params = init_params(kp)

    B, SEQ = 2, 1
    rgb = jax.random.normal(kr, (B, SEQ, IMG_CH, IMG_SIZE, IMG_SIZE), jnp.float32)
    language = jax.random.randint(kl, (B, CLIP_CTX), 0, CLIP_VOCAB, dtype=jnp.int32)
    timesteps = jax.random.randint(kt, (B,), 0, 100, dtype=jnp.int32)
    noisy_actions = jax.random.normal(ka, (B, ACTION_HORIZON, ACTION_DIM), jnp.float32)

    fwd = jax.jit(traj_predict_policy_forward)
    noise_pred, lang_emb, obs_emb, patch_emb = fwd(
        params, rgb, language, timesteps, noisy_actions)
    jax.block_until_ready(noise_pred)

    assert noise_pred.shape == (B, ACTION_HORIZON, ACTION_DIM)
    assert lang_emb.shape == (B, 1, HIDDEN_SIZE)
    assert obs_emb.shape == (B * SEQ, IMG_FEAT_DIM)
    assert patch_emb.shape == (B * SEQ, N_OBS_STEPS, HIDDEN_SIZE)
    assert bool(jnp.all(jnp.isfinite(noise_pred)))
    print("KERNEL_OK")
</pallas_src>

<mosaic_0001>
module attributes {stable_mosaic.version = 11 : i64} {
  func.func @_tfd_kernel(%arg0: i32, %arg1: i32, %arg2: memref<1x32x128xf32, #tpu.memory_space<vmem>>, %arg3: memref<1x1x128xf32, #tpu.memory_space<vmem>>, %arg4: memref<1x24x128xf32, #tpu.memory_space<vmem>>, %arg5: memref<1x32x128xf32, #tpu.memory_space<vmem>>, %arg6: memref<1x24x128xf32, #tpu.memory_space<vmem>>, %arg7: memref<128x256xbf16, #tpu.memory_space<vmem>>, %arg8: memref<128x512xbf16, #tpu.memory_space<vmem>>, %arg9: memref<512x128xbf16, #tpu.memory_space<vmem>>, %arg10: memref<128x128xbf16, #tpu.memory_space<vmem>>, %arg11: memref<1x1280xf32, #tpu.memory_space<vmem>>, %arg12: memref<2x128x1536xbf16, #tpu.memory_space<vmem>>, %arg13: memref<2x512x128xbf16, #tpu.memory_space<vmem>>, %arg14: memref<2x1x2432xf32, #tpu.memory_space<vmem>>, %arg15: memref<1x32x128xf32, #tpu.memory_space<vmem>>, %arg16: memref<1x32x128xf32, #tpu.memory_space<vmem>>, %arg17: memref<1x24x128xf32, #tpu.memory_space<vmem>>, %arg18: memref<32x32xf32, #tpu.memory_space<vmem>>, %arg19: memref<32x24xf32, #tpu.memory_space<vmem>>) attributes {dimension_semantics = [#tpu.dimension_semantics<parallel>, #tpu.dimension_semantics<arbitrary>], iteration_bounds = array<i64: 2, 2>, scalar_prefetch = 0 : i64, scratch_operands = 4 : i64, tpu.core_type = #tpu.core_type<tc>, window_params = [{transform_indices = @transform_0, window_bounds = array<i64: 1, 32, 128>}, {transform_indices = @transform_1, window_bounds = array<i64: 1, 1, 128>}, {transform_indices = @transform_2, window_bounds = array<i64: 1, 24, 128>}, {pipeline_mode = #tpu.pipeline_mode<synchronous>, transform_indices = @transform_3, window_bounds = array<i64: 1, 32, 128>}, {pipeline_mode = #tpu.pipeline_mode<synchronous>, transform_indices = @transform_4, window_bounds = array<i64: 1, 24, 128>}, {pipeline_mode = #tpu.pipeline_mode<synchronous>, transform_indices = @transform_5, window_bounds = array<i64: 128, 256>}, {pipeline_mode = #tpu.pipeline_mode<synchronous>, transform_indices = @transform_6, window_bounds = array<i64: 128, 512>}, {pipeline_mode = #tpu.pipeline_mode<synchronous>, transform_indices = @transform_7, window_bounds = array<i64: 512, 128>}, {pipeline_mode = #tpu.pipeline_mode<synchronous>, transform_indices = @transform_8, window_bounds = array<i64: 128, 128>}, {pipeline_mode = #tpu.pipeline_mode<synchronous>, transform_indices = @transform_9, window_bounds = array<i64: 1, 1280>}, {pipeline_mode = #tpu.pipeline_mode<synchronous>, transform_indices = @transform_10, window_bounds = array<i64: 2, 128, 1536>}, {pipeline_mode = #tpu.pipeline_mode<synchronous>, transform_indices = @transform_11, window_bounds = array<i64: 2, 512, 128>}, {pipeline_mode = #tpu.pipeline_mode<synchronous>, transform_indices = @transform_12, window_bounds = array<i64: 2, 1, 2432>}, {transform_indices = @transform_13, window_bounds = array<i64: 1, 32, 128>}]} {
    %c0_i32 = arith.constant 0 : i32
    %0 = arith.cmpi eq, %arg1, %c0_i32 : i32
    %1 = arith.extui %0 : i1 to i32
    %c0_i32_0 = arith.constant 0 : i32
    %2 = arith.cmpi ne, %1, %c0_i32_0 : i32
    scf.if %2 {
      %420 = tpu.iota {dimensions = array<i32: 0>} : vector<32x32xi32>
      %421 = tpu.iota {dimensions = array<i32: 1>} : vector<32x32xi32>
      %422 = arith.cmpi sle, %421, %420 : vector<32x32xi32>
      %cst_113 = arith.constant 0.000000e+00 : f32
      %cst_114 = arith.constant -1.000000e+30 : f32
      %423 = vector.broadcast %cst_113 : f32 to vector<32x32xf32>
      %424 = vector.broadcast %cst_114 : f32 to vector<32x32xf32>
      %425 = arith.select %422, %423, %424 : vector<32x32xi1>, vector<32x32xf32>
      %c0_115 = arith.constant 0 : index
      %c0_116 = arith.constant 0 : index
      %426 = vector.load %arg18[%c0_115, %c0_116] : memref<32x32xf32, #tpu.memory_space<vmem>>, vector<32x32xf32>
      tpu.vector_store %arg18[%c0_115, %c0_116], %425 {strides = array<i32>} : memref<32x32xf32, #tpu.memory_space<vmem>>, vector<32x32xf32>,
      %427 = tpu.iota {dimensions = array<i32: 0>} : vector<32x24xi32>
      %428 = tpu.iota {dimensions = array<i32: 1>} : vector<32x24xi32>
      %c1_i32_117 = arith.constant 1 : i32
      %429 = vector.broadcast %c1_i32_117 : i32 to vector<32x24xi32>
      %430 = arith.subi %428, %429 : vector<32x24xi32>
      %431 = arith.cmpi sge, %427, %430 : vector<32x24xi32>
      %c18_i32 = arith.constant 18 : i32
      %432 = vector.broadcast %c18_i32 : i32 to vector<32x24xi32>
      %433 = arith.cmpi slt, %428, %432 : vector<32x24xi32>
      %434 = arith.andi %431, %433 : vector<32x24xi1>
      %cst_118 = arith.constant 0.000000e+00 : f32
      %cst_119 = arith.constant -1.000000e+30 : f32
      %435 = vector.broadcast %cst_118 : f32 to vector<32x24xf32>
      %436 = vector.broadcast %cst_119 : f32 to vector<32x24xf32>
      %437 = arith.select %434, %435, %436 : vector<32x24xi1>, vector<32x24xf32>
      %c0_120 = arith.constant 0 : index
      %c0_121 = arith.constant 0 : index
      %438 = vector.load %arg19[%c0_120, %c0_121] : memref<32x24xf32, #tpu.memory_space<vmem>>, vector<32x24xf32>
      tpu.vector_store %arg19[%c0_120, %c0_121], %437 {strides = array<i32>} : memref<32x24xf32, #tpu.memory_space<vmem>>, vector<32x24xf32>,
      %c0_122 = arith.constant 0 : index
      %c0_123 = arith.constant 0 : index
      %c0_124 = arith.constant 0 : index
      %439 = vector.load %arg2[%c0_122, %c0_123, %c0_124] : memref<1x32x128xf32, #tpu.memory_space<vmem>>, vector<1x32x128xf32>
      %440 = vector.shape_cast %439 : vector<1x32x128xf32> to vector<32x128xf32>
      %441 = arith.truncf %440 : vector<32x128xf32> to vector<32x128xbf16>
      %c0_125 = arith.constant 0 : index
      %c0_126 = arith.constant 0 : index
      %442 = vector.load %arg7[%c0_125, %c0_126] : memref<128x256xbf16, #tpu.memory_space<vmem>>, vector<128x128xbf16>
      %cst_127 = arith.constant dense<0.000000e+00> : vector<32x128xf32>
      %443 = tpu.matmul %441, %442, %cst_127 {dimension_numbers = #tpu.dot_dimension_numbers<[1], [0], [0], [1], [0, 0, 1, 1], [], []>} : vector<32x128xbf16>, vector<128x128xbf16>, vector<32x128xf32> -> vector<32x128xf32>
      %c0_128 = arith.constant 0 : index
      %c0_129 = arith.constant 0 : index
      %444 = vector.load %arg11[%c0_128, %c0_129] : memref<1x1280xf32, #tpu.memory_space<vmem>>, vector<1x128xf32>
      %445 = vector.broadcast %444 : vector<1x128xf32> to vector<32x128xf32>
      %446 = arith.addf %443, %445 : vector<32x128xf32>
      %447 = vector.shape_cast %446 : vector<32x128xf32> to vector<1x32x128xf32>
      %c0_130 = arith.constant 0 : index
      %c0_131 = arith.constant 0 : index
      %c0_132 = arith.constant 0 : index
      %448 = vector.load %arg5[%c0_130, %c0_131, %c0_132] : memref<1x32x128xf32, #tpu.memory_space<vmem>>, vector<1x32x128xf32>
      %449 = arith.addf %447, %448 : vector<1x32x128xf32>
      %c0_133 = arith.constant 0 : index
      %c0_134 = arith.constant 0 : index
      %c0_135 = arith.constant 0 : index
      %450 = vector.load %arg16[%c0_133, %c0_134, %c0_135] : memref<1x32x128xf32, #tpu.memory_space<vmem>>, vector<1x32x128xf32>
      tpu.vector_store %arg16[%c0_133, %c0_134, %c0_135], %449 {strides = array<i32>} : memref<1x32x128xf32, #tpu.memory_space<vmem>>, vector<1x32x128xf32>,
      %c0_136 = arith.constant 0 : index
      %c0_137 = arith.constant 0 : index
      %c0_138 = arith.constant 0 : index
      %451 = vector.load %arg4[%c0_136, %c0_137, %c0_138] : memref<1x24x128xf32, #tpu.memory_space<vmem>>, vector<1x24x128xf32>
      %452 = vector.shape_cast %451 : vector<1x24x128xf32> to vector<24x128xf32>
      %453 = arith.truncf %452 : vector<24x128xf32> to vector<24x128xbf16>
      %c0_139 = arith.constant 0 : index
      %c128_140 = arith.constant 128 : index
      %454 = vector.load %arg7[%c0_139, %c128_140] : memref<128x256xbf16, #tpu.memory_space<vmem>>, vector<128x128xbf16>
      %cst_141 = arith.constant dense<0.000000e+00> : vector<24x128xf32>
      %455 = tpu.matmul %453, %454, %cst_141 {dimension_numbers = #tpu.dot_dimension_numbers<[1], [0], [0], [1], [0, 0, 1, 1], [], []>} : vector<24x128xbf16>, vector<128x128xbf16>, vector<24x128xf32> -> vector<24x128xf32>
      %c0_142 = arith.constant 0 : index
      %c128_143 = arith.constant 128 : index
      %456 = vector.load %arg11[%c0_142, %c128_143] : memref<1x1280xf32, #tpu.memory_space<vmem>>, vector<1x128xf32>
      %457 = vector.broadcast %456 : vector<1x128xf32> to vector<24x128xf32>
      %458 = arith.addf %455, %457 : vector<24x128xf32>
      %459 = vector.shape_cast %458 : vector<24x128xf32> to vector<1x24x128xf32>
      %460 = tpu.iota {dimensions = array<i32: 0>} : vector<24x128xi32>
      %c0_i32_144 = arith.constant 0 : i32
      %461 = vector.broadcast %c0_i32_144 : i32 to vector<24x128xi32>
      %462 = arith.cmpi eq, %460, %461 : vector<24x128xi32>
      %463 = vector.shape_cast %462 : vector<24x128xi1> to vector<1x24x128xi1>
      %c0_145 = arith.constant 0 : index
      %c0_146 = arith.constant 0 : index
      %c0_147 = arith.constant 0 : index
      %464 = vector.load %arg3[%c0_145, %c0_146, %c0_147] : memref<1x1x128xf32, #tpu.memory_space<vmem>>, vector<1x1x128xf32>
      %465 = vector.shape_cast %464 : vector<1x1x128xf32> to vector<1x1x128xf32>
      %466 = vector.broadcast %465 : vector<1x1x128xf32> to vector<1x24x128xf32>
      %467 = arith.select %463, %466, %459 : vector<1x24x128xi1>, vector<1x24x128xf32>
      %c0_148 = arith.constant 0 : index
      %c0_149 = arith.constant 0 : index
      %c0_150 = arith.constant 0 : index
      %468 = vector.load %arg6[%c0_148, %c0_149, %c0_150] : memref<1x24x128xf32, #tpu.memory_space<vmem>>, vector<1x24x128xf32>
      %469 = arith.addf %467, %468 : vector<1x24x128xf32>
      %470 = vector.shape_cast %469 : vector<1x24x128xf32> to vector<24x128xf32>
      %471 = arith.truncf %470 : vector<24x128xf32> to vector<24x128xbf16>
      %c0_151 = arith.constant 0 : index
      %c0_152 = arith.constant 0 : index
      %472 = vector.load %arg8[%c0_151, %c0_152] : memref<128x512xbf16, #tpu.memory_space<vmem>>, vector<128x512xbf16>
      %cst_153 = arith.constant dense<0.000000e+00> : vector<24x512xf32>
      %473 = tpu.matmul %471, %472, %cst_153 {dimension_numbers = #tpu.dot_dimension_numbers<[1], [0], [0], [1], [0, 0, 1, 1], [], []>} : vector<24x128xbf16>, vector<128x512xbf16>, vector<24x512xf32> -> vector<24x512xf32>
      %c0_154 = arith.constant 0 : index
      %c256_155 = arith.constant 256 : index
      %474 = vector.load %arg11[%c0_154, %c256_155] : memref<1x1280xf32, #tpu.memory_space<vmem>>, vector<1x512xf32>
      %475 = vector.broadcast %474 : vector<1x512xf32> to vector<24x512xf32>
      %476 = arith.addf %473, %475 : vector<24x512xf32>
      %cst_156 = arith.constant 0.000000e+00 : f32
      %477 = vector.broadcast %cst_156 : f32 to vector<24x512xf32>
      %478 = arith.maximumf %476, %477 : vector<24x512xf32>
      %479 = math.absf %476 : vector<24x512xf32>
      %cst_157 = arith.constant 0.000000e+00 : f32
      %480 = vector.broadcast %cst_157 : f32 to vector<24x512xf32>
      %481 = arith.subf %480, %479 : vector<24x512xf32>
      %482 = math.exp %481 : vector<24x512xf32>
      %cst_158 = arith.constant 1.000000e+00 : f32
      %483 = vector.broadcast %cst_158 : f32 to vector<24x512xf32>
      %484 = arith.addf %483, %482 : vector<24x512xf32>
      %485 = math.log %484 : vector<24x512xf32>
      %486 = arith.addf %478, %485 : vector<24x512xf32>
      %487 = math.tanh %486 : vector<24x512xf32>
      %488 = arith.mulf %476, %487 : vector<24x512xf32>
      %489 = arith.truncf %488 : vector<24x512xf32> to vector<24x512xbf16>
      %c0_159 = arith.constant 0 : index
      %c0_160 = arith.constant 0 : index
      %490 = vector.load %arg9[%c0_159, %c0_160] : memref<512x128xbf16, #tpu.memory_space<vmem>>, vector<512x128xbf16>
      %cst_161 = arith.constant dense<0.000000e+00> : vector<24x128xf32>
      %491 = tpu.matmul %489, %490, %cst_161 {dimension_numbers = #tpu.dot_dimension_numbers<[1], [0], [0], [1], [0, 0, 1, 1], [], []>} : vector<24x512xbf16>, vector<512x128xbf16>, vector<24x128xf32> -> vector<24x128xf32>
      %c0_162 = arith.constant 0 : index
      %c768_163 = arith.constant 768 : index
      %492 = vector.load %arg11[%c0_162, %c768_163] : memref<1x1280xf32, #tpu.memory_space<vmem>>, vector<1x128xf32>
      %493 = vector.broadcast %492 : vector<1x128xf32> to vector<24x128xf32>
      %494 = arith.addf %491, %493 : vector<24x128xf32>
      %495 = vector.shape_cast %494 : vector<24x128xf32> to vector<1x24x128xf32>
      %c0_164 = arith.constant 0 : index
      %c0_165 = arith.constant 0 : index
      %c0_166 = arith.constant 0 : index
      %496 = vector.load %arg17[%c0_164, %c0_165, %c0_166] : memref<1x24x128xf32, #tpu.memory_space<vmem>>, vector<1x24x128xf32>
      tpu.vector_store %arg17[%c0_164, %c0_165, %c0_166], %495 {strides = array<i32>} : memref<1x24x128xf32, #tpu.memory_space<vmem>>, vector<1x24x128xf32>,
    } else {
    }
    %c0 = arith.constant 0 : index
    %c0_1 = arith.constant 0 : index
    %c0_2 = arith.constant 0 : index
    %3 = vector.load %arg16[%c0, %c0_1, %c0_2] : memref<1x32x128xf32, #tpu.memory_space<vmem>>, vector<1x32x128xf32>
    %4 = vector.shape_cast %3 : vector<1x32x128xf32> to vector<32x128xf32>
    %c0_3 = arith.constant 0 : index
    %c0_4 = arith.constant 0 : index
    %5 = vector.load %arg18[%c0_3, %c0_4] : memref<32x32xf32, #tpu.memory_space<vmem>>, vector<32x32xf32>
    %c0_5 = arith.constant 0 : index
    %c0_6 = arith.constant 0 : index
    %6 = vector.load %arg19[%c0_5, %c0_6] : memref<32x24xf32, #tpu.memory_space<vmem>>, vector<32x24xf32>
    %7 = arith.index_cast %arg1 : i32 to index
    %c0_7 = arith.constant 0 : index
    %c0_8 = arith.constant 0 : index
    %8 = vector.load %arg14[%7, %c0_7, %c0_8] : memref<2x1x2432xf32, #tpu.memory_space<vmem>>, vector<1x1x128xf32>
    %9 = vector.shape_cast %8 : vector<1x1x128xf32> to vector<1x128xf32>
    %10 = arith.index_cast %arg1 : i32 to index
    %c0_9 = arith.constant 0 : index
    %c128 = arith.constant 128 : index
    %11 = vector.load %arg14[%10, %c0_9, %c128] : memref<2x1x2432xf32, #tpu.memory_space<vmem>>, vector<1x1x128xf32>
    %12 = vector.shape_cast %11 : vector<1x1x128xf32> to vector<1x128xf32>
    %cst = arith.constant dense<0.000000e+00> : vector<32xf32>
    %13 = vector.multi_reduction <add>, %4, %cst [1] : vector<32x128xf32> to vector<32xf32>
    %14 = vector.shape_cast %13 : vector<32xf32> to vector<32x1xf32>
    %cst_10 = arith.constant 1.280000e+02 : f32
    %15 = vector.broadcast %cst_10 : f32 to vector<32x1xf32>
    %16 = arith.divf %14, %15 : vector<32x1xf32>
    %17 = vector.broadcast %16 : vector<32x1xf32> to vector<32x128xf32>
    %18 = arith.subf %4, %17 : vector<32x128xf32>
    %19 = vector.broadcast %16 : vector<32x1xf32> to vector<32x128xf32>
    %20 = arith.subf %4, %19 : vector<32x128xf32>
    %21 = arith.mulf %18, %20 : vector<32x128xf32>
    %cst_11 = arith.constant dense<0.000000e+00> : vector<32xf32>
    %22 = vector.multi_reduction <add>, %21, %cst_11 [1] : vector<32x128xf32> to vector<32xf32>
    %23 = vector.shape_cast %22 : vector<32xf32> to vector<32x1xf32>
    %cst_12 = arith.constant 1.280000e+02 : f32
    %24 = vector.broadcast %cst_12 : f32 to vector<32x1xf32>
    %25 = arith.divf %23, %24 : vector<32x1xf32>
    %26 = vector.broadcast %16 : vector<32x1xf32> to vector<32x128xf32>
    %27 = arith.subf %4, %26 : vector<32x128xf32>
    %cst_13 = arith.constant 9.99999974E-6 : f32
    %28 = vector.broadcast %cst_13 : f32 to vector<32x1xf32>
    %29 = arith.addf %25, %28 : vector<32x1xf32>
    %30 = math.rsqrt %29 : vector<32x1xf32>
    %31 = vector.broadcast %30 : vector<32x1xf32> to vector<32x128xf32>
    %32 = arith.mulf %27, %31 : vector<32x128xf32>
    %33 = vector.broadcast %9 : vector<1x128xf32> to vector<32x128xf32>
    %34 = arith.mulf %32, %33 : vector<32x128xf32>
    %35 = vector.broadcast %12 : vector<1x128xf32> to vector<32x128xf32>
    %36 = arith.addf %34, %35 : vector<32x128xf32>
    %37 = arith.truncf %36 : vector<32x128xf32> to vector<32x128xbf16>
    %38 = arith.index_cast %arg1 : i32 to index
    %c0_14 = arith.constant 0 : index
    %c0_15 = arith.constant 0 : index
    %39 = vector.load %arg12[%38, %c0_14, %c0_15] : memref<2x128x1536xbf16, #tpu.memory_space<vmem>>, vector<1x128x384xbf16>
    %40 = vector.shape_cast %39 : vector<1x128x384xbf16> to vector<128x384xbf16>
    %cst_16 = arith.constant dense<0.000000e+00> : vector<32x384xf32>
    %41 = tpu.matmul %37, %40, %cst_16 {dimension_numbers = #tpu.dot_dimension_numbers<[1], [0], [0], [1], [0, 0, 1, 1], [], []>} : vector<32x128xbf16>, vector<128x384xbf16>, vector<32x384xf32> -> vector<32x384xf32>
    %42 = arith.index_cast %arg1 : i32 to index
    %c0_17 = arith.constant 0 : index
    %c256 = arith.constant 256 : index
    %43 = vector.load %arg14[%42, %c0_17, %c256] : memref<2x1x2432xf32, #tpu.memory_space<vmem>>, vector<1x1x384xf32>
    %44 = vector.shape_cast %43 : vector<1x1x384xf32> to vector<1x384xf32>
    %45 = vector.broadcast %44 : vector<1x384xf32> to vector<32x384xf32>
    %46 = arith.addf %41, %45 : vector<32x384xf32>
    %47 = vector.shape_cast %46 : vector<32x384xf32> to vector<1x32x384xf32>
    %48 = vector.extract_strided_slice %47 {offsets = [0, 0, 0], sizes = [1, 32, 128], strides = [1, 1, 1]} : vector<1x32x384xf32> to vector<1x32x128xf32>
    %49 = vector.extract_strided_slice %47 {offsets = [0, 0, 128], sizes = [1, 32, 128], strides = [1, 1, 1]} : vector<1x32x384xf32> to vector<1x32x128xf32>
    %50 = vector.extract_strided_slice %47 {offsets = [0, 0, 256], sizes = [1, 32, 128], strides = [1, 1, 1]} : vector<1x32x384xf32> to vector<1x32x128xf32>
    %51 = arith.index_cast %arg1 : i32 to index
    %c0_18 = arith.constant 0 : index
    %c384 = arith.constant 384 : index
    %52 = vector.load %arg12[%51, %c0_18, %c384] : memref<2x128x1536xbf16, #tpu.memory_space<vmem>>, vector<1x128x128xbf16>
    %53 = vector.shape_cast %52 : vector<1x128x128xbf16> to vector<128x128xbf16>
    %cst_19 = arith.constant 0.000000e+00 : f32
    %54 = vector.broadcast %cst_19 : f32 to vector<32x128xf32>
    %55 = vector.extract_strided_slice %48 {offsets = [0, 0, 0], sizes = [1, 32, 32], strides = [1, 1, 1]} : vector<1x32x128xf32> to vector<1x32x32xf32>
    %56 = arith.truncf %55 : vector<1x32x32xf32> to vector<1x32x32xbf16>
    %57 = vector.extract_strided_slice %49 {offsets = [0, 0, 0], sizes = [1, 32, 32], strides = [1, 1, 1]} : vector<1x32x128xf32> to vector<1x32x32xf32>
    %58 = arith.truncf %57 : vector<1x32x32xf32> to vector<1x32x32xbf16>
    %59 = vector.extract_strided_slice %50 {offsets = [0, 0, 0], sizes = [1, 32, 32], strides = [1, 1, 1]} : vector<1x32x128xf32> to vector<1x32x32xf32>
    %60 = arith.truncf %59 : vector<1x32x32xf32> to vector<1x32x32xbf16>
    "tpu.trace_start"() <{level = 10 : i32, message = "btd,bsd->bts"}> : () -> ()
    %cst_20 = arith.constant dense<0.000000e+00> : vector<1x32x32xf32>
    %61 = tpu.matmul %56, %58, %cst_20 {dimension_numbers = #tpu.dot_dimension_numbers<[2], [2], [1], [1], [0, 0, 0, 1, 1, 1], [0], [0]>} : vector<1x32x32xbf16>, vector<1x32x32xbf16>, vector<1x32x32xf32> -> vector<1x32x32xf32>
    "tpu.trace_stop"() : () -> ()
    %cst_21 = arith.constant 0.176776692 : f32
    %62 = vector.broadcast %cst_21 : f32 to vector<1x32x32xf32>
    %63 = arith.mulf %61, %62 : vector<1x32x32xf32>
    %64 = vector.shape_cast %5 : vector<32x32xf32> to vector<1x32x32xf32>
    %65 = arith.addf %63, %64 : vector<1x32x32xf32>
    %cst_22 = arith.constant dense<0xFF800000> : vector<1x32xf32>
    %66 = vector.multi_reduction <maximumf>, %65, %cst_22 [2] : vector<1x32x32xf32> to vector<1x32xf32>
    %67 = vector.shape_cast %66 : vector<1x32xf32> to vector<1x32x1xf32>
    %68 = vector.broadcast %67 : vector<1x32x1xf32> to vector<1x32x32xf32>
    %69 = arith.subf %65, %68 : vector<1x32x32xf32>
    %70 = math.exp %69 : vector<1x32x32xf32>
    %cst_23 = arith.constant dense<0.000000e+00> : vector<1x32xf32>
    %71 = vector.multi_reduction <add>, %70, %cst_23 [2] : vector<1x32x32xf32> to vector<1x32xf32>
    %72 = vector.shape_cast %71 : vector<1x32xf32> to vector<1x32x1xf32>
    %73 = tpu.reciprocal %72 {approx = true} : vector<1x32x1xf32> -> vector<1x32x1xf32>
    %74 = vector.broadcast %73 : vector<1x32x1xf32> to vector<1x32x32xf32>
    %75 = arith.mulf %70, %74 : vector<1x32x32xf32>
    %76 = arith.truncf %75 : vector<1x32x32xf32> to vector<1x32x32xbf16>
    "tpu.trace_start"() <{level = 10 : i32, message = "bts,bsd->btd"}> : () -> ()
    %cst_24 = arith.constant dense<0.000000e+00> : vector<1x32x32xf32>
    %77 = tpu.matmul %76, %60, %cst_24 {dimension_numbers = #tpu.dot_dimension_numbers<[2], [1], [1], [2], [0, 0, 0, 1, 1, 2], [0], [0]>} : vector<1x32x32xbf16>, vector<1x32x32xbf16>, vector<1x32x32xf32> -> vector<1x32x32xf32>
    "tpu.trace_stop"() : () -> ()
    %78 = vector.shape_cast %77 : vector<1x32x32xf32> to vector<32x32xf32>
    %79 = arith.truncf %78 : vector<32x32xf32> to vector<32x32xbf16>
    %80 = vector.extract_strided_slice %53 {offsets = [0, 0], sizes = [32, 128], strides = [1, 1]} : vector<128x128xbf16> to vector<32x128xbf16>
    %cst_25 = arith.constant dense<0.000000e+00> : vector<32x128xf32>
    %81 = tpu.matmul %79, %80, %cst_25 {dimension_numbers = #tpu.dot_dimension_numbers<[1], [0], [0], [1], [0, 0, 1, 1], [], []>} : vector<32x32xbf16>, vector<32x128xbf16>, vector<32x128xf32> -> vector<32x128xf32>
    %82 = arith.addf %54, %81 : vector<32x128xf32>
    %83 = vector.extract_strided_slice %48 {offsets = [0, 0, 32], sizes = [1, 32, 32], strides = [1, 1, 1]} : vector<1x32x128xf32> to vector<1x32x32xf32>
    %84 = arith.truncf %83 : vector<1x32x32xf32> to vector<1x32x32xbf16>
    %85 = vector.extract_strided_slice %49 {offsets = [0, 0, 32], sizes = [1, 32, 32], strides = [1, 1, 1]} : vector<1x32x128xf32> to vector<1x32x32xf32>
    %86 = arith.truncf %85 : vector<1x32x32xf32> to vector<1x32x32xbf16>
    %87 = vector.extract_strided_slice %50 {offsets = [0, 0, 32], sizes = [1, 32, 32], strides = [1, 1, 1]} : vector<1x32x128xf32> to vector<1x32x32xf32>
    %88 = arith.truncf %87 : vector<1x32x32xf32> to vector<1x32x32xbf16>
    "tpu.trace_start"() <{level = 10 : i32, message = "btd,bsd->bts"}> : () -> ()
    %cst_26 = arith.constant dense<0.000000e+00> : vector<1x32x32xf32>
    %89 = tpu.matmul %84, %86, %cst_26 {dimension_numbers = #tpu.dot_dimension_numbers<[2], [2], [1], [1], [0, 0, 0, 1, 1, 1], [0], [0]>} : vector<1x32x32xbf16>, vector<1x32x32xbf16>, vector<1x32x32xf32> -> vector<1x32x32xf32>
    "tpu.trace_stop"() : () -> ()
    %cst_27 = arith.constant 0.176776692 : f32
    %90 = vector.broadcast %cst_27 : f32 to vector<1x32x32xf32>
    %91 = arith.mulf %89, %90 : vector<1x32x32xf32>
    %92 = vector.shape_cast %5 : vector<32x32xf32> to vector<1x32x32xf32>
    %93 = arith.addf %91, %92 : vector<1x32x32xf32>
    %cst_28 = arith.constant dense<0xFF800000> : vector<1x32xf32>
    %94 = vector.multi_reduction <maximumf>, %93, %cst_28 [2] : vector<1x32x32xf32> to vector<1x32xf32>
    %95 = vector.shape_cast %94 : vector<1x32xf32> to vector<1x32x1xf32>
    %96 = vector.broadcast %95 : vector<1x32x1xf32> to vector<1x32x32xf32>
    %97 = arith.subf %93, %96 : vector<1x32x32xf32>
    %98 = math.exp %97 : vector<1x32x32xf32>
    %cst_29 = arith.constant dense<0.000000e+00> : vector<1x32xf32>
    %99 = vector.multi_reduction <add>, %98, %cst_29 [2] : vector<1x32x32xf32> to vector<1x32xf32>
    %100 = vector.shape_cast %99 : vector<1x32xf32> to vector<1x32x1xf32>
    %101 = tpu.reciprocal %100 {approx = true} : vector<1x32x1xf32> -> vector<1x32x1xf32>
    %102 = vector.broadcast %101 : vector<1x32x1xf32> to vector<1x32x32xf32>
    %103 = arith.mulf %98, %102 : vector<1x32x32xf32>
    %104 = arith.truncf %103 : vector<1x32x32xf32> to vector<1x32x32xbf16>
    "tpu.trace_start"() <{level = 10 : i32, message = "bts,bsd->btd"}> : () -> ()
    %cst_30 = arith.constant dense<0.000000e+00> : vector<1x32x32xf32>
    %105 = tpu.matmul %104, %88, %cst_30 {dimension_numbers = #tpu.dot_dimension_numbers<[2], [1], [1], [2], [0, 0, 0, 1, 1, 2], [0], [0]>} : vector<1x32x32xbf16>, vector<1x32x32xbf16>, vector<1x32x32xf32> -> vector<1x32x32xf32>
    "tpu.trace_stop"() : () -> ()
    %106 = vector.shape_cast %105 : vector<1x32x32xf32> to vector<32x32xf32>
    %107 = arith.truncf %106 : vector<32x32xf32> to vector<32x32xbf16>
    %108 = vector.extract_strided_slice %53 {offsets = [32, 0], sizes = [32, 128], strides = [1, 1]} : vector<128x128xbf16> to vector<32x128xbf16>
    %cst_31 = arith.constant dense<0.000000e+00> : vector<32x128xf32>
    %109 = tpu.matmul %107, %108, %cst_31 {dimension_numbers = #tpu.dot_dimension_numbers<[1], [0], [0], [1], [0, 0, 1, 1], [], []>} : vector<32x32xbf16>, vector<32x128xbf16>, vector<32x128xf32> -> vector<32x128xf32>
    %110 = arith.addf %82, %109 : vector<32x128xf32>
    %111 = vector.extract_strided_slice %48 {offsets = [0, 0, 64], sizes = [1, 32, 32], strides = [1, 1, 1]} : vector<1x32x128xf32> to vector<1x32x32xf32>
    %112 = arith.truncf %111 : vector<1x32x32xf32> to vector<1x32x32xbf16>
    %113 = vector.extract_strided_slice %49 {offsets = [0, 0, 64], sizes = [1, 32, 32], strides = [1, 1, 1]} : vector<1x32x128xf32> to vector<1x32x32xf32>
    %114 = arith.truncf %113 : vector<1x32x32xf32> to vector<1x32x32xbf16>
    %115 = vector.extract_strided_slice %50 {offsets = [0, 0, 64], sizes = [1, 32, 32], strides = [1, 1, 1]} : vector<1x32x128xf32> to vector<1x32x32xf32>
    %116 = arith.truncf %115 : vector<1x32x32xf32> to vector<1x32x32xbf16>
    "tpu.trace_start"() <{level = 10 : i32, message = "btd,bsd->bts"}> : () -> ()
    %cst_32 = arith.constant dense<0.000000e+00> : vector<1x32x32xf32>
    %117 = tpu.matmul %112, %114, %cst_32 {dimension_numbers = #tpu.dot_dimension_numbers<[2], [2], [1], [1], [0, 0, 0, 1, 1, 1], [0], [0]>} : vector<1x32x32xbf16>, vector<1x32x32xbf16>, vector<1x32x32xf32> -> vector<1x32x32xf32>
    "tpu.trace_stop"() : () -> ()
    %cst_33 = arith.constant 0.176776692 : f32
    %118 = vector.broadcast %cst_33 : f32 to vector<1x32x32xf32>
    %119 = arith.mulf %117, %118 : vector<1x32x32xf32>
    %120 = vector.shape_cast %5 : vector<32x32xf32> to vector<1x32x32xf32>
    %121 = arith.addf %119, %120 : vector<1x32x32xf32>
    %cst_34 = arith.constant dense<0xFF800000> : vector<1x32xf32>
    %122 = vector.multi_reduction <maximumf>, %121, %cst_34 [2] : vector<1x32x32xf32> to vector<1x32xf32>
    %123 = vector.shape_cast %122 : vector<1x32xf32> to vector<1x32x1xf32>
    %124 = vector.broadcast %123 : vector<1x32x1xf32> to vector<1x32x32xf32>
    %125 = arith.subf %121, %124 : vector<1x32x32xf32>
    %126 = math.exp %125 : vector<1x32x32xf32>
    %cst_35 = arith.constant dense<0.000000e+00> : vector<1x32xf32>
    %127 = vector.multi_reduction <add>, %126, %cst_35 [2] : vector<1x32x32xf32> to vector<1x32xf32>
    %128 = vector.shape_cast %127 : vector<1x32xf32> to vector<1x32x1xf32>
    %129 = tpu.reciprocal %128 {approx = true} : vector<1x32x1xf32> -> vector<1x32x1xf32>
    %130 = vector.broadcast %129 : vector<1x32x1xf32> to vector<1x32x32xf32>
    %131 = arith.mulf %126, %130 : vector<1x32x32xf32>
    %132 = arith.truncf %131 : vector<1x32x32xf32> to vector<1x32x32xbf16>
    "tpu.trace_start"() <{level = 10 : i32, message = "bts,bsd->btd"}> : () -> ()
    %cst_36 = arith.constant dense<0.000000e+00> : vector<1x32x32xf32>
    %133 = tpu.matmul %132, %116, %cst_36 {dimension_numbers = #tpu.dot_dimension_numbers<[2], [1], [1], [2], [0, 0, 0, 1, 1, 2], [0], [0]>} : vector<1x32x32xbf16>, vector<1x32x32xbf16>, vector<1x32x32xf32> -> vector<1x32x32xf32>
    "tpu.trace_stop"() : () -> ()
    %134 = vector.shape_cast %133 : vector<1x32x32xf32> to vector<32x32xf32>
    %135 = arith.truncf %134 : vector<32x32xf32> to vector<32x32xbf16>
    %136 = vector.extract_strided_slice %53 {offsets = [64, 0], sizes = [32, 128], strides = [1, 1]} : vector<128x128xbf16> to vector<32x128xbf16>
    %cst_37 = arith.constant dense<0.000000e+00> : vector<32x128xf32>
    %137 = tpu.matmul %135, %136, %cst_37 {dimension_numbers = #tpu.dot_dimension_numbers<[1], [0], [0], [1], [0, 0, 1, 1], [], []>} : vector<32x32xbf16>, vector<32x128xbf16>, vector<32x128xf32> -> vector<32x128xf32>
    %138 = arith.addf %110, %137 : vector<32x128xf32>
    %139 = vector.extract_strided_slice %48 {offsets = [0, 0, 96], sizes = [1, 32, 32], strides = [1, 1, 1]} : vector<1x32x128xf32> to vector<1x32x32xf32>
    %140 = arith.truncf %139 : vector<1x32x32xf32> to vector<1x32x32xbf16>
    %141 = vector.extract_strided_slice %49 {offsets = [0, 0, 96], sizes = [1, 32, 32], strides = [1, 1, 1]} : vector<1x32x128xf32> to vector<1x32x32xf32>
    %142 = arith.truncf %141 : vector<1x32x32xf32> to vector<1x32x32xbf16>
    %143 = vector.extract_strided_slice %50 {offsets = [0, 0, 96], sizes = [1, 32, 32], strides = [1, 1, 1]} : vector<1x32x128xf32> to vector<1x32x32xf32>
    %144 = arith.truncf %143 : vector<1x32x32xf32> to vector<1x32x32xbf16>
    "tpu.trace_start"() <{level = 10 : i32, message = "btd,bsd->bts"}> : () -> ()
    %cst_38 = arith.constant dense<0.000000e+00> : vector<1x32x32xf32>
    %145 = tpu.matmul %140, %142, %cst_38 {dimension_numbers = #tpu.dot_dimension_numbers<[2], [2], [1], [1], [0, 0, 0, 1, 1, 1], [0], [0]>} : vector<1x32x32xbf16>, vector<1x32x32xbf16>, vector<1x32x32xf32> -> vector<1x32x32xf32>
    "tpu.trace_stop"() : () -> ()
    %cst_39 = arith.constant 0.176776692 : f32
    %146 = vector.broadcast %cst_39 : f32 to vector<1x32x32xf32>
    %147 = arith.mulf %145, %146 : vector<1x32x32xf32>
    %148 = vector.shape_cast %5 : vector<32x32xf32> to vector<1x32x32xf32>
    %149 = arith.addf %147, %148 : vector<1x32x32xf32>
    %cst_40 = arith.constant dense<0xFF800000> : vector<1x32xf32>
    %150 = vector.multi_reduction <maximumf>, %149, %cst_40 [2] : vector<1x32x32xf32> to vector<1x32xf32>
    %151 = vector.shape_cast %150 : vector<1x32xf32> to vector<1x32x1xf32>
    %152 = vector.broadcast %151 : vector<1x32x1xf32> to vector<1x32x32xf32>
    %153 = arith.subf %149, %152 : vector<1x32x32xf32>
    %154 = math.exp %153 : vector<1x32x32xf32>
    %cst_41 = arith.constant dense<0.000000e+00> : vector<1x32xf32>
    %155 = vector.multi_reduction <add>, %154, %cst_41 [2] : vector<1x32x32xf32> to vector<1x32xf32>
    %156 = vector.shape_cast %155 : vector<1x32xf32> to vector<1x32x1xf32>
    %157 = tpu.reciprocal %156 {approx = true} : vector<1x32x1xf32> -> vector<1x32x1xf32>
    %158 = vector.broadcast %157 : vector<1x32x1xf32> to vector<1x32x32xf32>
    %159 = arith.mulf %154, %158 : vector<1x32x32xf32>
    %160 = arith.truncf %159 : vector<1x32x32xf32> to vector<1x32x32xbf16>
    "tpu.trace_start"() <{level = 10 : i32, message = "bts,bsd->btd"}> : () -> ()
    %cst_42 = arith.constant dense<0.000000e+00> : vector<1x32x32xf32>
    %161 = tpu.matmul %160, %144, %cst_42 {dimension_numbers = #tpu.dot_dimension_numbers<[2], [1], [1], [2], [0, 0, 0, 1, 1, 2], [0], [0]>} : vector<1x32x32xbf16>, vector<1x32x32xbf16>, vector<1x32x32xf32> -> vector<1x32x32xf32>
    "tpu.trace_stop"() : () -> ()
    %162 = vector.shape_cast %161 : vector<1x32x32xf32> to vector<32x32xf32>
    %163 = arith.truncf %162 : vector<32x32xf32> to vector<32x32xbf16>
    %164 = vector.extract_strided_slice %53 {offsets = [96, 0], sizes = [32, 128], strides = [1, 1]} : vector<128x128xbf16> to vector<32x128xbf16>
    %cst_43 = arith.constant dense<0.000000e+00> : vector<32x128xf32>
    %165 = tpu.matmul %163, %164, %cst_43 {dimension_numbers = #tpu.dot_dimension_numbers<[1], [0], [0], [1], [0, 0, 1, 1], [], []>} : vector<32x32xbf16>, vector<32x128xbf16>, vector<32x128xf32> -> vector<32x128xf32>
    %166 = arith.addf %138, %165 : vector<32x128xf32>
    %167 = arith.addf %4, %166 : vector<32x128xf32>
    %168 = arith.index_cast %arg1 : i32 to index
    %c0_44 = arith.constant 0 : index
    %c640 = arith.constant 640 : index
    %169 = vector.load %arg14[%168, %c0_44, %c640] : memref<2x1x2432xf32, #tpu.memory_space<vmem>>, vector<1x1x128xf32>
    %170 = vector.shape_cast %169 : vector<1x1x128xf32> to vector<1x128xf32>
    %171 = vector.broadcast %170 : vector<1x128xf32> to vector<32x128xf32>
    %172 = arith.addf %167, %171 : vector<32x128xf32>
    %173 = arith.index_cast %arg1 : i32 to index
    %c0_45 = arith.constant 0 : index
    %c768 = arith.constant 768 : index
    %174 = vector.load %arg14[%173, %c0_45, %c768] : memref<2x1x2432xf32, #tpu.memory_space<vmem>>, vector<1x1x128xf32>
    %175 = vector.shape_cast %174 : vector<1x1x128xf32> to vector<1x128xf32>
    %176 = arith.index_cast %arg1 : i32 to index
    %c0_46 = arith.constant 0 : index
    %c896 = arith.constant 896 : index
    %177 = vector.load %arg14[%176, %c0_46, %c896] : memref<2x1x2432xf32, #tpu.memory_space<vmem>>, vector<1x1x128xf32>
    %178 = vector.shape_cast %177 : vector<1x1x128xf32> to vector<1x128xf32>
    %cst_47 = arith.constant dense<0.000000e+00> : vector<32xf32>
    %179 = vector.multi_reduction <add>, %172, %cst_47 [1] : vector<32x128xf32> to vector<32xf32>
    %180 = vector.shape_cast %179 : vector<32xf32> to vector<32x1xf32>
    %cst_48 = arith.constant 1.280000e+02 : f32
    %181 = vector.broadcast %cst_48 : f32 to vector<32x1xf32>
    %182 = arith.divf %180, %181 : vector<32x1xf32>
    %183 = vector.broadcast %182 : vector<32x1xf32> to vector<32x128xf32>
    %184 = arith.subf %172, %183 : vector<32x128xf32>
    %185 = vector.broadcast %182 : vector<32x1xf32> to vector<32x128xf32>
    %186 = arith.subf %172, %185 : vector<32x128xf32>
    %187 = arith.mulf %184, %186 : vector<32x128xf32>
    %cst_49 = arith.constant dense<0.000000e+00> : vector<32xf32>
    %188 = vector.multi_reduction <add>, %187, %cst_49 [1] : vector<32x128xf32> to vector<32xf32>
    %189 = vector.shape_cast %188 : vector<32xf32> to vector<32x1xf32>
    %cst_50 = arith.constant 1.280000e+02 : f32
    %190 = vector.broadcast %cst_50 : f32 to vector<32x1xf32>
    %191 = arith.divf %189, %190 : vector<32x1xf32>
    %192 = vector.broadcast %182 : vector<32x1xf32> to vector<32x128xf32>
    %193 = arith.subf %172, %192 : vector<32x128xf32>
    %cst_51 = arith.constant 9.99999974E-6 : f32
    %194 = vector.broadcast %cst_51 : f32 to vector<32x1xf32>
    %195 = arith.addf %191, %194 : vector<32x1xf32>
    %196 = math.rsqrt %195 : vector<32x1xf32>
    %197 = vector.broadcast %196 : vector<32x1xf32> to vector<32x128xf32>
    %198 = arith.mulf %193, %197 : vector<32x128xf32>
    %199 = vector.broadcast %175 : vector<1x128xf32> to vector<32x128xf32>
    %200 = arith.mulf %198, %199 : vector<32x128xf32>
    %201 = vector.broadcast %178 : vector<1x128xf32> to vector<32x128xf32>
    %202 = arith.addf %200, %201 : vector<32x128xf32>
    %203 = arith.truncf %202 : vector<32x128xf32> to vector<32x128xbf16>
    %204 = arith.index_cast %arg1 : i32 to index
    %c0_52 = arith.constant 0 : index
    %c512 = arith.constant 512 : index
    %205 = vector.load %arg12[%204, %c0_52, %c512] : memref<2x128x1536xbf16, #tpu.memory_space<vmem>>, vector<1x128x128xbf16>
    %206 = vector.shape_cast %205 : vector<1x128x128xbf16> to vector<128x128xbf16>
    %cst_53 = arith.constant dense<0.000000e+00> : vector<32x128xf32>
    %207 = tpu.matmul %203, %206, %cst_53 {dimension_numbers = #tpu.dot_dimension_numbers<[1], [0], [0], [1], [0, 0, 1, 1], [], []>} : vector<32x128xbf16>, vector<128x128xbf16>, vector<32x128xf32> -> vector<32x128xf32>
    %208 = arith.index_cast %arg1 : i32 to index
    %c0_54 = arith.constant 0 : index
    %c1024 = arith.constant 1024 : index
    %209 = vector.load %arg14[%208, %c0_54, %c1024] : memref<2x1x2432xf32, #tpu.memory_space<vmem>>, vector<1x1x128xf32>
    %210 = vector.shape_cast %209 : vector<1x1x128xf32> to vector<1x128xf32>
    %211 = vector.broadcast %210 : vector<1x128xf32> to vector<32x128xf32>
    %212 = arith.addf %207, %211 : vector<32x128xf32>
    %213 = vector.shape_cast %212 : vector<32x128xf32> to vector<1x32x128xf32>
    %c0_55 = arith.constant 0 : index
    %c0_56 = arith.constant 0 : index
    %c0_57 = arith.constant 0 : index
    %214 = vector.load %arg17[%c0_55, %c0_56, %c0_57] : memref<1x24x128xf32, #tpu.memory_space<vmem>>, vector<1x24x128xf32>
    %215 = vector.shape_cast %214 : vector<1x24x128xf32> to vector<24x128xf32>
    %216 = arith.truncf %215 : vector<24x128xf32> to vector<24x128xbf16>
    %217 = arith.index_cast %arg1 : i32 to index
    %c0_58 = arith.constant 0 : index
    %c640_59 = arith.constant 640 : index
    %218 = vector.load %arg12[%217, %c0_58, %c640_59] : memref<2x128x1536xbf16, #tpu.memory_space<vmem>>, vector<1x128x256xbf16>
    %219 = vector.shape_cast %218 : vector<1x128x256xbf16> to vector<128x256xbf16>
    %cst_60 = arith.constant dense<0.000000e+00> : vector<24x256xf32>
    %220 = tpu.matmul %216, %219, %cst_60 {dimension_numbers = #tpu.dot_dimension_numbers<[1], [0], [0], [1], [0, 0, 1, 1], [], []>} : vector<24x128xbf16>, vector<128x256xbf16>, vector<24x256xf32> -> vector<24x256xf32>
    %221 = arith.index_cast %arg1 : i32 to index
    %c0_61 = arith.constant 0 : index
    %c1152 = arith.constant 1152 : index
    %222 = vector.load %arg14[%221, %c0_61, %c1152] : memref<2x1x2432xf32, #tpu.memory_space<vmem>>, vector<1x1x256xf32>
    %223 = vector.shape_cast %222 : vector<1x1x256xf32> to vector<1x256xf32>
    %224 = vector.broadcast %223 : vector<1x256xf32> to vector<24x256xf32>
    %225 = arith.addf %220, %224 : vector<24x256xf32>
    %226 = vector.shape_cast %225 : vector<24x256xf32> to vector<1x24x256xf32>
    %227 = vector.extract_strided_slice %226 {offsets = [0, 0, 0], sizes = [1, 24, 128], strides = [1, 1, 1]} : vector<1x24x256xf32> to vector<1x24x128xf32>
    %228 = vector.extract_strided_slice %226 {offsets = [0, 0, 128], sizes = [1, 24, 128], strides = [1, 1, 1]} : vector<1x24x256xf32> to vector<1x24x128xf32>
    %229 = arith.index_cast %arg1 : i32 to index
    %c0_62 = arith.constant 0 : index
    %c896_63 = arith.constant 896 : index
    %230 = vector.load %arg12[%229, %c0_62, %c896_63] : memref<2x128x1536xbf16, #tpu.memory_space<vmem>>, vector<1x128x128xbf16>
    %231 = vector.shape_cast %230 : vector<1x128x128xbf16> to vector<128x128xbf16>
    %cst_64 = arith.constant 0.000000e+00 : f32
    %232 = vector.broadcast %cst_64 : f32 to vector<32x128xf32>
    %233 = vector.extract_strided_slice %213 {offsets = [0, 0, 0], sizes = [1, 32, 32], strides = [1, 1, 1]} : vector<1x32x128xf32> to vector<1x32x32xf32>
    %234 = arith.truncf %233 : vector<1x32x32xf32> to vector<1x32x32xbf16>
    %235 = vector.extract_strided_slice %227 {offsets = [0, 0, 0], sizes = [1, 24, 32], strides = [1, 1, 1]} : vector<1x24x128xf32> to vector<1x24x32xf32>
    %236 = arith.truncf %235 : vector<1x24x32xf32> to vector<1x24x32xbf16>
    %237 = vector.extract_strided_slice %228 {offsets = [0, 0, 0], sizes = [1, 24, 32], strides = [1, 1, 1]} : vector<1x24x128xf32> to vector<1x24x32xf32>
    %238 = arith.truncf %237 : vector<1x24x32xf32> to vector<1x24x32xbf16>
    "tpu.trace_start"() <{level = 10 : i32, message = "btd,bsd->bts"}> : () -> ()
    %cst_65 = arith.constant dense<0.000000e+00> : vector<1x32x24xf32>
    %239 = tpu.matmul %234, %236, %cst_65 {dimension_numbers = #tpu.dot_dimension_numbers<[2], [2], [1], [1], [0, 0, 0, 1, 1, 1], [0], [0]>} : vector<1x32x32xbf16>, vector<1x24x32xbf16>, vector<1x32x24xf32> -> vector<1x32x24xf32>
    "tpu.trace_stop"() : () -> ()
    %cst_66 = arith.constant 0.176776692 : f32
    %240 = vector.broadcast %cst_66 : f32 to vector<1x32x24xf32>
    %241 = arith.mulf %239, %240 : vector<1x32x24xf32>
    %242 = vector.shape_cast %6 : vector<32x24xf32> to vector<1x32x24xf32>
    %243 = arith.addf %241, %242 : vector<1x32x24xf32>
    %cst_67 = arith.constant dense<0xFF800000> : vector<1x32xf32>
    %244 = vector.multi_reduction <maximumf>, %243, %cst_67 [2] : vector<1x32x24xf32> to vector<1x32xf32>
    %245 = vector.shape_cast %244 : vector<1x32xf32> to vector<1x32x1xf32>
    %246 = vector.broadcast %245 : vector<1x32x1xf32> to vector<1x32x24xf32>
    %247 = arith.subf %243, %246 : vector<1x32x24xf32>
    %248 = math.exp %247 : vector<1x32x24xf32>
    %cst_68 = arith.constant dense<0.000000e+00> : vector<1x32xf32>
    %249 = vector.multi_reduction <add>, %248, %cst_68 [2] : vector<1x32x24xf32> to vector<1x32xf32>
    %250 = vector.shape_cast %249 : vector<1x32xf32> to vector<1x32x1xf32>
    %251 = tpu.reciprocal %250 {approx = true} : vector<1x32x1xf32> -> vector<1x32x1xf32>
    %252 = vector.broadcast %251 : vector<1x32x1xf32> to vector<1x32x24xf32>
    %253 = arith.mulf %248, %252 : vector<1x32x24xf32>
    %254 = arith.truncf %253 : vector<1x32x24xf32> to vector<1x32x24xbf16>
    "tpu.trace_start"() <{level = 10 : i32, message = "bts,bsd->btd"}> : () -> ()
    %cst_69 = arith.constant dense<0.000000e+00> : vector<1x32x32xf32>
    %255 = tpu.matmul %254, %238, %cst_69 {dimension_numbers = #tpu.dot_dimension_numbers<[2], [1], [1], [2], [0, 0, 0, 1, 1, 2], [0], [0]>} : vector<1x32x24xbf16>, vector<1x24x32xbf16>, vector<1x32x32xf32> -> vector<1x32x32xf32>
    "tpu.trace_stop"() : () -> ()
    %256 = vector.shape_cast %255 : vector<1x32x32xf32> to vector<32x32xf32>
    %257 = arith.truncf %256 : vector<32x32xf32> to vector<32x32xbf16>
    %258 = vector.extract_strided_slice %231 {offsets = [0, 0], sizes = [32, 128], strides = [1, 1]} : vector<128x128xbf16> to vector<32x128xbf16>
    %cst_70 = arith.constant dense<0.000000e+00> : vector<32x128xf32>
    %259 = tpu.matmul %257, %258, %cst_70 {dimension_numbers = #tpu.dot_dimension_numbers<[1], [0], [0], [1], [0, 0, 1, 1], [], []>} : vector<32x32xbf16>, vector<32x128xbf16>, vector<32x128xf32> -> vector<32x128xf32>
    %260 = arith.addf %232, %259 : vector<32x128xf32>
    %261 = vector.extract_strided_slice %213 {offsets = [0, 0, 32], sizes = [1, 32, 32], strides = [1, 1, 1]} : vector<1x32x128xf32> to vector<1x32x32xf32>
    %262 = arith.truncf %261 : vector<1x32x32xf32> to vector<1x32x32xbf16>
    %263 = vector.extract_strided_slice %227 {offsets = [0, 0, 32], sizes = [1, 24, 32], strides = [1, 1, 1]} : vector<1x24x128xf32> to vector<1x24x32xf32>
    %264 = arith.truncf %263 : vector<1x24x32xf32> to vector<1x24x32xbf16>
    %265 = vector.extract_strided_slice %228 {offsets = [0, 0, 32], sizes = [1, 24, 32], strides = [1, 1, 1]} : vector<1x24x128xf32> to vector<1x24x32xf32>
    %266 = arith.truncf %265 : vector<1x24x32xf32> to vector<1x24x32xbf16>
    "tpu.trace_start"() <{level = 10 : i32, message = "btd,bsd->bts"}> : () -> ()
    %cst_71 = arith.constant dense<0.000000e+00> : vector<1x32x24xf32>
    %267 = tpu.matmul %262, %264, %cst_71 {dimension_numbers = #tpu.dot_dimension_numbers<[2], [2], [1], [1], [0, 0, 0, 1, 1, 1], [0], [0]>} : vector<1x32x32xbf16>, vector<1x24x32xbf16>, vector<1x32x24xf32> -> vector<1x32x24xf32>
    "tpu.trace_stop"() : () -> ()
    %cst_72 = arith.constant 0.176776692 : f32
    %268 = vector.broadcast %cst_72 : f32 to vector<1x32x24xf32>
    %269 = arith.mulf %267, %268 : vector<1x32x24xf32>
    %270 = vector.shape_cast %6 : vector<32x24xf32> to vector<1x32x24xf32>
    %271 = arith.addf %269, %270 : vector<1x32x24xf32>
    %cst_73 = arith.constant dense<0xFF800000> : vector<1x32xf32>
    %272 = vector.multi_reduction <maximumf>, %271, %cst_73 [2] : vector<1x32x24xf32> to vector<1x32xf32>
    %273 = vector.shape_cast %272 : vector<1x32xf32> to vector<1x32x1xf32>
    %274 = vector.broadcast %273 : vector<1x32x1xf32> to vector<1x32x24xf32>
    %275 = arith.subf %271, %274 : vector<1x32x24xf32>
    %276 = math.exp %275 : vector<1x32x24xf32>
    %cst_74 = arith.constant dense<0.000000e+00> : vector<1x32xf32>
    %277 = vector.multi_reduction <add>, %276, %cst_74 [2] : vector<1x32x24xf32> to vector<1x32xf32>
    %278 = vector.shape_cast %277 : vector<1x32xf32> to vector<1x32x1xf32>
    %279 = tpu.reciprocal %278 {approx = true} : vector<1x32x1xf32> -> vector<1x32x1xf32>
    %280 = vector.broadcast %279 : vector<1x32x1xf32> to vector<1x32x24xf32>
    %281 = arith.mulf %276, %280 : vector<1x32x24xf32>
    %282 = arith.truncf %281 : vector<1x32x24xf32> to vector<1x32x24xbf16>
    "tpu.trace_start"() <{level = 10 : i32, message = "bts,bsd->btd"}> : () -> ()
    %cst_75 = arith.constant dense<0.000000e+00> : vector<1x32x32xf32>
    %283 = tpu.matmul %282, %266, %cst_75 {dimension_numbers = #tpu.dot_dimension_numbers<[2], [1], [1], [2], [0, 0, 0, 1, 1, 2], [0], [0]>} : vector<1x32x24xbf16>, vector<1x24x32xbf16>, vector<1x32x32xf32> -> vector<1x32x32xf32>
    "tpu.trace_stop"() : () -> ()
    %284 = vector.shape_cast %283 : vector<1x32x32xf32> to vector<32x32xf32>
    %285 = arith.truncf %284 : vector<32x32xf32> to vector<32x32xbf16>
    %286 = vector.extract_strided_slice %231 {offsets = [32, 0], sizes = [32, 128], strides = [1, 1]} : vector<128x128xbf16> to vector<32x128xbf16>
    %cst_76 = arith.constant dense<0.000000e+00> : vector<32x128xf32>
    %287 = tpu.matmul %285, %286, %cst_76 {dimension_numbers = #tpu.dot_dimension_numbers<[1], [0], [0], [1], [0, 0, 1, 1], [], []>} : vector<32x32xbf16>, vector<32x128xbf16>, vector<32x128xf32> -> vector<32x128xf32>
    %288 = arith.addf %260, %287 : vector<32x128xf32>
    %289 = vector.extract_strided_slice %213 {offsets = [0, 0, 64], sizes = [1, 32, 32], strides = [1, 1, 1]} : vector<1x32x128xf32> to vector<1x32x32xf32>
    %290 = arith.truncf %289 : vector<1x32x32xf32> to vector<1x32x32xbf16>
    %291 = vector.extract_strided_slice %227 {offsets = [0, 0, 64], sizes = [1, 24, 32], strides = [1, 1, 1]} : vector<1x24x128xf32> to vector<1x24x32xf32>
    %292 = arith.truncf %291 : vector<1x24x32xf32> to vector<1x24x32xbf16>
    %293 = vector.extract_strided_slice %228 {offsets = [0, 0, 64], sizes = [1, 24, 32], strides = [1, 1, 1]} : vector<1x24x128xf32> to vector<1x24x32xf32>
    %294 = arith.truncf %293 : vector<1x24x32xf32> to vector<1x24x32xbf16>
    "tpu.trace_start"() <{level = 10 : i32, message = "btd,bsd->bts"}> : () -> ()
    %cst_77 = arith.constant dense<0.000000e+00> : vector<1x32x24xf32>
    %295 = tpu.matmul %290, %292, %cst_77 {dimension_numbers = #tpu.dot_dimension_numbers<[2], [2], [1], [1], [0, 0, 0, 1, 1, 1], [0], [0]>} : vector<1x32x32xbf16>, vector<1x24x32xbf16>, vector<1x32x24xf32> -> vector<1x32x24xf32>
    "tpu.trace_stop"() : () -> ()
    %cst_78 = arith.constant 0.176776692 : f32
    %296 = vector.broadcast %cst_78 : f32 to vector<1x32x24xf32>
    %297 = arith.mulf %295, %296 : vector<1x32x24xf32>
    %298 = vector.shape_cast %6 : vector<32x24xf32> to vector<1x32x24xf32>
    %299 = arith.addf %297, %298 : vector<1x32x24xf32>
    %cst_79 = arith.constant dense<0xFF800000> : vector<1x32xf32>
    %300 = vector.multi_reduction <maximumf>, %299, %cst_79 [2] : vector<1x32x24xf32> to vector<1x32xf32>
    %301 = vector.shape_cast %300 : vector<1x32xf32> to vector<1x32x1xf32>
    %302 = vector.broadcast %301 : vector<1x32x1xf32> to vector<1x32x24xf32>
    %303 = arith.subf %299, %302 : vector<1x32x24xf32>
    %304 = math.exp %303 : vector<1x32x24xf32>
    %cst_80 = arith.constant dense<0.000000e+00> : vector<1x32xf32>
    %305 = vector.multi_reduction <add>, %304, %cst_80 [2] : vector<1x32x24xf32> to vector<1x32xf32>
    %306 = vector.shape_cast %305 : vector<1x32xf32> to vector<1x32x1xf32>
    %307 = tpu.reciprocal %306 {approx = true} : vector<1x32x1xf32> -> vector<1x32x1xf32>
    %308 = vector.broadcast %307 : vector<1x32x1xf32> to vector<1x32x24xf32>
    %309 = arith.mulf %304, %308 : vector<1x32x24xf32>
    %310 = arith.truncf %309 : vector<1x32x24xf32> to vector<1x32x24xbf16>
    "tpu.trace_start"() <{level = 10 : i32, message = "bts,bsd->btd"}> : () -> ()
    %cst_81 = arith.constant dense<0.000000e+00> : vector<1x32x32xf32>
    %311 = tpu.matmul %310, %294, %cst_81 {dimension_numbers = #tpu.dot_dimension_numbers<[2], [1], [1], [2], [0, 0, 0, 1, 1, 2], [0], [0]>} : vector<1x32x24xbf16>, vector<1x24x32xbf16>, vector<1x32x32xf32> -> vector<1x32x32xf32>
    "tpu.trace_stop"() : () -> ()
    %312 = vector.shape_cast %311 : vector<1x32x32xf32> to vector<32x32xf32>
    %313 = arith.truncf %312 : vector<32x32xf32> to vector<32x32xbf16>
    %314 = vector.extract_strided_slice %231 {offsets = [64, 0], sizes = [32, 128], strides = [1, 1]} : vector<128x128xbf16> to vector<32x128xbf16>
    %cst_82 = arith.constant dense<0.000000e+00> : vector<32x128xf32>
    %315 = tpu.matmul %313, %314, %cst_82 {dimension_numbers = #tpu.dot_dimension_numbers<[1], [0], [0], [1], [0, 0, 1, 1], [], []>} : vector<32x32xbf16>, vector<32x128xbf16>, vector<32x128xf32> -> vector<32x128xf32>
    %316 = arith.addf %288, %315 : vector<32x128xf32>
    %317 = vector.extract_strided_slice %213 {offsets = [0, 0, 96], sizes = [1, 32, 32], strides = [1, 1, 1]} : vector<1x32x128xf32> to vector<1x32x32xf32>
    %318 = arith.truncf %317 : vector<1x32x32xf32> to vector<1x32x32xbf16>
    %319 = vector.extract_strided_slice %227 {offsets = [0, 0, 96], sizes = [1, 24, 32], strides = [1, 1, 1]} : vector<1x24x128xf32> to vector<1x24x32xf32>
    %320 = arith.truncf %319 : vector<1x24x32xf32> to vector<1x24x32xbf16>
    %321 = vector.extract_strided_slice %228 {offsets = [0, 0, 96], sizes = [1, 24, 32], strides = [1, 1, 1]} : vector<1x24x128xf32> to vector<1x24x32xf32>
    %322 = arith.truncf %321 : vector<1x24x32xf32> to vector<1x24x32xbf16>
    "tpu.trace_start"() <{level = 10 : i32, message = "btd,bsd->bts"}> : () -> ()
    %cst_83 = arith.constant dense<0.000000e+00> : vector<1x32x24xf32>
    %323 = tpu.matmul %318, %320, %cst_83 {dimension_numbers = #tpu.dot_dimension_numbers<[2], [2], [1], [1], [0, 0, 0, 1, 1, 1], [0], [0]>} : vector<1x32x32xbf16>, vector<1x24x32xbf16>, vector<1x32x24xf32> -> vector<1x32x24xf32>
    "tpu.trace_stop"() : () -> ()
    %cst_84 = arith.constant 0.176776692 : f32
    %324 = vector.broadcast %cst_84 : f32 to vector<1x32x24xf32>
    %325 = arith.mulf %323, %324 : vector<1x32x24xf32>
    %326 = vector.shape_cast %6 : vector<32x24xf32> to vector<1x32x24xf32>
    %327 = arith.addf %325, %326 : vector<1x32x24xf32>
    %cst_85 = arith.constant dense<0xFF800000> : vector<1x32xf32>
    %328 = vector.multi_reduction <maximumf>, %327, %cst_85 [2] : vector<1x32x24xf32> to vector<1x32xf32>
    %329 = vector.shape_cast %328 : vector<1x32xf32> to vector<1x32x1xf32>
    %330 = vector.broadcast %329 : vector<1x32x1xf32> to vector<1x32x24xf32>
    %331 = arith.subf %327, %330 : vector<1x32x24xf32>
    %332 = math.exp %331 : vector<1x32x24xf32>
    %cst_86 = arith.constant dense<0.000000e+00> : vector<1x32xf32>
    %333 = vector.multi_reduction <add>, %332, %cst_86 [2] : vector<1x32x24xf32> to vector<1x32xf32>
    %334 = vector.shape_cast %333 : vector<1x32xf32> to vector<1x32x1xf32>
    %335 = tpu.reciprocal %334 {approx = true} : vector<1x32x1xf32> -> vector<1x32x1xf32>
    %336 = vector.broadcast %335 : vector<1x32x1xf32> to vector<1x32x24xf32>
    %337 = arith.mulf %332, %336 : vector<1x32x24xf32>
    %338 = arith.truncf %337 : vector<1x32x24xf32> to vector<1x32x24xbf16>
    "tpu.trace_start"() <{level = 10 : i32, message = "bts,bsd->btd"}> : () -> ()
    %cst_87 = arith.constant dense<0.000000e+00> : vector<1x32x32xf32>
    %339 = tpu.matmul %338, %322, %cst_87 {dimension_numbers = #tpu.dot_dimension_numbers<[2], [1], [1], [2], [0, 0, 0, 1, 1, 2], [0], [0]>} : vector<1x32x24xbf16>, vector<1x24x32xbf16>, vector<1x32x32xf32> -> vector<1x32x32xf32>
    "tpu.trace_stop"() : () -> ()
    %340 = vector.shape_cast %339 : vector<1x32x32xf32> to vector<32x32xf32>
    %341 = arith.truncf %340 : vector<32x32xf32> to vector<32x32xbf16>
    %342 = vector.extract_strided_slice %231 {offsets = [96, 0], sizes = [32, 128], strides = [1, 1]} : vector<128x128xbf16> to vector<32x128xbf16>
    %cst_88 = arith.constant dense<0.000000e+00> : vector<32x128xf32>
    %343 = tpu.matmul %341, %342, %cst_88 {dimension_numbers = #tpu.dot_dimension_numbers<[1], [0], [0], [1], [0, 0, 1, 1], [], []>} : vector<32x32xbf16>, vector<32x128xbf16>, vector<32x128xf32> -> vector<32x128xf32>
    %344 = arith.addf %316, %343 : vector<32x128xf32>
    %345 = arith.addf %172, %344 : vector<32x128xf32>
    %346 = arith.index_cast %arg1 : i32 to index
    %c0_89 = arith.constant 0 : index
    %c1408 = arith.constant 1408 : index
    %347 = vector.load %arg14[%346, %c0_89, %c1408] : memref<2x1x2432xf32, #tpu.memory_space<vmem>>, vector<1x1x128xf32>
    %348 = vector.shape_cast %347 : vector<1x1x128xf32> to vector<1x128xf32>
    %349 = vector.broadcast %348 : vector<1x128xf32> to vector<32x128xf32>
    %350 = arith.addf %345, %349 : vector<32x128xf32>
    %351 = arith.index_cast %arg1 : i32 to index
    %c0_90 = arith.constant 0 : index
    %c1536 = arith.constant 1536 : index
    %352 = vector.load %arg14[%351, %c0_90, %c1536] : memref<2x1x2432xf32, #tpu.memory_space<vmem>>, vector<1x1x128xf32>
    %353 = vector.shape_cast %352 : vector<1x1x128xf32> to vector<1x128xf32>
    %354 = arith.index_cast %arg1 : i32 to index
    %c0_91 = arith.constant 0 : index
    %c1664 = arith.constant 1664 : index
    %355 = vector.load %arg14[%354, %c0_91, %c1664] : memref<2x1x2432xf32, #tpu.memory_space<vmem>>, vector<1x1x128xf32>
    %356 = vector.shape_cast %355 : vector<1x1x128xf32> to vector<1x128xf32>
    %cst_92 = arith.constant dense<0.000000e+00> : vector<32xf32>
    %357 = vector.multi_reduction <add>, %350, %cst_92 [1] : vector<32x128xf32> to vector<32xf32>
    %358 = vector.shape_cast %357 : vector<32xf32> to vector<32x1xf32>
    %cst_93 = arith.constant 1.280000e+02 : f32
    %359 = vector.broadcast %cst_93 : f32 to vector<32x1xf32>
    %360 = arith.divf %358, %359 : vector<32x1xf32>
    %361 = vector.broadcast %360 : vector<32x1xf32> to vector<32x128xf32>
    %362 = arith.subf %350, %361 : vector<32x128xf32>
    %363 = vector.broadcast %360 : vector<32x1xf32> to vector<32x128xf32>
    %364 = arith.subf %350, %363 : vector<32x128xf32>
    %365 = arith.mulf %362, %364 : vector<32x128xf32>
    %cst_94 = arith.constant dense<0.000000e+00> : vector<32xf32>
    %366 = vector.multi_reduction <add>, %365, %cst_94 [1] : vector<32x128xf32> to vector<32xf32>
    %367 = vector.shape_cast %366 : vector<32xf32> to vector<32x1xf32>
    %cst_95 = arith.constant 1.280000e+02 : f32
    %368 = vector.broadcast %cst_95 : f32 to vector<32x1xf32>
    %369 = arith.divf %367, %368 : vector<32x1xf32>
    %370 = vector.broadcast %360 : vector<32x1xf32> to vector<32x128xf32>
    %371 = arith.subf %350, %370 : vector<32x128xf32>
    %cst_96 = arith.constant 9.99999974E-6 : f32
    %372 = vector.broadcast %cst_96 : f32 to vector<32x1xf32>
    %373 = arith.addf %369, %372 : vector<32x1xf32>
    %374 = math.rsqrt %373 : vector<32x1xf32>
    %375 = vector.broadcast %374 : vector<32x1xf32> to vector<32x128xf32>
    %376 = arith.mulf %371, %375 : vector<32x128xf32>
    %377 = vector.broadcast %353 : vector<1x128xf32> to vector<32x128xf32>
    %378 = arith.mulf %376, %377 : vector<32x128xf32>
    %379 = vector.broadcast %356 : vector<1x128xf32> to vector<32x128xf32>
    %380 = arith.addf %378, %379 : vector<32x128xf32>
    %381 = arith.truncf %380 : vector<32x128xf32> to vector<32x128xbf16>
    %382 = arith.index_cast %arg1 : i32 to index
    %c0_97 = arith.constant 0 : index
    %c1024_98 = arith.constant 1024 : index
    %383 = vector.load %arg12[%382, %c0_97, %c1024_98] : memref<2x128x1536xbf16, #tpu.memory_space<vmem>>, vector<1x128x512xbf16>
    %384 = vector.shape_cast %383 : vector<1x128x512xbf16> to vector<128x512xbf16>
    %cst_99 = arith.constant dense<0.000000e+00> : vector<32x512xf32>
    %385 = tpu.matmul %381, %384, %cst_99 {dimension_numbers = #tpu.dot_dimension_numbers<[1], [0], [0], [1], [0, 0, 1, 1], [], []>} : vector<32x128xbf16>, vector<128x512xbf16>, vector<32x512xf32> -> vector<32x512xf32>
    %386 = arith.index_cast %arg1 : i32 to index
    %c0_100 = arith.constant 0 : index
    %c1792 = arith.constant 1792 : index
    %387 = vector.load %arg14[%386, %c0_100, %c1792] : memref<2x1x2432xf32, #tpu.memory_space<vmem>>, vector<1x1x512xf32>
    %388 = vector.shape_cast %387 : vector<1x1x512xf32> to vector<1x512xf32>
    %389 = vector.broadcast %388 : vector<1x512xf32> to vector<32x512xf32>
    %390 = arith.addf %385, %389 : vector<32x512xf32>
    %cst_101 = arith.constant 5.000000e-01 : f32
    %391 = vector.broadcast %cst_101 : f32 to vector<32x512xf32>
    %392 = arith.mulf %391, %390 : vector<32x512xf32>
    %cst_102 = arith.constant 4.471500e-02 : f32
    %393 = vector.broadcast %cst_102 : f32 to vector<32x512xf32>
    %394 = arith.mulf %393, %390 : vector<32x512xf32>
    %395 = arith.mulf %394, %390 : vector<32x512xf32>
    %396 = arith.mulf %395, %390 : vector<32x512xf32>
    %397 = arith.addf %390, %396 : vector<32x512xf32>
    %cst_103 = arith.constant 0.797884583 : f32
    %398 = vector.broadcast %cst_103 : f32 to vector<32x512xf32>
    %399 = arith.mulf %398, %397 : vector<32x512xf32>
    %400 = math.tanh %399 : vector<32x512xf32>
    %cst_104 = arith.constant 1.000000e+00 : f32
    %401 = vector.broadcast %cst_104 : f32 to vector<32x512xf32>
    %402 = arith.addf %401, %400 : vector<32x512xf32>
    %403 = arith.mulf %392, %402 : vector<32x512xf32>
    %404 = arith.truncf %403 : vector<32x512xf32> to vector<32x512xbf16>
    %405 = arith.index_cast %arg1 : i32 to index
    %c0_105 = arith.constant 0 : index
    %c0_106 = arith.constant 0 : index
    %406 = vector.load %arg13[%405, %c0_105, %c0_106] : memref<2x512x128xbf16, #tpu.memory_space<vmem>>, vector<1x512x128xbf16>
    %407 = vector.shape_cast %406 : vector<1x512x128xbf16> to vector<512x128xbf16>
    %cst_107 = arith.constant dense<0.000000e+00> : vector<32x128xf32>
    %408 = tpu.matmul %404, %407, %cst_107 {dimension_numbers = #tpu.dot_dimension_numbers<[1], [0], [0], [1], [0, 0, 1, 1], [], []>} : vector<32x512xbf16>, vector<512x128xbf16>, vector<32x128xf32> -> vector<32x128xf32>
    %409 = arith.index_cast %arg1 : i32 to index
    %c0_108 = arith.constant 0 : index
    %c2304 = arith.constant 2304 : index
    %410 = vector.load %arg14[%409, %c0_108, %c2304] : memref<2x1x2432xf32, #tpu.memory_space<vmem>>, vector<1x1x128xf32>
    %411 = vector.shape_cast %410 : vector<1x1x128xf32> to vector<1x128xf32>
    %412 = vector.broadcast %411 : vector<1x128xf32> to vector<32x128xf32>
    %413 = arith.addf %408, %412 : vector<32x128xf32>
    %414 = arith.addf %350, %413 : vector<32x128xf32>
    %415 = vector.shape_cast %414 : vector<32x128xf32> to vector<1x32x128xf32>
    %c0_109 = arith.constant 0 : index
    %c0_110 = arith.constant 0 : index
    %c0_111 = arith.constant 0 : index
    %416 = vector.load %arg16[%c0_109, %c0_110, %c0_111] : memref<1x32x128xf32, #tpu.memory_space<vmem>>, vector<1x32x128xf32>
    tpu.vector_store %arg16[%c0_109, %c0_110, %c0_111], %415 {strides = array<i32>} : memref<1x32x128xf32, #tpu.memory_space<vmem>>, vector<1x32x128xf32>,
    %c1_i32 = arith.constant 1 : i32
    %417 = arith.cmpi eq, %arg1, %c1_i32 : i32
    %418 = arith.extui %417 : i1 to i32
    %c0_i32_112 = arith.constant 0 : i32
    %419 = arith.cmpi ne, %418, %c0_i32_112 : i32
    scf.if %419 {
      %c0_113 = arith.constant 0 : index
      %c896_114 = arith.constant 896 : index
      %420 = vector.load %arg11[%c0_113, %c896_114] : memref<1x1280xf32, #tpu.memory_space<vmem>>, vector<1x128xf32>
      %c0_115 = arith.constant 0 : index
      %c1024_116 = arith.constant 1024 : index
      %421 = vector.load %arg11[%c0_115, %c1024_116] : memref<1x1280xf32, #tpu.memory_space<vmem>>, vector<1x128xf32>
      %cst_117 = arith.constant dense<0.000000e+00> : vector<32xf32>
      %422 = vector.multi_reduction <add>, %414, %cst_117 [1] : vector<32x128xf32> to vector<32xf32>
      %423 = vector.shape_cast %422 : vector<32xf32> to vector<32x1xf32>
      %cst_118 = arith.constant 1.280000e+02 : f32
      %424 = vector.broadcast %cst_118 : f32 to vector<32x1xf32>
      %425 = arith.divf %423, %424 : vector<32x1xf32>
      %426 = vector.broadcast %425 : vector<32x1xf32> to vector<32x128xf32>
      %427 = arith.subf %414, %426 : vector<32x128xf32>
      %428 = vector.broadcast %425 : vector<32x1xf32> to vector<32x128xf32>
      %429 = arith.subf %414, %428 : vector<32x128xf32>
      %430 = arith.mulf %427, %429 : vector<32x128xf32>
      %cst_119 = arith.constant dense<0.000000e+00> : vector<32xf32>
      %431 = vector.multi_reduction <add>, %430, %cst_119 [1] : vector<32x128xf32> to vector<32xf32>
      %432 = vector.shape_cast %431 : vector<32xf32> to vector<32x1xf32>
      %cst_120 = arith.constant 1.280000e+02 : f32
      %433 = vector.broadcast %cst_120 : f32 to vector<32x1xf32>
      %434 = arith.divf %432, %433 : vector<32x1xf32>
      %435 = vector.broadcast %425 : vector<32x1xf32> to vector<32x128xf32>
      %436 = arith.subf %414, %435 : vector<32x128xf32>
      %cst_121 = arith.constant 9.99999974E-6 : f32
      %437 = vector.broadcast %cst_121 : f32 to vector<32x1xf32>
      %438 = arith.addf %434, %437 : vector<32x1xf32>
      %439 = math.rsqrt %438 : vector<32x1xf32>
      %440 = vector.broadcast %439 : vector<32x1xf32> to vector<32x128xf32>
      %441 = arith.mulf %436, %440 : vector<32x128xf32>
      %442 = vector.broadcast %420 : vector<1x128xf32> to vector<32x128xf32>
      %443 = arith.mulf %441, %442 : vector<32x128xf32>
      %444 = vector.broadcast %421 : vector<1x128xf32> to vector<32x128xf32>
      %445 = arith.addf %443, %444 : vector<32x128xf32>
      %446 = arith.truncf %445 : vector<32x128xf32> to vector<32x128xbf16>
      %c0_122 = arith.constant 0 : index
      %c0_123 = arith.constant 0 : index
      %447 = vector.load %arg10[%c0_122, %c0_123] : memref<128x128xbf16, #tpu.memory_space<vmem>>, vector<128x128xbf16>
      %cst_124 = arith.constant dense<0.000000e+00> : vector<32x128xf32>
      %448 = tpu.matmul %446, %447, %cst_124 {dimension_numbers = #tpu.dot_dimension_numbers<[1], [0], [0], [1], [0, 0, 1, 1], [], []>} : vector<32x128xbf16>, vector<128x128xbf16>, vector<32x128xf32> -> vector<32x128xf32>
      %c0_125 = arith.constant 0 : index
      %c1152_126 = arith.constant 1152 : index
      %449 = vector.load %arg11[%c0_125, %c1152_126] : memref<1x1280xf32, #tpu.memory_space<vmem>>, vector<1x128xf32>
      %450 = vector.broadcast %449 : vector<1x128xf32> to vector<32x128xf32>
      %451 = arith.addf %448, %450 : vector<32x128xf32>
      %452 = vector.shape_cast %451 : vector<32x128xf32> to vector<1x32x128xf32>
      %c0_127 = arith.constant 0 : index
      %c0_128 = arith.constant 0 : index
      %c0_129 = arith.constant 0 : index
      %453 = vector.load %arg15[%c0_127, %c0_128, %c0_129] : memref<1x32x128xf32, #tpu.memory_space<vmem>>, vector<1x32x128xf32>
      tpu.vector_store %arg15[%c0_127, %c0_128, %c0_129], %452 {strides = array<i32>} : memref<1x32x128xf32, #tpu.memory_space<vmem>>, vector<1x32x128xf32>,
    } else {
    }
    return
  }
  func.func @transform_0(%arg0: i32, %arg1: i32) -> (i32, i32, i32) {
    %c0_i32 = arith.constant 0 : i32
    %c0_i32_0 = arith.constant 0 : i32
    %c0_i32_1 = arith.constant 0 : i32
    return %arg0, %c0_i32, %c0_i32_0 : i32, i32, i32
  }
  func.func @transform_1(%arg0: i32, %arg1: i32) -> (i32, i32, i32) {
    %c0_i32 = arith.constant 0 : i32
    %c0_i32_0 = arith.constant 0 : i32
    %c0_i32_1 = arith.constant 0 : i32
    return %arg0, %c0_i32, %c0_i32_0 : i32, i32, i32
  }
  func.func @transform_2(%arg0: i32, %arg1: i32) -> (i32, i32, i32) {
    %c0_i32 = arith.constant 0 : i32
    %c0_i32_0 = arith.constant 0 : i32
    %c0_i32_1 = arith.constant 0 : i32
    return %arg0, %c0_i32, %c0_i32_0 : i32, i32, i32
  }
  func.func @transform_3(%arg0: i32, %arg1: i32) -> (i32, i32, i32) {
    %c0_i32 = arith.constant 0 : i32
    %c0_i32_0 = arith.constant 0 : i32
    %c0_i32_1 = arith.constant 0 : i32
    %c0_i32_2 = arith.constant 0 : i32
    return %c0_i32, %c0_i32_0, %c0_i32_1 : i32, i32, i32
  }
  func.func @transform_4(%arg0: i32, %arg1: i32) -> (i32, i32, i32) {
    %c0_i32 = arith.constant 0 : i32
    %c0_i32_0 = arith.constant 0 : i32
    %c0_i32_1 = arith.constant 0 : i32
    %c0_i32_2 = arith.constant 0 : i32
    return %c0_i32, %c0_i32_0, %c0_i32_1 : i32, i32, i32
  }
  func.func @transform_5(%arg0: i32, %arg1: i32) -> (i32, i32) {
    %c0_i32 = arith.constant 0 : i32
    %c0_i32_0 = arith.constant 0 : i32
    %c0_i32_1 = arith.constant 0 : i32
    return %c0_i32, %c0_i32_0 : i32, i32
  }
  func.func @transform_6(%arg0: i32, %arg1: i32) -> (i32, i32) {
    %c0_i32 = arith.constant 0 : i32
    %c0_i32_0 = arith.constant 0 : i32
    %c0_i32_1 = arith.constant 0 : i32
    return %c0_i32, %c0_i32_0 : i32, i32
  }
  func.func @transform_7(%arg0: i32, %arg1: i32) -> (i32, i32) {
    %c0_i32 = arith.constant 0 : i32
    %c0_i32_0 = arith.constant 0 : i32
    %c0_i32_1 = arith.constant 0 : i32
    return %c0_i32, %c0_i32_0 : i32, i32
  }
  func.func @transform_8(%arg0: i32, %arg1: i32) -> (i32, i32) {
    %c0_i32 = arith.constant 0 : i32
    %c0_i32_0 = arith.constant 0 : i32
    %c0_i32_1 = arith.constant 0 : i32
    return %c0_i32, %c0_i32_0 : i32, i32
  }
  func.func @transform_9(%arg0: i32, %arg1: i32) -> (i32, i32) {
    %c0_i32 = arith.constant 0 : i32
    %c0_i32_0 = arith.constant 0 : i32
    %c0_i32_1 = arith.constant 0 : i32
    return %c0_i32, %c0_i32_0 : i32, i32
  }
  func.func @transform_10(%arg0: i32, %arg1: i32) -> (i32, i32, i32) {
    %c0_i32 = arith.constant 0 : i32
    %c0_i32_0 = arith.constant 0 : i32
    %c0_i32_1 = arith.constant 0 : i32
    %c0_i32_2 = arith.constant 0 : i32
    return %c0_i32, %c0_i32_0, %c0_i32_1 : i32, i32, i32
  }
  func.func @transform_11(%arg0: i32, %arg1: i32) -> (i32, i32, i32) {
    %c0_i32 = arith.constant 0 : i32
    %c0_i32_0 = arith.constant 0 : i32
    %c0_i32_1 = arith.constant 0 : i32
    %c0_i32_2 = arith.constant 0 : i32
    return %c0_i32, %c0_i32_0, %c0_i32_1 : i32, i32, i32
  }
  func.func @transform_12(%arg0: i32, %arg1: i32) -> (i32, i32, i32) {
    %c0_i32 = arith.constant 0 : i32
    %c0_i32_0 = arith.constant 0 : i32
    %c0_i32_1 = arith.constant 0 : i32
    %c0_i32_2 = arith.constant 0 : i32
    return %c0_i32, %c0_i32_0, %c0_i32_1 : i32, i32, i32
  }
  func.func @transform_13(%arg0: i32, %arg1: i32) -> (i32, i32, i32) {
    %c0_i32 = arith.constant 0 : i32
    %c0_i32_0 = arith.constant 0 : i32
    %c0_i32_1 = arith.constant 0 : i32
    return %arg0, %c0_i32, %c0_i32_0 : i32, i32, i32
  }
}

</mosaic_0001>

<llo_original>
// kernel: traj_predict_policy_forward.1
$region0: #{traj_predict_policy_forward.1}
  #allocation0 [shape = 'u32[]', space=smem, size = 0x4, offset = 0x4, fixed_abs, tag = 'smem constant byte address 0x4 - core index']
  #allocation1 [shape = 'u32[72,128]{1,0:T(1,128)}', space=vmem, size = 0x9000, scoped, tag = 'internal scratch']
  #allocation2 [shape = 'f32[1,32,128]{2,1,0:T(8,128)}', space=vmem, size = 0x4000, scoped, tag = 'scratch operand']
  #allocation3 [shape = 'f32[1,24,128]{2,1,0:T(8,128)}', space=vmem, size = 0x3000, scoped, tag = 'scratch operand']
  #allocation4 [shape = 'f32[32,32]{1,0:T(8,128)}', space=vmem, size = 0x4000, scoped, tag = 'scratch operand']
  #allocation5 [shape = 'f32[32,24]{1,0:T(8,128)}', space=vmem, size = 0x4000, scoped, tag = 'scratch operand']
  %s0 = inlined_call_operand.vmem [shape: f32[2,32,128], index: 0, kind: input, shape index: {}]
  %s1 = inlined_call_operand.vmem [shape: f32[2,1,128], index: 1, kind: input, shape index: {}]
  %s2 = inlined_call_operand.vmem [shape: f32[2,24,128], index: 2, kind: input, shape index: {}]
  %s3 = inlined_call_operand.vmem [shape: f32[1,32,128], index: 3, kind: input, shape index: {}]
  %s4 = inlined_call_operand.vmem [shape: f32[1,24,128], index: 4, kind: input, shape index: {}]
  %s5 = inlined_call_operand.vmem [shape: bf16[128,256], index: 5, kind: input, shape index: {}]
  %s6 = inlined_call_operand.vmem [shape: bf16[128,512], index: 6, kind: input, shape index: {}]
  %s7 = inlined_call_operand.vmem [shape: bf16[512,128], index: 7, kind: input, shape index: {}]
  %s8 = inlined_call_operand.vmem [shape: bf16[128,128], index: 8, kind: input, shape index: {}]
  %s9 = inlined_call_operand.vmem [shape: f32[1,1280], index: 9, kind: input, shape index: {}]
  %s10 = inlined_call_operand.hbm [shape: bf16[2,128,1536], index: 10, kind: input, shape index: {}]
  %s11 = inlined_call_operand.vmem [shape: bf16[2,512,128], index: 11, kind: input, shape index: {}]
  %s12 = inlined_call_operand.vmem [shape: f32[2,1,2432], index: 12, kind: input, shape index: {}]
  %s13 = inlined_call_operand.vmem [shape: f32[2,32,128], index: 13, kind: output, shape index: {}]
  %s14 = sld [smem:[#allocation0]]
  $region97: #{traj_predict_policy_forward.1} parent=0
    _
  %s16 = ssub.s32 1, %s14
  %s17 = scalar_select 0, %s16, %s14
  $region1: #{traj_predict_policy_forward.1} parent=0
    #allocation6 [shape = 'u8[786432]{0}', space=vmem, size = 0xc0000, scoped, tag = 'input window, operand 10, single buffered']
    #allocation7 [shape = 's32[2]{0}', space=sflag, size = 0x8, scoped, tag = 'scoped memory for traj_predict_policy_forward.1']
    %18 = vsyncpa [#allocation7], 0
    loop: start=0, step=1, limit=6
    $region2: #{traj_predict_policy_forward.1} parent=1 // loop_pre_header
      _
    $region3: #{traj_predict_policy_forward.1} parent=1 // loop_header
      %s20 = sphi 0, %s24
      %p21 = scmp.ge.s32.totalorder %s20, 6
      %s27 = sphi 0, %s39
      %s28 = sphi 0, %s35
      %s29 = sphi 0, %s27
      %s30 = sphi 0, %s28
      %s31 = sphi 0, %s29
      %s32 = sphi 0, %s30
      %s42 = sphi 0, %s44
      %s45 = sphi 0, %s42
      %s46 = sphi 0, %s45
      %s62 = sphi 0, %s46
      %s68 = sphi 0, %s70
      %s71 = sphi 0, %s68
      %s72 = sphi 0, %s71
      %s88 = sphi 0, %s72
      %s94 = sphi 0, %s96
      %s97 = sphi 0, %s94
      %s98 = sphi 0, %s97
      %s114 = sphi 0, %s98
      %s118 = sphi 0, %s118
      %s120 = sphi 0, %s118
      %s121 = sphi 0, %s120
      %s135 = sphi 0, %s121
      %s139 = sphi 0, %s139
      %s141 = sphi 0, %s139
      %s142 = sphi 0, %s141
      %s156 = sphi 0, %s142
      %s160 = sphi 0, %s160
      %s162 = sphi 0, %s160
      %s163 = sphi 0, %s162
      %s177 = sphi 0, %s163
      %s181 = sphi 0, %s181
      %s183 = sphi 0, %s181
      %s184 = sphi 0, %s183
      %s198 = sphi 0, %s184
      %s202 = sphi 0, %s202
      %s204 = sphi 0, %s202
      %s205 = sphi 0, %s204
      %s219 = sphi 0, %s205
      %s223 = sphi 0, %s223
      %s225 = sphi 0, %s223
      %s226 = sphi 0, %s225
      %s240 = sphi 0, %s226
      %s244 = sphi 0, %s244
      %s246 = sphi 0, %s244
      %s247 = sphi 0, %s246
      %s261 = sphi 0, %s247
      %s265 = sphi 0, %s265
      %s267 = sphi 0, %s265
      %s268 = sphi 0, %s267
      %s282 = sphi 0, %s268
      %s286 = sphi 0, %s286
      %s288 = sphi 0, %s286
      %s289 = sphi 0, %s288
      %s303 = sphi 0, %s289
      %s307 = sphi 0, %s307
      %s309 = sphi 0, %s307
      %s310 = sphi 0, %s309
      %s324 = sphi 0, %s310
      %s330 = sphi 0, %s332
      %s333 = sphi 0, %s330
      %s334 = sphi 0, %s333
      %s350 = sphi 0, %s334
    $region4: #{traj_predict_policy_forward.1} parent=1 // loop_header_branch
      %23 = sbr.rel (%p21) target = $region8
    $region5: #{traj_predict_policy_forward.1} parent=1 // loop_body
      %s25 = ssub.s32 %s20, 1
      %s26 = ssub.s32 %s20, 2
      %s33 = sadd.s32 1, %s28
      %p34 = scmp.ge.s32.totalorder %s33, 2
      %s35 = scalar_select %p34, 0, %s33
      %s36 = sadd.s32 1, %s27
      %s37 = scalar_select %p34, %s36, %s27
      %p38 = scmp.ge.s32.totalorder %s37, 2
      %s39 = scalar_select %p38, 0, %s37
      %s40 = ssub.s32 %s27, %s39
      %p41 = scmp.eq.s32.totalorder %s40, 0
      %s43 = sadd.s32 %s42, 1
      %s44 = scalar_select %p41, %s42, %s43
      %p47 = pneg %p41
      %p48 = scmp.eq.s32.totalorder %s20, 3
      %p49 = por %p47, %p48
      %p50 = scmp.ne.s32.totalorder %s42, %s45
      %p51 = scmp.eq.s32.totalorder %s20, 0
      %p52 = por %p50, %p51
      %p53 = scmp.ne.s32.totalorder %s42, %s45
      %p54 = scmp.eq.s32.totalorder %s25, 3
      %p55 = por %p53, %p54
      %p56 = scmp.ne.s32.totalorder %s45, %s46
      %p57 = scmp.eq.s32.totalorder %s25, 0
      %p58 = por %p56, %p57
      %p59 = scmp.ne.s32.totalorder %s45, %s46
      %p60 = scmp.eq.s32.totalorder %s26, 3
      %p61 = por %p59, %p60
      %p63 = scmp.ne.s32.totalorder %s46, %s62
      %p64 = scmp.eq.s32.totalorder %s26, 0
      %p65 = por %p63, %p64
      %s66 = ssub.s32 %s27, %s39
      %p67 = scmp.eq.s32.totalorder %s66, 0
      %s69 = sadd.s32 %s68, 1
      %s70 = scalar_select %p67, %s68, %s69
      %p73 = pneg %p67
      %p74 = scmp.eq.s32.totalorder %s20, 3
      %p75 = por %p73, %p74
      %p76 = scmp.ne.s32.totalorder %s68, %s71
      %p77 = scmp.eq.s32.totalorder %s20, 0
      %p78 = por %p76, %p77
      %p79 = scmp.ne.s32.totalorder %s68, %s71
      %p80 = scmp.eq.s32.totalorder %s25, 3
      %p81 = por %p79, %p80
      %p82 = scmp.ne.s32.totalorder %s71, %s72
      %p83 = scmp.eq.s32.totalorder %s25, 0
      %p84 = por %p82, %p83
      %p85 = scmp.ne.s32.totalorder %s71, %s72
      %p86 = scmp.eq.s32.totalorder %s26, 3
      %p87 = por %p85, %p86
      %p89 = scmp.ne.s32.totalorder %s72, %s88
      %p90 = scmp.eq.s32.totalorder %s26, 0
      %p91 = por %p89, %p90
      %s92 = ssub.s32 %s27, %s39
      %p93 = scmp.eq.s32.totalorder %s92, 0
      %s95 = sadd.s32 %s94, 1
      %s96 = scalar_select %p93, %s94, %s95
      %p99 = pneg %p93
      %p100 = scmp.eq.s32.totalorder %s20, 3
      %p101 = por %p99, %p100
      %p102 = scmp.ne.s32.totalorder %s94, %s97
      %p103 = scmp.eq.s32.totalorder %s20, 0
      %p104 = por %p102, %p103
      %p105 = scmp.ne.s32.totalorder %s94, %s97
      %p106 = scmp.eq.s32.totalorder %s25, 3
      %p107 = por %p105, %p106
      %p108 = scmp.ne.s32.totalorder %s97, %s98
      %p109 = scmp.eq.s32.totalorder %s25, 0
      %p110 = por %p108, %p109
      %p111 = scmp.ne.s32.totalorder %s97, %s98
      %p112 = scmp.eq.s32.totalorder %s26, 3
      %p113 = por %p111, %p112
      %p115 = scmp.ne.s32.totalorder %s98, %s114
      %p116 = scmp.eq.s32.totalorder %s26, 0
      %p117 = por %p115, %p116
      %s119 = sadd.s32 %s118, 1
      %p122 = scmp.eq.s32.totalorder %s20, 3
      %p123 = scmp.ne.s32.totalorder %s118, %s120
      %p124 = scmp.eq.s32.totalorder %s20, 0
      %p125 = por %p123, %p124
      %p126 = scmp.ne.s32.totalorder %s118, %s120
      %p127 = scmp.eq.s32.totalorder %s25, 3
      %p128 = por %p126, %p127
      %p129 = scmp.ne.s32.totalorder %s120, %s121
      %p130 = scmp.eq.s32.totalorder %s25, 0
      %p131 = por %p129, %p130
      %p132 = scmp.ne.s32.totalorder %s120, %s121
      %p133 = scmp.eq.s32.totalorder %s26, 3
      %p134 = por %p132, %p133
      %p136 = scmp.ne.s32.totalorder %s121, %s135
      %p137 = scmp.eq.s32.totalorder %s26, 0
      %p138 = por %p136, %p137
      %s140 = sadd.s32 %s139, 1
      %p143 = scmp.eq.s32.totalorder %s20, 3
      %p144 = scmp.ne.s32.totalorder %s139, %s141
      %p145 = scmp.eq.s32.totalorder %s20, 0
      %p146 = por %p144, %p145
      %p147 = scmp.ne.s32.totalorder %s139, %s141
      %p148 = scmp.eq.s32.totalorder %s25, 3
      %p149 = por %p147, %p148
      %p150 = scmp.ne.s32.totalorder %s141, %s142
      %p151 = scmp.eq.s32.totalorder %s25, 0
      %p152 = por %p150, %p151
      %p153 = scmp.ne.s32.totalorder %s141, %s142
      %p154 = scmp.eq.s32.totalorder %s26, 3
      %p155 = por %p153, %p154
      %p157 = scmp.ne.s32.totalorder %s142, %s156
      %p158 = scmp.eq.s32.totalorder %s26, 0
      %p159 = por %p157, %p158
      %s161 = sadd.s32 %s160, 1
      %p164 = scmp.eq.s32.totalorder %s20, 3
      %p165 = scmp.ne.s32.totalorder %s160, %s162
      %p166 = scmp.eq.s32.totalorder %s20, 0
      %p167 = por %p165, %p166
      %p168 = scmp.ne.s32.totalorder %s160, %s162
      %p169 = scmp.eq.s32.totalorder %s25, 3
      %p170 = por %p168, %p169
      %p171 = scmp.ne.s32.totalorder %s162, %s163
      %p172 = scmp.eq.s32.totalorder %s25, 0
      %p173 = por %p171, %p172
      %p174 = scmp.ne.s32.totalorder %s162, %s163
      %p175 = scmp.eq.s32.totalorder %s26, 3
      %p176 = por %p174, %p175
      %p178 = scmp.ne.s32.totalorder %s163, %s177
      %p179 = scmp.eq.s32.totalorder %s26, 0
      %p180 = por %p178, %p179
      %s182 = sadd.s32 %s181, 1
      %p185 = scmp.eq.s32.totalorder %s20, 3
      %p186 = scmp.ne.s32.totalorder %s181, %s183
      %p187 = scmp.eq.s32.totalorder %s20, 0
      %p188 = por %p186, %p187
      %p189 = scmp.ne.s32.totalorder %s181, %s183
      %p190 = scmp.eq.s32.totalorder %s25, 3
      %p191 = por %p189, %p190
      %p192 = scmp.ne.s32.totalorder %s183, %s184
      %p193 = scmp.eq.s32.totalorder %s25, 0
      %p194 = por %p192, %p193
      %p195 = scmp.ne.s32.totalorder %s183, %s184
      %p196 = scmp.eq.s32.totalorder %s26, 3
      %p197 = por %p195, %p196
      %p199 = scmp.ne.s32.totalorder %s184, %s198
      %p200 = scmp.eq.s32.totalorder %s26, 0
      %p201 = por %p199, %p200
      %s203 = sadd.s32 %s202, 1
      %p206 = scmp.eq.s32.totalorder %s20, 3
      %p207 = scmp.ne.s32.totalorder %s202, %s204
      %p208 = scmp.eq.s32.totalorder %s20, 0
      %p209 = por %p207, %p208
      %p210 = scmp.ne.s32.totalorder %s202, %s204
      %p211 = scmp.eq.s32.totalorder %s25, 3
      %p212 = por %p210, %p211
      %p213 = scmp.ne.s32.totalorder %s204, %s205
      %p214 = scmp.eq.s32.totalorder %s25, 0
      %p215 = por %p213, %p214
      %p216 = scmp.ne.s32.totalorder %s204, %s205
      %p217 = scmp.eq.s32.totalorder %s26, 3
      %p218 = por %p216, %p217
      %p220 = scmp.ne.s32.totalorder %s205, %s219
      %p221 = scmp.eq.s32.totalorder %s26, 0
      %p222 = por %p220, %p221
      %s224 = sadd.s32 %s223, 1
      %p227 = scmp.eq.s32.totalorder %s20, 3
      %p228 = scmp.ne.s32.totalorder %s223, %s225
      %p229 = scmp.eq.s32.totalorder %s20, 0
      %p230 = por %p228, %p229
      %p231 = scmp.ne.s32.totalorder %s223, %s225
      %p232 = scmp.eq.s32.totalorder %s25, 3
      %p233 = por %p231, %p232
      %p234 = scmp.ne.s32.totalorder %s225, %s226
      %p235 = scmp.eq.s32.totalorder %s25, 0
      %p236 = por %p234, %p235
      %p237 = scmp.ne.s32.totalorder %s225, %s226
      %p238 = scmp.eq.s32.totalorder %s26, 3
      %p239 = por %p237, %p238
      %p241 = scmp.ne.s32.totalorder %s226, %s240
      %p242 = scmp.eq.s32.totalorder %s26, 0
      %p243 = por %p241, %p242
      %s245 = sadd.s32 %s244, 1
      %p248 = scmp.eq.s32.totalorder %s20, 3
      %p249 = scmp.ne.s32.totalorder %s244, %s246
      %p250 = scmp.eq.s32.totalorder %s20, 0
      %p251 = por %p249, %p250
      %p252 = scmp.ne.s32.totalorder %s244, %s246
      %p253 = scmp.eq.s32.totalorder %s25, 3
      %p254 = por %p252, %p253
      %p255 = scmp.ne.s32.totalorder %s246, %s247
      %p256 = scmp.eq.s32.totalorder %s25, 0
      %p257 = por %p255, %p256
      %p258 = scmp.ne.s32.totalorder %s246, %s247
      %p259 = scmp.eq.s32.totalorder %s26, 3
      %p260 = por %p258, %p259
      %p262 = scmp.ne.s32.totalorder %s247, %s261
      %p263 = scmp.eq.s32.totalorder %s26, 0
      %p264 = por %p262, %p263
      %s266 = sadd.s32 %s265, 1
      %p269 = scmp.eq.s32.totalorder %s20, 3
      %p270 = scmp.ne.s32.totalorder %s265, %s267
      %p271 = scmp.eq.s32.totalorder %s20, 0
      %p272 = por %p270, %p271
      %p273 = scmp.ne.s32.totalorder %s265, %s267
      %p274 = scmp.eq.s32.totalorder %s25, 3
      %p275 = por %p273, %p274
      %p276 = scmp.ne.s32.totalorder %s267, %s268
      %p277 = scmp.eq.s32.totalorder %s25, 0
      %p278 = por %p276, %p277
      %p279 = scmp.ne.s32.totalorder %s267, %s268
      %p280 = scmp.eq.s32.totalorder %s26, 3
      %p281 = por %p279, %p280
      %p283 = scmp.ne.s32.totalorder %s268, %s282
      %p284 = scmp.eq.s32.totalorder %s26, 0
      %p285 = por %p283, %p284
      %s287 = sadd.s32 %s286, 1
      %p290 = scmp.eq.s32.totalorder %s20, 3
      %p291 = scmp.ne.s32.totalorder %s286, %s288
      %p292 = scmp.eq.s32.totalorder %s20, 0
      %p293 = por %p291, %p292
      %p294 = scmp.ne.s32.totalorder %s286, %s288
      %p295 = scmp.eq.s32.totalorder %s25, 3
      %p296 = por %p294, %p295
      %p297 = scmp.ne.s32.totalorder %s288, %s289
      %p298 = scmp.eq.s32.totalorder %s25, 0
      %p299 = por %p297, %p298
      %p300 = scmp.ne.s32.totalorder %s288, %s289
      %p301 = scmp.eq.s32.totalorder %s26, 3
      %p302 = por %p300, %p301
      %p304 = scmp.ne.s32.totalorder %s289, %s303
      %p305 = scmp.eq.s32.totalorder %s26, 0
      %p306 = por %p304, %p305
      %s308 = sadd.s32 %s307, 1
      %p311 = scmp.eq.s32.totalorder %s20, 3
      %p312 = scmp.ne.s32.totalorder %s307, %s309
      %p313 = scmp.eq.s32.totalorder %s20, 0
      %p314 = por %p312, %p313
      %p315 = scmp.ne.s32.totalorder %s307, %s309
      %p316 = scmp.eq.s32.totalorder %s25, 3
      %p317 = por %p315, %p316
      %p318 = scmp.ne.s32.totalorder %s309, %s310
      %p319 = scmp.eq.s32.totalorder %s25, 0
      %p320 = por %p318, %p319
      %p321 = scmp.ne.s32.totalorder %s309, %s310
      %p322 = scmp.eq.s32.totalorder %s26, 3
      %p323 = por %p321, %p322
      %p325 = scmp.ne.s32.totalorder %s310, %s324
      %p326 = scmp.eq.s32.totalorder %s26, 0
      %p327 = por %p325, %p326
      %s328 = ssub.s32 %s27, %s39
      %p329 = scmp.eq.s32.totalorder %s328, 0
      %s331 = sadd.s32 %s330, 1
      %s332 = scalar_select %p329, %s330, %s331
      %p335 = pneg %p329
      %p336 = scmp.eq.s32.totalorder %s20, 3
      %p337 = por %p335, %p336
      %p338 = scmp.ne.s32.totalorder %s330, %s333
      %p339 = scmp.eq.s32.totalorder %s20, 0
      %p340 = por %p338, %p339
      %p341 = scmp.ne.s32.totalorder %s330, %s333
      %p342 = scmp.eq.s32.totalorder %s25, 3
      %p343 = por %p341, %p342
      %p344 = scmp.ne.s32.totalorder %s333, %s334
      %p345 = scmp.eq.s32.totalorder %s25, 0
      %p346 = por %p344, %p345
      %p347 = scmp.ne.s32.totalorder %s333, %s334
      %p348 = scmp.eq.s32.totalorder %s26, 3
      %p349 = por %p347, %p348
      %p351 = scmp.ne.s32.totalorder %s334, %s350
      %p352 = scmp.eq.s32.totalorder %s26, 0
      %p353 = por %p351, %p352
      %p354 = scmp.le.s32.totalorder 1, %s20
      %p355 = scmp.lt.s32.totalorder %s20, 5
      %p356 = pnand %p354, %p355
      %p357 = pneg %p356
      // Predicated region
      $region9: #{traj_predict_policy_forward.1} parent=5 // pred_check
        _
      $region10: #{traj_predict_policy_forward.1} parent=5 // pred_check_branch
        %359 = sbr.rel (%p356) target = $region12
      $region11: #{traj_predict_policy_forward.1} parent=5 // pred_region
        %s360 = ssub.s32 %s20, 1
        // Predicated region
        $region13: #{traj_predict_policy_forward.1} parent=11 // pred_check
          %p361 = pneg %p131
        $region14: #{traj_predict_policy_forward.1} parent=11 // pred_check_branch
          %363 = sbr.rel (%p361) target = $region16
        $region15: #{traj_predict_policy_forward.1} parent=11 // pred_region
          _
        $region16: #{traj_predict_policy_forward.1} parent=11 // pred_fallthru
          _
        // Predicated region
        $region17: #{traj_predict_policy_forward.1} parent=11 // pred_check
          %p364 = pneg %p152
        $region18: #{traj_predict_policy_forward.1} parent=11 // pred_check_branch
          %366 = sbr.rel (%p364) target = $region20
        $region19: #{traj_predict_policy_forward.1} parent=11 // pred_region
          _
        $region20: #{traj_predict_policy_forward.1} parent=11 // pred_fallthru
          _
        // Predicated region
        $region21: #{traj_predict_policy_forward.1} parent=11 // pred_check
          %p367 = pneg %p173
        $region22: #{traj_predict_policy_forward.1} parent=11 // pred_check_branch
          %369 = sbr.rel (%p367) target = $region24
        $region23: #{traj_predict_policy_forward.1} parent=11 // pred_region
          _
        $region24: #{traj_predict_policy_forward.1} parent=11 // pred_fallthru
          _
        // Predicated region
        $region25: #{traj_predict_policy_forward.1} parent=11 // pred_check
          %p370 = pneg %p194
        $region26: #{traj_predict_policy_forward.1} parent=11 // pred_check_branch
          %372 = sbr.rel (%p370) target = $region28
        $region27: #{traj_predict_policy_forward.1} parent=11 // pred_region
          _
        $region28: #{traj_predict_policy_forward.1} parent=11 // pred_fallthru
          _
        // Predicated region
        $region29: #{traj_predict_policy_forward.1} parent=11 // pred_check
          %p373 = pneg %p215
        $region30: #{traj_predict_policy_forward.1} parent=11 // pred_check_branch
          %375 = sbr.rel (%p373) target = $region32
        $region31: #{traj_predict_policy_forward.1} parent=11 // pred_region
          _
        $region32: #{traj_predict_policy_forward.1} parent=11 // pred_fallthru
          _
        // Predicated region
        $region33: #{traj_predict_policy_forward.1} parent=11 // pred_check
          %p376 = pneg %p236
        $region34: #{traj_predict_policy_forward.1} parent=11 // pred_check_branch
          %378 = sbr.rel (%p376) target = $region36
        $region35: #{traj_predict_policy_forward.1} parent=11 // pred_region
          _
        $region36: #{traj_predict_policy_forward.1} parent=11 // pred_fallthru
          _
        // Predicated region
        $region37: #{traj_predict_policy_forward.1} parent=11 // pred_check
          %p379 = pneg %p257
        $region38: #{traj_predict_policy_forward.1} parent=11 // pred_check_branch
          %381 = sbr.rel (%p379) target = $region40
        $region39: #{traj_predict_policy_forward.1} parent=11 // pred_region
          _
        $region40: #{traj_predict_policy_forward.1} parent=11 // pred_fallthru
          _
        // Predicated region
        $region41: #{traj_predict_policy_forward.1} parent=11 // pred_check
          %p382 = pneg %p278
        $region42: #{traj_predict_policy_forward.1} parent=11 // pred_check_branch
          %384 = sbr.rel (%p382) target = $region44
        $region43: #{traj_predict_policy_forward.1} parent=11 // pred_region
          %386 = vsyncadd [#allocation7], 0
          %s387 = sshll.u32 %s10, 4
          %s388 = int_to_ptr.hbm [resolvable:$true] %s387
          %s389 = sshll.u32 [#allocation6], 4
          %s390 = int_to_ptr.vmem [resolvable:$true] %s389
          %395 = dma.hbm_to_vmem [thread:$0]  %s388, 24576, %s390, [#allocation7], 768, 768, 48
        $region44: #{traj_predict_policy_forward.1} parent=11 // pred_fallthru
          _
        // Predicated region
        $region45: #{traj_predict_policy_forward.1} parent=11 // pred_check
          %p396 = pneg %p299
        $region46: #{traj_predict_policy_forward.1} parent=11 // pred_check_branch
          %398 = sbr.rel (%p396) target = $region48
        $region47: #{traj_predict_policy_forward.1} parent=11 // pred_region
          _
        $region48: #{traj_predict_policy_forward.1} parent=11 // pred_fallthru
          _
        // Predicated region
        $region49: #{traj_predict_policy_forward.1} parent=11 // pred_check
          %p399 = pneg %p320
        $region50: #{traj_predict_policy_forward.1} parent=11 // pred_check_branch
          %401 = sbr.rel (%p399) target = $region52
        $region51: #{traj_predict_policy_forward.1} parent=11 // pred_region
          _
        $region52: #{traj_predict_policy_forward.1} parent=11 // pred_fallthru
          _
      $region12: #{traj_predict_policy_forward.1} parent=5 // pred_fallthru
        _
      %p402 = scmp.lt.s32.totalorder %s20, 4
      // Predicated region
      $region53: #{traj_predict_policy_forward.1} parent=5 // pred_check
        %p403 = pneg %p402
      $region54: #{traj_predict_policy_forward.1} parent=5 // pred_check_branch
        %405 = sbr.rel (%p403) target = $region56
      $region55: #{traj_predict_policy_forward.1} parent=5 // pred_region
        // Predicated region
        $region57: #{traj_predict_policy_forward.1} parent=55 // pred_check
          %p406 = pneg %p52
        $region58: #{traj_predict_policy_forward.1} parent=55 // pred_check_branch
          %408 = sbr.rel (%p406) target = $region60
        $region59: #{traj_predict_policy_forward.1} parent=55 // pred_region
          %p409 = scmp.lt.s32.totalorder %s27, 1
          %s410 = scalar_select %p409, %s27, 1
          %s411 = smul.addr %s410, 4
          %s412 = smul.addr %s411, 8
          %s413 = scalar_lea.vmem %s0, %s412
        $region60: #{traj_predict_policy_forward.1} parent=55 // pred_fallthru
          _
        // Predicated region
        $region61: #{traj_predict_policy_forward.1} parent=55 // pred_check
          %p414 = pneg %p78
        $region62: #{traj_predict_policy_forward.1} parent=55 // pred_check_branch
          %416 = sbr.rel (%p414) target = $region64
        $region63: #{traj_predict_policy_forward.1} parent=55 // pred_region
          %p417 = scmp.lt.s32.totalorder %s27, 1
          %s418 = scalar_select %p417, %s27, 1
          %s419 = scalar_lea.vmem %s1, %s418
        $region64: #{traj_predict_policy_forward.1} parent=55 // pred_fallthru
          _
        // Predicated region
        $region65: #{traj_predict_policy_forward.1} parent=55 // pred_check
          %p420 = pneg %p104
        $region66: #{traj_predict_policy_forward.1} parent=55 // pred_check_branch
          %422 = sbr.rel (%p420) target = $region68
        $region67: #{traj_predict_policy_forward.1} parent=55 // pred_region
          %p423 = scmp.lt.s32.totalorder %s27, 1
          %s424 = scalar_select %p423, %s27, 1
          %s425 = smul.addr %s424, 3
          %s426 = smul.addr %s425, 8
          %s427 = scalar_lea.vmem %s2, %s426
        $region68: #{traj_predict_policy_forward.1} parent=55 // pred_fallthru
          _
      $region56: #{traj_predict_policy_forward.1} parent=5 // pred_fallthru
        _
      %p428 = scmp.le.s32.totalorder 1, %s20
      %p429 = scmp.lt.s32.totalorder %s20, 5
      %p430 = pnand %p428, %p429
      %p431 = pneg %p430
      // Predicated region
      $region69: #{traj_predict_policy_forward.1} parent=5 // pred_check
        _
      $region70: #{traj_predict_policy_forward.1} parent=5 // pred_check_branch
        %433 = sbr.rel (%p430) target = $region72
      $region71: #{traj_predict_policy_forward.1} parent=5 // pred_region
        %s434 = ssub.s32 %s20, 1
        // Predicated region
        $region73: #{traj_predict_policy_forward.1} parent=71 // pred_check
          %p435 = pneg %p278
        $region74: #{traj_predict_policy_forward.1} parent=71 // pred_check_branch
          %437 = sbr.rel (%p435) target = $region76
        $region75: #{traj_predict_policy_forward.1} parent=71 // pred_region
          %439 = dma.done [#allocation7], 24576
        $region76: #{traj_predict_policy_forward.1} parent=71 // pred_fallthru
          _
        %p440 = scmp.lt.s32.totalorder %s29, 1
        %s441 = scalar_select %p440, %s29, 1
        %s442 = smul.addr %s441, 4
        %s443 = smul.addr %s442, 8
        %s444 = scalar_lea.vmem %s0, %s443
        %p445 = pneg %p58
        %p446 = pneg %p55
        %p447 = scmp.lt.s32.totalorder %s29, 1
        %s448 = scalar_select %p447, %s29, 1
        %s449 = scalar_lea.vmem %s1, %s448
        %p450 = pneg %p84
        %p451 = pneg %p81
        %p452 = scmp.lt.s32.totalorder %s29, 1
        %s453 = scalar_select %p452, %s29, 1
        %s454 = smul.addr %s453, 3
        %s455 = smul.addr %s454, 8
        %s456 = scalar_lea.vmem %s2, %s455
        %p457 = pneg %p110
        %p458 = pneg %p107
        %p459 = pneg %p131
        %p460 = pneg %p128
        %p461 = pneg %p152
        %p462 = pneg %p149
        %p463 = pneg %p173
        %p464 = pneg %p170
        %p465 = pneg %p194
        %p466 = pneg %p191
        %p467 = pneg %p215
        %p468 = pneg %p212
        %p469 = pneg %p236
        %p470 = pneg %p233
        %p471 = pneg %p257
        %p472 = pneg %p254
        %p473 = pneg %p278
        %p474 = pneg %p275
        %p475 = pneg %p299
        %p476 = pneg %p296
        %p477 = pneg %p320
        %p478 = pneg %p317
        %p479 = pneg %p346
        %p480 = pneg %p343
        %p481 = scmp.lt.s32.totalorder %s29, 1
        %s482 = scalar_select %p481, %s29, 1
        %s483 = smul.addr %s482, 4
        %s484 = smul.addr %s483, 8
        %s485 = scalar_lea.vmem %s13, %s484
        %p486 = scmp.lt.s32.totalorder %s29, 1
        %s487 = scalar_select %p486, %s29, 1
        %s488 = smul.addr %s487, 4
        %s489 = smul.addr %s488, 8
        %s490 = scalar_lea.vmem %s0, %s489
        %p491 = scmp.lt.s32.totalorder %s29, 1
        %s492 = scalar_select %p491, %s29, 1
        %s493 = scalar_lea.vmem %s1, %s492
        %p494 = scmp.lt.s32.totalorder %s29, 1
        %s495 = scalar_select %p494, %s29, 1
        %s496 = smul.addr %s495, 3
        %s497 = smul.addr %s496, 8
        %s498 = scalar_lea.vmem %s2, %s497
        %p499 = scmp.lt.s32.totalorder %s29, 1
        %s500 = scalar_select %p499, %s29, 1
        %s501 = smul.addr %s500, 4
        %s502 = smul.addr %s501, 8
        %s503 = scalar_lea.vmem %s13, %s502
        %p505 = scmp.eq.s32.totalorder %s30, 0
        // Predicated region
        $region77: #{traj_predict_policy_forward.1} parent=71 // pred_check
          %p506 = pneg %p505
        $region78: #{traj_predict_policy_forward.1} parent=71 // pred_check_branch
          %508 = sbr.rel (%p506) target = $region80
        $region79: #{traj_predict_policy_forward.1} parent=71 // pred_region
          %v509 = vlaneseq
          %v510 = vshrl.u32 %v509, 7
          %v511 = vadd.s32 %v510, 8
          %v512 = vadd.s32 %v510, 16
          %v513 = vadd.s32 %v510, 24
          %v514 = vlaneseq
          %v515 = vand.u32 %v514, 127
          %vm516 = vcmp.le.s32.totalorder %v515, %v510
          %vm517 = vcmp.le.s32.totalorder %v515, %v511
          %vm518 = vcmp.le.s32.totalorder %v515, %v512
          %vm519 = vcmp.le.s32.totalorder %v515, %v513
          %v520 = vsel %vm516, 0.0, -1e+30
          %v521 = vsel %vm517, 0.0, -1e+30
          %v522 = vsel %vm518, 0.0, -1e+30
          %v523 = vsel %vm519, 0.0, -1e+30
          %vm524 = vcmask 261120
          %525 = vst.msk [vmem:[#allocation4] sm:$0xff] %vm524, %v520
          %526 = vst.msk [vmem:[#allocation4 + $0x8] sm:$0xff] %vm524, %v521
          %527 = vst.msk [vmem:[#allocation4 + $0x10] sm:$0xff] %vm524, %v522
          %528 = vst.msk [vmem:[#allocation4 + $0x18] sm:$0xff] %vm524, %v523
          %v529 = vsub.s32 %v515, 1
          %vm530 = vcmp.ge.s32.totalorder %v510, %v529
          %vm531 = vcmp.ge.s32.totalorder %v511, %v529
          %vm532 = vcmp.ge.s32.totalorder %v512, %v529
          %vm533 = vcmp.ge.s32.totalorder %v513, %v529
          %vm534 = vcmp.lt.s32.totalorder %v515, 18
          %vm535 = vmand %vm530, %vm534
          %vm536 = vmand %vm531, %vm534
          %vm537 = vmand %vm532, %vm534
          %vm538 = vmand %vm533, %vm534
          %v539 = vsel %vm535, 0.0, -1e+30
          %v540 = vsel %vm536, 0.0, -1e+30
          %v541 = vsel %vm537, 0.0, -1e+30
          %v542 = vsel %vm538, 0.0, -1e+30
          %vm543 = vcmask 195584
          %544 = vst.msk [vmem:[#allocation5] sm:$0xff] %vm543, %v539
          %545 = vst.msk [vmem:[#allocation5 + $0x8] sm:$0xff] %vm543, %v540
          %546 = vst.msk [vmem:[#allocation5 + $0x10] sm:$0xff] %vm543, %v541
          %547 = vst.msk [vmem:[#allocation5 + $0x18] sm:$0xff] %vm543, %v542
          %v548 = vld [vmem:[%s490] sm:$0xff]
          %v549 = vld [vmem:[%s490 + $0x8] sm:$0xff]
          %v550 = vld [vmem:[%s490 + $0x10] sm:$0xff]
          %v551 = vld [vmem:[%s490 + $0x18] sm:$0xff]
          %v552 = vpack.c.bf16 %v549, %v548
          %v553 = vpack.c.bf16 %v551, %v550
          %v554 = vld [vmem:[%s5] sm:$0xf]
          %v555 = vld [vmem:[%s5 + $0x8] sm:$0xf]
          %v556 = vld [vmem:[%s5 + $0x10] sm:$0xf]
          %v557 = vld [vmem:[%s5 + $0x18] sm:$0xf]
          %v558 = vld [vmem:[%s5 + $0x20] sm:$0xf]
          %v559 = vld [vmem:[%s5 + $0x28] sm:$0xf]
          %v560 = vld [vmem:[%s5 + $0x30] sm:$0xf]
          %v561 = vld [vmem:[%s5 + $0x38] sm:$0xf]
          %v562 = vld [vmem:[%s5 + $0x40] sm:$0xf]
          %v563 = vld [vmem:[%s5 + $0x48] sm:$0xf]
          %v564 = vld [vmem:[%s5 + $0x50] sm:$0xf]
          %v565 = vld [vmem:[%s5 + $0x58] sm:$0xf]
          %v566 = vld [vmem:[%s5 + $0x60] sm:$0xf]
          %v567 = vld [vmem:[%s5 + $0x68] sm:$0xf]
          %v568 = vld [vmem:[%s5 + $0x70] sm:$0xf]
          %v569 = vld [vmem:[%s5 + $0x78] sm:$0xf]
          %v570 = vld [vmem:[%s9] sm:$0x1]
          %v572 = vperm.slane %v570, 0
          %v590 = vunpack.c.l.b16 %v554
          %v591 = vunpack.c.l.b16 %v555
          %v592 = vunpack.c.l.b16 %v556
          %v593 = vunpack.c.l.b16 %v557
          %v594 = vunpack.c.l.b16 %v558
          %v595 = vunpack.c.l.b16 %v559
          %v596 = vunpack.c.l.b16 %v560
          %v597 = vunpack.c.l.b16 %v561
          %v598 = vunpack.c.l.b16 %v562
          %v599 = vunpack.c.l.b16 %v563
          %v600 = vunpack.c.l.b16 %v564
          %v601 = vunpack.c.l.b16 %v565
          %v602 = vunpack.c.l.b16 %v566
          %v603 = vunpack.c.l.b16 %v567
          %v604 = vunpack.c.l.b16 %v568
          %v605 = vunpack.c.l.b16 %v569
          %v606 = vpack.c.b16 %v591, %v590
          %v607 = vpack.c.b16 %v593, %v592
          %v608 = vpack.c.b16 %v595, %v594
          %v609 = vpack.c.b16 %v597, %v596
          %v610 = vpack.c.b16 %v599, %v598
          %v611 = vpack.c.b16 %v601, %v600
          %v612 = vpack.c.b16 %v603, %v602
          %v613 = vpack.c.b16 %v605, %v604
          %622 = vmatpush.bf16.msra.mxu0 %v613
          %623 = vmatpush.bf16.msra.mxu0 %v612
          %624 = vmatpush.bf16.msra.mxu0 %v611
          %625 = vmatpush.bf16.msra.mxu0 %v610
          %626 = vmatpush.bf16.msra.mxu0 %v609
          %627 = vmatpush.bf16.msra.mxu0 %v608
          %628 = vmatpush.bf16.msra.mxu0 %v607
          %629 = vmatpush.bf16.msra.mxu0 %v606
          %630 = vmatmul.bf16.gmra.mxu0 %v552
          %v631 = vpop.f32.mrf.mxu0
          %v632 = vadd.f32 %v572, %v631
          %v633 = vpop.f32.mrf.mxu0
          %v634 = vadd.f32 %v572, %v633
          %635 = vmatmul.bf16.gmra.mxu0 %v553
          %v636 = vpop.f32.mrf.mxu0
          %v637 = vadd.f32 %v572, %v636
          %v638 = vpop.f32.mrf.mxu0
          %v639 = vadd.f32 %v572, %v638
          %640 = vdwg.mxu0
          %v641 = vld [vmem:[%s3] sm:$0xff]
          %v642 = vld [vmem:[%s3 + $0x8] sm:$0xff]
          %v643 = vld [vmem:[%s3 + $0x10] sm:$0xff]
          %v644 = vld [vmem:[%s3 + $0x18] sm:$0xff]
          %v645 = vadd.f32 %v632, %v641
          %v646 = vadd.f32 %v634, %v642
          %v647 = vadd.f32 %v637, %v643
          %v648 = vadd.f32 %v639, %v644
          %649 = vst [vmem:[#allocation2] sm:$0xff] %v645
          %650 = vst [vmem:[#allocation2 + $0x8] sm:$0xff] %v646
          %651 = vst [vmem:[#allocation2 + $0x10] sm:$0xff] %v647
          %652 = vst [vmem:[#allocation2 + $0x18] sm:$0xff] %v648
          %v653 = vld [vmem:[%s498] sm:$0xff]
          %v654 = vld [vmem:[%s498 + $0x8] sm:$0xff]
          %v655 = vld [vmem:[%s498 + $0x10] sm:$0xff]
          %v656 = vpack.c.bf16 %v654, %v653
          %v657 = vpack.c.bf16 %v655, %v655
          %v658 = vld [vmem:[%s5 + $0x4] sm:$0xf]
          %v659 = vld [vmem:[%s5 + $0xc] sm:$0xf]
          %v660 = vld [vmem:[%s5 + $0x14] sm:$0xf]
          %v661 = vld [vmem:[%s5 + $0x1c] sm:$0xf]
          %v662 = vld [vmem:[%s5 + $0x24] sm:$0xf]
          %v663 = vld [vmem:[%s5 + $0x2c] sm:$0xf]
          %v664 = vld [vmem:[%s5 + $0x34] sm:$0xf]
          %v665 = vld [vmem:[%s5 + $0x3c] sm:$0xf]
          %v666 = vld [vmem:[%s5 + $0x44] sm:$0xf]
          %v667 = vld [vmem:[%s5 + $0x4c] sm:$0xf]
          %v668 = vld [vmem:[%s5 + $0x54] sm:$0xf]
          %v669 = vld [vmem:[%s5 + $0x5c] sm:$0xf]
          %v670 = vld [vmem:[%s5 + $0x64] sm:$0xf]
          %v671 = vld [vmem:[%s5 + $0x6c] sm:$0xf]
          %v672 = vld [vmem:[%s5 + $0x74] sm:$0xf]
          %v673 = vld [vmem:[%s5 + $0x7c] sm:$0xf]
          %v674 = vld [vmem:[%s9 + $0x1] sm:$0x1]
          %v676 = vperm.slane %v674, 0
          %v694 = vunpack.c.l.b16 %v658
          %v695 = vunpack.c.l.b16 %v659
          %v696 = vunpack.c.l.b16 %v660
          %v697 = vunpack.c.l.b16 %v661
          %v698 = vunpack.c.l.b16 %v662
          %v699 = vunpack.c.l.b16 %v663
          %v700 = vunpack.c.l.b16 %v664
          %v701 = vunpack.c.l.b16 %v665
          %v702 = vunpack.c.l.b16 %v666
          %v703 = vunpack.c.l.b16 %v667
          %v704 = vunpack.c.l.b16 %v668
          %v705 = vunpack.c.l.b16 %v669
          %v706 = vunpack.c.l.b16 %v670
          %v707 = vunpack.c.l.b16 %v671
          %v708 = vunpack.c.l.b16 %v672
          %v709 = vunpack.c.l.b16 %v673
          %v710 = vpack.c.b16 %v695, %v694
          %v711 = vpack.c.b16 %v697, %v696
          %v712 = vpack.c.b16 %v699, %v698
          %v713 = vpack.c.b16 %v701, %v700
          %v714 = vpack.c.b16 %v703, %v702
          %v715 = vpack.c.b16 %v705, %v704
          %v716 = vpack.c.b16 %v707, %v706
          %v717 = vpack.c.b16 %v709, %v708
          %726 = vmatpush.bf16.msra.mxu0 %v717
          %727 = vmatpush.bf16.msra.mxu0 %v716
          %728 = vmatpush.bf16.msra.mxu0 %v715
          %729 = vmatpush.bf16.msra.mxu0 %v714
          %730 = vmatpush.bf16.msra.mxu0 %v713
          %731 = vmatpush.bf16.msra.mxu0 %v712
          %732 = vmatpush.bf16.msra.mxu0 %v711
          %733 = vmatpush.bf16.msra.mxu0 %v710
          %734 = vmatmul.bf16.gmra.mxu0 %v656
          %v735 = vpop.f32.mrf.mxu0
          %v736 = vadd.f32 %v676, %v735
          %v737 = vpop.f32.mrf.mxu0
          %v738 = vadd.f32 %v676, %v737
          %739 = vmatmul.bf16.gmra.mxu0 %v657
          %v740 = vpop.f32.mrf.mxu0
          %v741 = vadd.f32 %v676, %v740
          %v742 = vpop.f32.mrf.mxu0
          %743 = vdwg.mxu0
          %vm744 = vcmp.eq.s32.totalorder %v510, 0
          %vm745 = vcmp.eq.s32.totalorder %v511, 0
          %vm746 = vcmp.eq.s32.totalorder %v512, 0
          %v747 = vld [vmem:[%s493] sm:$0x1]
          %v749 = vperm.slane %v747, 0
          %v751 = vsel %vm744, %v749, %v736
          %v752 = vsel %vm745, %v749, %v738
          %v753 = vsel %vm746, %v749, %v741
          %v754 = vld [vmem:[%s4] sm:$0xff]
          %v755 = vld [vmem:[%s4 + $0x8] sm:$0xff]
          %v756 = vld [vmem:[%s4 + $0x10] sm:$0xff]
          %v757 = vadd.f32 %v751, %v754
          %v758 = vadd.f32 %v752, %v755
          %v759 = vadd.f32 %v753, %v756
          %v760 = vpack.c.bf16 %v758, %v757
          %v761 = vpack.c.bf16 %v759, %v759
          %v762 = vld [vmem:[%s6] sm:$0xff]
          %v763 = vld [vmem:[%s6 + $0x8] sm:$0xff]
          %v764 = vld [vmem:[%s6 + $0x10] sm:$0xff]
          %v765 = vld [vmem:[%s6 + $0x18] sm:$0xff]
          %v766 = vld [vmem:[%s6 + $0x20] sm:$0xff]
          %v767 = vld [vmem:[%s6 + $0x28] sm:$0xff]
          %v768 = vld [vmem:[%s6 + $0x30] sm:$0xff]
          %v769 = vld [vmem:[%s6 + $0x38] sm:$0xff]
          %v770 = vld [vmem:[%s6 + $0x40] sm:$0xff]
          %v771 = vld [vmem:[%s6 + $0x48] sm:$0xff]
          %v772 = vld [vmem:[%s6 + $0x50] sm:$0xff]
          %v773 = vld [vmem:[%s6 + $0x58] sm:$0xff]
          %v774 = vld [vmem:[%s6 + $0x60] sm:$0xff]
          %v775 = vld [vmem:[%s6 + $0x68] sm:$0xff]
          %v776 = vld [vmem:[%s6 + $0x70] sm:$0xff]
          %v777 = vld [vmem:[%s6 + $0x78] sm:$0xff]
          %v778 = vld [vmem:[%s6 + $0x80] sm:$0xff]
          %v779 = vld [vmem:[%s6 + $0x88] sm:$0xff]
          %v780 = vld [vmem:[%s6 + $0x90] sm:$0xff]
          %v781 = vld [vmem:[%s6 + $0x98] sm:$0xff]
          %v782 = vld [vmem:[%s6 + $0xa0] sm:$0xff]
          %v783 = vld [vmem:[%s6 + $0xa8] sm:$0xff]
          %v784 = vld [vmem:[%s6 + $0xb0] sm:$0xff]
          %v785 = vld [vmem:[%s6 + $0xb8] sm:$0xff]
          %v786 = vld [vmem:[%s6 + $0xc0] sm:$0xff]
          %v787 = vld [vmem:[%s6 + $0xc8] sm:$0xff]
          %v788 = vld [vmem:[%s6 + $0xd0] sm:$0xff]
          %v789 = vld [vmem:[%s6 + $0xd8] sm:$0xff]
          %v790 = vld [vmem:[%s6 + $0xe0] sm:$0xff]
          %v791 = vld [vmem:[%s6 + $0xe8] sm:$0xff]
          %v792 = vld [vmem:[%s6 + $0xf0] sm:$0xff]
          %v793 = vld [vmem:[%s6 + $0xf8] sm:$0xff]
          %v794 = vld [vmem:[%s9 + $0x2] sm:$0xf]
          %v796 = vperm.slane %v794, 0
          %v797 = vperm.slane %v794, 1
          %v798 = vperm.slane %v794, 2
          %v799 = vperm.slane %v794, 3
          %v836 = vunpack.c.l.b16 %v762
          %v837 = vunpack.c.h.b16 %v762
          %v838 = vunpack.c.l.b16 %v763
          %v839 = vunpack.c.h.b16 %v763
          %v840 = vunpack.c.l.b16 %v764
          %v841 = vunpack.c.h.b16 %v764
          %v842 = vunpack.c.l.b16 %v765
          %v843 = vunpack.c.h.b16 %v765
          %v844 = vunpack.c.l.b16 %v766
          %v845 = vunpack.c.h.b16 %v766
          %v846 = vunpack.c.l.b16 %v767
          %v847 = vunpack.c.h.b16 %v767
          %v848 = vunpack.c.l.b16 %v768
          %v849 = vunpack.c.h.b16 %v768
          %v850 = vunpack.c.l.b16 %v769
          %v851 = vunpack.c.h.b16 %v769
          %v852 = vunpack.c.l.b16 %v770
          %v853 = vunpack.c.h.b16 %v770
          %v854 = vunpack.c.l.b16 %v771
          %v855 = vunpack.c.h.b16 %v771
          %v856 = vunpack.c.l.b16 %v772
          %v857 = vunpack.c.h.b16 %v772
          %v858 = vunpack.c.l.b16 %v773
          %v859 = vunpack.c.h.b16 %v773
          %v860 = vunpack.c.l.b16 %v774
          %v861 = vunpack.c.h.b16 %v774
          %v862 = vunpack.c.l.b16 %v775
          %v863 = vunpack.c.h.b16 %v775
          %v864 = vunpack.c.l.b16 %v776
          %v865 = vunpack.c.h.b16 %v776
          %v866 = vunpack.c.l.b16 %v777
          %v867 = vunpack.c.h.b16 %v777
          %v868 = vunpack.c.l.b16 %v778
          %v869 = vunpack.c.h.b16 %v778
          %v870 = vunpack.c.l.b16 %v779
          %v871 = vunpack.c.h.b16 %v779
          %v872 = vunpack.c.l.b16 %v780
          %v873 = vunpack.c.h.b16 %v780
          %v874 = vunpack.c.l.b16 %v781
          %v875 = vunpack.c.h.b16 %v781
          %v876 = vunpack.c.l.b16 %v782
          %v877 = vunpack.c.h.b16 %v782
          %v878 = vunpack.c.l.b16 %v783
          %v879 = vunpack.c.h.b16 %v783
          %v880 = vunpack.c.l.b16 %v784
          %v881 = vunpack.c.h.b16 %v784
          %v882 = vunpack.c.l.b16 %v785
          %v883 = vunpack.c.h.b16 %v785
          %v884 = vunpack.c.l.b16 %v786
          %v885 = vunpack.c.h.b16 %v786
          %v886 = vunpack.c.l.b16 %v787
          %v887 = vunpack.c.h.b16 %v787
          %v888 = vunpack.c.l.b16 %v788
          %v889 = vunpack.c.h.b16 %v788
          %v890 = vunpack.c.l.b16 %v789
          %v891 = vunpack.c.h.b16 %v789
          %v892 = vunpack.c.l.b16 %v790
          %v893 = vunpack.c.h.b16 %v790
          %v894 = vunpack.c.l.b16 %v791
          %v895 = vunpack.c.h.b16 %v791
          %v896 = vunpack.c.l.b16 %v792
          %v897 = vunpack.c.h.b16 %v792
          %v898 = vunpack.c.l.b16 %v793
          %v899 = vunpack.c.h.b16 %v793
          %v900 = vpack.c.b16 %v840, %v836
          %v901 = vpack.c.b16 %v841, %v837
          %v902 = vpack.c.b16 %v842, %v838
          %v903 = vpack.c.b16 %v843, %v839
          %v904 = vpack.c.b16 %v848, %v844
          %v905 = vpack.c.b16 %v849, %v845
          %v906 = vpack.c.b16 %v850, %v846
          %v907 = vpack.c.b16 %v851, %v847
          %v908 = vpack.c.b16 %v856, %v852
          %v909 = vpack.c.b16 %v857, %v853
          %v910 = vpack.c.b16 %v858, %v854
          %v911 = vpack.c.b16 %v859, %v855
          %v912 = vpack.c.b16 %v864, %v860
          %v913 = vpack.c.b16 %v865, %v861
          %v914 = vpack.c.b16 %v866, %v862
          %v915 = vpack.c.b16 %v867, %v863
          %v916 = vpack.c.b16 %v872, %v868
          %v917 = vpack.c.b16 %v873, %v869
          %v918 = vpack.c.b16 %v874, %v870
          %v919 = vpack.c.b16 %v875, %v871
          %v920 = vpack.c.b16 %v880, %v876
          %v921 = vpack.c.b16 %v881, %v877
          %v922 = vpack.c.b16 %v882, %v878
          %v923 = vpack.c.b16 %v883, %v879
          %v924 = vpack.c.b16 %v888, %v884
          %v925 = vpack.c.b16 %v889, %v885
          %v926 = vpack.c.b16 %v890, %v886
          %v927 = vpack.c.b16 %v891, %v887
          %v928 = vpack.c.b16 %v896, %v892
          %v929 = vpack.c.b16 %v897, %v893
          %v930 = vpack.c.b16 %v898, %v894
          %v931 = vpack.c.b16 %v899, %v895
          %964 = vmatpush.bf16.msra.mxu0 %v928
          %965 = vmatpush.bf16.msra.mxu0 %v924
          %966 = vmatpush.bf16.msra.mxu0 %v920
          %967 = vmatpush.bf16.msra.mxu0 %v916
          %968 = vmatpush.bf16.msra.mxu0 %v912
          %969 = vmatpush.bf16.msra.mxu0 %v908
          %970 = vmatpush.bf16.msra.mxu0 %v904
          %971 = vmatpush.bf16.msra.mxu0 %v900
          %972 = vmatmul.bf16.gmra.mxu0 %v760
          %v973 = vpop.f32.mrf.mxu0
          %v974 = vadd.f32 %v796, %v973
          %v975 = vpop.f32.mrf.mxu0
          %v976 = vadd.f32 %v796, %v975
          %977 = vmatmul.bf16.gmra.mxu0 %v761
          %v978 = vpop.f32.mrf.mxu0
          %v979 = vadd.f32 %v796, %v978
          %v980 = vpop.f32.mrf.mxu0
          %981 = vdwg.mxu0
          %982 = vmatpush.bf16.msra.mxu0 %v929
          %983 = vmatpush.bf16.msra.mxu0 %v925
          %984 = vmatpush.bf16.msra.mxu0 %v921
          %985 = vmatpush.bf16.msra.mxu0 %v917
          %986 = vmatpush.bf16.msra.mxu0 %v913
          %987 = vmatpush.bf16.msra.mxu0 %v909
          %988 = vmatpush.bf16.msra.mxu0 %v905
          %989 = vmatpush.bf16.msra.mxu0 %v901
          %990 = vmatmul.bf16.gmra.mxu0 %v760
          %v991 = vpop.f32.mrf.mxu0
          %v992 = vadd.f32 %v797, %v991
          %v993 = vpop.f32.mrf.mxu0
          %v994 = vadd.f32 %v797, %v993
          %995 = vmatmul.bf16.gmra.mxu0 %v761
          %v996 = vpop.f32.mrf.mxu0
          %v997 = vadd.f32 %v797, %v996
          %v998 = vpop.f32.mrf.mxu0
          %999 = vdwg.mxu0
          %1000 = vmatpush.bf16.msra.mxu0 %v930
          %1001 = vmatpush.bf16.msra.mxu0 %v926
          %1002 = vmatpush.bf16.msra.mxu0 %v922
          %1003 = vmatpush.bf16.msra.mxu0 %v918
          %1004 = vmatpush.bf16.msra.mxu0 %v914
          %1005 = vmatpush.bf16.msra.mxu0 %v910
          %1006 = vmatpush.bf16.msra.mxu0 %v906
          %1007 = vmatpush.bf16.msra.mxu0 %v902
          %1008 = vmatmul.bf16.gmra.mxu0 %v760
          %v1009 = vpop.f32.mrf.mxu0
          %v1010 = vadd.f32 %v798, %v1009
          %v1011 = vpop.f32.mrf.mxu0
          %v1012 = vadd.f32 %v798, %v1011
          %1013 = vmatmul.bf16.gmra.mxu0 %v761
          %v1014 = vpop.f32.mrf.mxu0
          %v1015 = vadd.f32 %v798, %v1014
          %v1016 = vpop.f32.mrf.mxu0
          %1017 = vdwg.mxu0
          %1018 = vmatpush.bf16.msra.mxu0 %v931
          %1019 = vmatpush.bf16.msra.mxu0 %v927
          %1020 = vmatpush.bf16.msra.mxu0 %v923
          %1021 = vmatpush.bf16.msra.mxu0 %v919
          %1022 = vmatpush.bf16.msra.mxu0 %v915
          %1023 = vmatpush.bf16.msra.mxu0 %v911
          %1024 = vmatpush.bf16.msra.mxu0 %v907
          %1025 = vmatpush.bf16.msra.mxu0 %v903
          %1026 = vmatmul.bf16.gmra.mxu0 %v760
          %v1027 = vpop.f32.mrf.mxu0
          %v1028 = vadd.f32 %v799, %v1027
          %v1029 = vpop.f32.mrf.mxu0
          %v1030 = vadd.f32 %v799, %v1029
          %1031 = vmatmul.bf16.gmra.mxu0 %v761
          %v1032 = vpop.f32.mrf.mxu0
          %v1033 = vadd.f32 %v799, %v1032
          %v1034 = vpop.f32.mrf.mxu0
          %1035 = vdwg.mxu0
          %v1036 = vmax.f32 %v974, 0.0
          %v1037 = vmax.f32 %v992, 0.0
          %v1038 = vmax.f32 %v1010, 0.0
          %v1039 = vmax.f32 %v1028, 0.0
          %v1040 = vmax.f32 %v976, 0.0
          %v1041 = vmax.f32 %v994, 0.0
          %v1042 = vmax.f32 %v1012, 0.0
          %v1043 = vmax.f32 %v1030, 0.0
          %v1044 = vmax.f32 %v979, 0.0
          %v1045 = vmax.f32 %v997, 0.0
          %v1046 = vmax.f32 %v1015, 0.0
          %v1047 = vmax.f32 %v1033, 0.0
          %v1048 = vand.u32 2147483647, %v974
          %v1049 = vand.u32 2147483647, %v992
          %v1050 = vand.u32 2147483647, %v1010
          %v1051 = vand.u32 2147483647, %v1028
          %v1052 = vand.u32 2147483647, %v976
          %v1053 = vand.u32 2147483647, %v994
          %v1054 = vand.u32 2147483647, %v1012
          %v1055 = vand.u32 2147483647, %v1030
          %v1056 = vand.u32 2147483647, %v979
          %v1057 = vand.u32 2147483647, %v997
          %v1058 = vand.u32 2147483647, %v1015
          %v1059 = vand.u32 2147483647, %v1033
          %v1060 = vsub.f32 0.0, %v1048
          %v1061 = vsub.f32 0.0, %v1049
          %v1062 = vsub.f32 0.0, %v1050
          %v1063 = vsub.f32 0.0, %v1051
          %v1064 = vsub.f32 0.0, %v1052
          %v1065 = vsub.f32 0.0, %v1053
          %v1066 = vsub.f32 0.0, %v1054
          %v1067 = vsub.f32 0.0, %v1055
          %v1068 = vsub.f32 0.0, %v1056
          %v1069 = vsub.f32 0.0, %v1057
          %v1070 = vsub.f32 0.0, %v1058
          %v1071 = vsub.f32 0.0, %v1059
          %v1072 = vmul.f32 %v1060, 1.442695
          %v1073 = vpow.pop %v1072
          %v1074 = vmul.f32 %v1061, 1.442695
          %v1075 = vpow.pop %v1074
          %v1076 = vmul.f32 %v1062, 1.442695
          %v1077 = vpow.pop %v1076
          %v1078 = vmul.f32 %v1063, 1.442695
          %v1079 = vpow.pop %v1078
          %v1080 = vmul.f32 %v1064, 1.442695
          %v1081 = vpow.pop %v1080
          %v1082 = vmul.f32 %v1065, 1.442695
          %v1083 = vpow.pop %v1082
          %v1084 = vmul.f32 %v1066, 1.442695
          %v1085 = vpow.pop %v1084
          %v1086 = vmul.f32 %v1067, 1.442695
          %v1087 = vpow.pop %v1086
          %v1088 = vmul.f32 %v1068, 1.442695
          %v1089 = vpow.pop %v1088
          %v1090 = vmul.f32 %v1069, 1.442695
          %v1091 = vpow.pop %v1090
          %v1092 = vmul.f32 %v1070, 1.442695
          %v1093 = vpow.pop %v1092
          %v1094 = vmul.f32 %v1071, 1.442695
          %v1095 = vpow.pop %v1094
          %v1096 = vadd.f32 %v1073, 1.0
          %v1097 = vadd.f32 %v1075, 1.0
          %v1098 = vadd.f32 %v1077, 1.0
          %v1099 = vadd.f32 %v1079, 1.0
          %v1100 = vadd.f32 %v1081, 1.0
          %v1101 = vadd.f32 %v1083, 1.0
          %v1102 = vadd.f32 %v1085, 1.0
          %v1103 = vadd.f32 %v1087, 1.0
          %v1104 = vadd.f32 %v1089, 1.0
          %v1105 = vadd.f32 %v1091, 1.0
          %v1106 = vadd.f32 %v1093, 1.0
          %v1107 = vadd.f32 %v1095, 1.0
          %v1108 = vlog2.pop %v1096
          %v1109 = vmul.f32 %v1108, 0.6931472
          %v1110 = vlog2.pop %v1097
          %v1111 = vmul.f32 %v1110, 0.6931472
          %v1112 = vlog2.pop %v1098
          %v1113 = vmul.f32 %v1112, 0.6931472
          %v1114 = vlog2.pop %v1099
          %v1115 = vmul.f32 %v1114, 0.6931472
          %v1116 = vlog2.pop %v1100
          %v1117 = vmul.f32 %v1116, 0.6931472
          %v1118 = vlog2.pop %v1101
          %v1119 = vmul.f32 %v1118, 0.6931472
          %v1120 = vlog2.pop %v1102
          %v1121 = vmul.f32 %v1120, 0.6931472
          %v1122 = vlog2.pop %v1103
          %v1123 = vmul.f32 %v1122, 0.6931472
          %v1124 = vlog2.pop %v1104
          %v1125 = vmul.f32 %v1124, 0.6931472
          %v1126 = vlog2.pop %v1105
          %v1127 = vmul.f32 %v1126, 0.6931472
          %v1128 = vlog2.pop %v1106
          %v1129 = vmul.f32 %v1128, 0.6931472
          %v1130 = vlog2.pop %v1107
          %v1131 = vmul.f32 %v1130, 0.6931472
          %v1132 = vadd.f32 %v1036, %v1109
          %v1133 = vadd.f32 %v1037, %v1111
          %v1134 = vadd.f32 %v1038, %v1113
          %v1135 = vadd.f32 %v1039, %v1115
          %v1136 = vadd.f32 %v1040, %v1117
          %v1137 = vadd.f32 %v1041, %v1119
          %v1138 = vadd.f32 %v1042, %v1121
          %v1139 = vadd.f32 %v1043, %v1123
          %v1140 = vadd.f32 %v1044, %v1125
          %v1141 = vadd.f32 %v1045, %v1127
          %v1142 = vadd.f32 %v1046, %v1129
          %v1143 = vadd.f32 %v1047, %v1131
          %v1144 = vtanh.pop %v1132
          %v1145 = vtanh.pop %v1133
          %v1146 = vtanh.pop %v1134
          %v1147 = vtanh.pop %v1135
          %v1148 = vtanh.pop %v1136
          %v1149 = vtanh.pop %v1137
          %v1150 = vtanh.pop %v1138
          %v1151 = vtanh.pop %v1139
          %v1152 = vtanh.pop %v1140
          %v1153 = vtanh.pop %v1141
          %v1154 = vtanh.pop %v1142
          %v1155 = vtanh.pop %v1143
          %v1156 = vmul.f32 %v974, %v1144
          %v1157 = vmul.f32 %v992, %v1145
          %v1158 = vmul.f32 %v1010, %v1146
          %v1159 = vmul.f32 %v1028, %v1147
          %v1160 = vmul.f32 %v976, %v1148
          %v1161 = vmul.f32 %v994, %v1149
          %v1162 = vmul.f32 %v1012, %v1150
          %v1163 = vmul.f32 %v1030, %v1151
          %v1164 = vmul.f32 %v979, %v1152
          %v1165 = vmul.f32 %v997, %v1153
          %v1166 = vmul.f32 %v1015, %v1154
          %v1167 = vmul.f32 %v1033, %v1155
          %v1168 = vpack.c.bf16 %v1160, %v1156
          %v1169 = vpack.c.bf16 %v1161, %v1157
          %v1170 = vpack.c.bf16 %v1162, %v1158
          %v1171 = vpack.c.bf16 %v1163, %v1159
          %v1172 = vpack.c.bf16 %v1164, %v1164
          %v1173 = vpack.c.bf16 %v1165, %v1165
          %v1174 = vpack.c.bf16 %v1166, %v1166
          %v1175 = vpack.c.bf16 %v1167, %v1167
          %v1176 = vld [vmem:[%s7] sm:$0xf]
          %v1177 = vld [vmem:[%s7 + $0x4] sm:$0xf]
          %v1178 = vld [vmem:[%s7 + $0x8] sm:$0xf]
          %v1179 = vld [vmem:[%s7 + $0xc] sm:$0xf]
          %v1180 = vld [vmem:[%s7 + $0x10] sm:$0xf]
          %v1181 = vld [vmem:[%s7 + $0x14] sm:$0xf]
          %v1182 = vld [vmem:[%s7 + $0x18] sm:$0xf]
          %v1183 = vld [vmem:[%s7 + $0x1c] sm:$0xf]
          %v1184 = vld [vmem:[%s7 + $0x20] sm:$0xf]
          %v1185 = vld [vmem:[%s7 + $0x24] sm:$0xf]
          %v1186 = vld [vmem:[%s7 + $0x28] sm:$0xf]
          %v1187 = vld [vmem:[%s7 + $0x2c] sm:$0xf]
          %v1188 = vld [vmem:[%s7 + $0x30] sm:$0xf]
          %v1189 = vld [vmem:[%s7 + $0x34] sm:$0xf]
          %v1190 = vld [vmem:[%s7 + $0x38] sm:$0xf]
          %v1191 = vld [vmem:[%s7 + $0x3c] sm:$0xf]
          %v1192 = vld [vmem:[%s7 + $0x40] sm:$0xf]
          %v1193 = vld [vmem:[%s7 + $0x44] sm:$0xf]
          %v1194 = vld [vmem:[%s7 + $0x48] sm:$0xf]
          %v1195 = vld [vmem:[%s7 + $0x4c] sm:$0xf]
          %v1196 = vld [vmem:[%s7 + $0x50] sm:$0xf]
          %v1197 = vld [vmem:[%s7 + $0x54] sm:$0xf]
          %v1198 = vld [vmem:[%s7 + $0x58] sm:$0xf]
          %v1199 = vld [vmem:[%s7 + $0x5c] sm:$0xf]
          %v1200 = vld [vmem:[%s7 + $0x60] sm:$0xf]
          %v1201 = vld [vmem:[%s7 + $0x64] sm:$0xf]
          %v1202 = vld [vmem:[%s7 + $0x68] sm:$0xf]
          %v1203 = vld [vmem:[%s7 + $0x6c] sm:$0xf]
          %v1204 = vld [vmem:[%s7 + $0x70] sm:$0xf]
          %v1205 = vld [vmem:[%s7 + $0x74] sm:$0xf]
          %v1206 = vld [vmem:[%s7 + $0x78] sm:$0xf]
          %v1207 = vld [vmem:[%s7 + $0x7c] sm:$0xf]
          %v1208 = vld [vmem:[%s7 + $0x80] sm:$0xf]
          %v1209 = vld [vmem:[%s7 + $0x84] sm:$0xf]
          %v1210 = vld [vmem:[%s7 + $0x88] sm:$0xf]
          %v1211 = vld [vmem:[%s7 + $0x8c] sm:$0xf]
          %v1212 = vld [vmem:[%s7 + $0x90] sm:$0xf]
          %v1213 = vld [vmem:[%s7 + $0x94] sm:$0xf]
          %v1214 = vld [vmem:[%s7 + $0x98] sm:$0xf]
          %v1215 = vld [vmem:[%s7 + $0x9c] sm:$0xf]
          %v1216 = vld [vmem:[%s7 + $0xa0] sm:$0xf]
          %v1217 = vld [vmem:[%s7 + $0xa4] sm:$0xf]
          %v1218 = vld [vmem:[%s7 + $0xa8] sm:$0xf]
          %v1219 = vld [vmem:[%s7 + $0xac] sm:$0xf]
          %v1220 = vld [vmem:[%s7 + $0xb0] sm:$0xf]
          %v1221 = vld [vmem:[%s7 + $0xb4] sm:$0xf]
          %v1222 = vld [vmem:[%s7 + $0xb8] sm:$0xf]
          %v1223 = vld [vmem:[%s7 + $0xbc] sm:$0xf]
          %v1224 = vld [vmem:[%s7 + $0xc0] sm:$0xf]
          %v1225 = vld [vmem:[%s7 + $0xc4] sm:$0xf]
          %v1226 = vld [vmem:[%s7 + $0xc8] sm:$0xf]
          %v1227 = vld [vmem:[%s7 + $0xcc] sm:$0xf]
          %v1228 = vld [vmem:[%s7 + $0xd0] sm:$0xf]
          %v1229 = vld [vmem:[%s7 + $0xd4] sm:$0xf]
          %v1230 = vld [vmem:[%s7 + $0xd8] sm:$0xf]
          %v1231 = vld [vmem:[%s7 + $0xdc] sm:$0xf]
          %v1232 = vld [vmem:[%s7 + $0xe0] sm:$0xf]
          %v1233 = vld [vmem:[%s7 + $0xe4] sm:$0xf]
          %v1234 = vld [vmem:[%s7 + $0xe8] sm:$0xf]
          %v1235 = vld [vmem:[%s7 + $0xec] sm:$0xf]
          %v1236 = vld [vmem:[%s7 + $0xf0] sm:$0xf]
          %v1237 = vld [vmem:[%s7 + $0xf4] sm:$0xf]
          %v1238 = vld [vmem:[%s7 + $0xf8] sm:$0xf]
          %v1239 = vld [vmem:[%s7 + $0xfc] sm:$0xf]
          %v1240 = vld [vmem:[%s9 + $0x6] sm:$0x1]
          %v1242 = vperm.slane %v1240, 0
          %v1308 = vunpack.c.l.b16 %v1176
          %v1309 = vunpack.c.l.b16 %v1177
          %v1310 = vunpack.c.l.b16 %v1178
          %v1311 = vunpack.c.l.b16 %v1179
          %v1312 = vunpack.c.l.b16 %v1180
          %v1313 = vunpack.c.l.b16 %v1181
          %v1314 = vunpack.c.l.b16 %v1182
          %v1315 = vunpack.c.l.b16 %v1183
          %v1316 = vunpack.c.l.b16 %v1184
          %v1317 = vunpack.c.l.b16 %v1185
          %v1318 = vunpack.c.l.b16 %v1186
          %v1319 = vunpack.c.l.b16 %v1187
          %v1320 = vunpack.c.l.b16 %v1188
          %v1321 = vunpack.c.l.b16 %v1189
          %v1322 = vunpack.c.l.b16 %v1190
          %v1323 = vunpack.c.l.b16 %v1191
          %v1324 = vunpack.c.l.b16 %v1192
          %v1325 = vunpack.c.l.b16 %v1193
          %v1326 = vunpack.c.l.b16 %v1194
          %v1327 = vunpack.c.l.b16 %v1195
          %v1328 = vunpack.c.l.b16 %v1196
          %v1329 = vunpack.c.l.b16 %v1197
          %v1330 = vunpack.c.l.b16 %v1198
          %v1331 = vunpack.c.l.b16 %v1199
          %v1332 = vunpack.c.l.b16 %v1200
          %v1333 = vunpack.c.l.b16 %v1201
          %v1334 = vunpack.c.l.b16 %v1202
          %v1335 = vunpack.c.l.b16 %v1203
          %v1336 = vunpack.c.l.b16 %v1204
          %v1337 = vunpack.c.l.b16 %v1205
          %v1338 = vunpack.c.l.b16 %v1206
          %v1339 = vunpack.c.l.b16 %v1207
          %v1340 = vunpack.c.l.b16 %v1208
          %v1341 = vunpack.c.l.b16 %v1209
          %v1342 = vunpack.c.l.b16 %v1210
          %v1343 = vunpack.c.l.b16 %v1211
          %v1344 = vunpack.c.l.b16 %v1212
          %v1345 = vunpack.c.l.b16 %v1213
          %v1346 = vunpack.c.l.b16 %v1214
          %v1347 = vunpack.c.l.b16 %v1215
          %v1348 = vunpack.c.l.b16 %v1216
          %v1349 = vunpack.c.l.b16 %v1217
          %v1350 = vunpack.c.l.b16 %v1218
          %v1351 = vunpack.c.l.b16 %v1219
          %v1352 = vunpack.c.l.b16 %v1220
          %v1353 = vunpack.c.l.b16 %v1221
          %v1354 = vunpack.c.l.b16 %v1222
          %v1355 = vunpack.c.l.b16 %v1223
          %v1356 = vunpack.c.l.b16 %v1224
          %v1357 = vunpack.c.l.b16 %v1225
          %v1358 = vunpack.c.l.b16 %v1226
          %v1359 = vunpack.c.l.b16 %v1227
          %v1360 = vunpack.c.l.b16 %v1228
          %v1361 = vunpack.c.l.b16 %v1229
          %v1362 = vunpack.c.l.b16 %v1230
          %v1363 = vunpack.c.l.b16 %v1231
          %v1364 = vunpack.c.l.b16 %v1232
          %v1365 = vunpack.c.l.b16 %v1233
          %v1366 = vunpack.c.l.b16 %v1234
          %v1367 = vunpack.c.l.b16 %v1235
          %v1368 = vunpack.c.l.b16 %v1236
          %v1369 = vunpack.c.l.b16 %v1237
          %v1370 = vunpack.c.l.b16 %v1238
          %v1371 = vunpack.c.l.b16 %v1239
          %v1372 = vpack.c.b16 %v1309, %v1308
          %v1373 = vpack.c.b16 %v1311, %v1310
          %v1374 = vpack.c.b16 %v1313, %v1312
          %v1375 = vpack.c.b16 %v1315, %v1314
          %v1376 = vpack.c.b16 %v1317, %v1316
          %v1377 = vpack.c.b16 %v1319, %v1318
          %v1378 = vpack.c.b16 %v1321, %v1320
          %v1379 = vpack.c.b16 %v1323, %v1322
          %v1380 = vpack.c.b16 %v1325, %v1324
          %v1381 = vpack.c.b16 %v1327, %v1326
          %v1382 = vpack.c.b16 %v1329, %v1328
          %v1383 = vpack.c.b16 %v1331, %v1330
          %v1384 = vpack.c.b16 %v1333, %v1332
          %v1385 = vpack.c.b16 %v1335, %v1334
          %v1386 = vpack.c.b16 %v1337, %v1336
          %v1387 = vpack.c.b16 %v1339, %v1338
          %v1388 = vpack.c.b16 %v1341, %v1340
          %v1389 = vpack.c.b16 %v1343, %v1342
          %v1390 = vpack.c.b16 %v1345, %v1344
          %v1391 = vpack.c.b16 %v1347, %v1346
          %v1392 = vpack.c.b16 %v1349, %v1348
          %v1393 = vpack.c.b16 %v1351, %v1350
          %v1394 = vpack.c.b16 %v1353, %v1352
          %v1395 = vpack.c.b16 %v1355, %v1354
          %v1396 = vpack.c.b16 %v1357, %v1356
          %v1397 = vpack.c.b16 %v1359, %v1358
          %v1398 = vpack.c.b16 %v1361, %v1360
          %v1399 = vpack.c.b16 %v1363, %v1362
          %v1400 = vpack.c.b16 %v1365, %v1364
          %v1401 = vpack.c.b16 %v1367, %v1366
          %v1402 = vpack.c.b16 %v1369, %v1368
          %v1403 = vpack.c.b16 %v1371, %v1370
          %1436 = vmatpush.bf16.msra.mxu0 %v1379
          %1437 = vmatpush.bf16.msra.mxu0 %v1378
          %1438 = vmatpush.bf16.msra.mxu0 %v1377
          %1439 = vmatpush.bf16.msra.mxu0 %v1376
          %1440 = vmatpush.bf16.msra.mxu0 %v1375
          %1441 = vmatpush.bf16.msra.mxu0 %v1374
          %1442 = vmatpush.bf16.msra.mxu0 %v1373
          %1443 = vmatpush.bf16.msra.mxu0 %v1372
          %1444 = vmatmul.bf16.gmra.mxu0 %v1168
          %v1445 = vpop.f32.mrf.mxu0
          %v1446 = vadd.f32 %v1242, %v1445
          %v1447 = vpop.f32.mrf.mxu0
          %v1448 = vadd.f32 %v1242, %v1447
          %1449 = vmatmul.bf16.gmra.mxu0 %v1172
          %v1450 = vpop.f32.mrf.mxu0
          %v1451 = vadd.f32 %v1242, %v1450
          %v1452 = vpop.f32.mrf.mxu0
          %1453 = vdwg.mxu0
          %1454 = vmatpush.bf16.msra.mxu0 %v1387
          %1455 = vmatpush.bf16.msra.mxu0 %v1386
          %1456 = vmatpush.bf16.msra.mxu0 %v1385
          %1457 = vmatpush.bf16.msra.mxu0 %v1384
          %1458 = vmatpush.bf16.msra.mxu0 %v1383
          %1459 = vmatpush.bf16.msra.mxu0 %v1382
          %1460 = vmatpush.bf16.msra.mxu0 %v1381
          %1461 = vmatpush.bf16.msra.mxu0 %v1380
          %1462 = vmatmul.bf16.gmra.mxu0 %v1169
          %v1463 = vpop.f32.mrf.mxu0
          %v1464 = vadd.f32 %v1446, %v1463
          %v1465 = vpop.f32.mrf.mxu0
          %v1466 = vadd.f32 %v1448, %v1465
          %1467 = vmatmul.bf16.gmra.mxu0 %v1173
          %v1468 = vpop.f32.mrf.mxu0
          %v1469 = vadd.f32 %v1451, %v1468
          %v1470 = vpop.f32.mrf.mxu0
          %1471 = vdwg.mxu0
          %1472 = vmatpush.bf16.msra.mxu0 %v1395
          %1473 = vmatpush.bf16.msra.mxu0 %v1394
          %1474 = vmatpush.bf16.msra.mxu0 %v1393
          %1475 = vmatpush.bf16.msra.mxu0 %v1392
          %1476 = vmatpush.bf16.msra.mxu0 %v1391
          %1477 = vmatpush.bf16.msra.mxu0 %v1390
          %1478 = vmatpush.bf16.msra.mxu0 %v1389
          %1479 = vmatpush.bf16.msra.mxu0 %v1388
          %1480 = vmatmul.bf16.gmra.mxu0 %v1170
          %v1481 = vpop.f32.mrf.mxu0
          %v1482 = vadd.f32 %v1464, %v1481
          %v1483 = vpop.f32.mrf.mxu0
          %v1484 = vadd.f32 %v1466, %v1483
          %1485 = vmatmul.bf16.gmra.mxu0 %v1174
          %v1486 = vpop.f32.mrf.mxu0
          %v1487 = vadd.f32 %v1469, %v1486
          %v1488 = vpop.f32.mrf.mxu0
          %1489 = vdwg.mxu0
          %1490 = vmatpush.bf16.msra.mxu0 %v1403
          %1491 = vmatpush.bf16.msra.mxu0 %v1402
          %1492 = vmatpush.bf16.msra.mxu0 %v1401
          %1493 = vmatpush.bf16.msra.mxu0 %v1400
          %1494 = vmatpush.bf16.msra.mxu0 %v1399
          %1495 = vmatpush.bf16.msra.mxu0 %v1398
          %1496 = vmatpush.bf16.msra.mxu0 %v1397
          %1497 = vmatpush.bf16.msra.mxu0 %v1396
          %1498 = vmatmul.bf16.gmra.mxu0 %v1171
          %v1499 = vpop.f32.mrf.mxu0
          %v1500 = vadd.f32 %v1482, %v1499
          %v1501 = vpop.f32.mrf.mxu0
          %v1502 = vadd.f32 %v1484, %v1501
          %1503 = vmatmul.bf16.gmra.mxu0 %v1175
          %v1504 = vpop.f32.mrf.mxu0
          %v1505 = vadd.f32 %v1487, %v1504
          %v1506 = vpop.f32.mrf.mxu0
          %1507 = vdwg.mxu0
          %1508 = vst [vmem:[#allocation3] sm:$0xff] %v1500
          %1509 = vst [vmem:[#allocation3 + $0x8] sm:$0xff] %v1502
          %1510 = vst [vmem:[#allocation3 + $0x10] sm:$0xff] %v1505
        $region80: #{traj_predict_policy_forward.1} parent=71 // pred_fallthru
          _
        %v1511 = vld [vmem:[#allocation2] sm:$0xff]
        %v1512 = vld [vmem:[#allocation2 + $0x8] sm:$0xff]
        %v1513 = vld [vmem:[#allocation2 + $0x10] sm:$0xff]
        %v1514 = vld [vmem:[#allocation2 + $0x18] sm:$0xff]
        %v1515 = vld [vmem:[#allocation4] sm:$0xff]
        %v1516 = vld [vmem:[#allocation4 + $0x8] sm:$0xff]
        %v1517 = vld [vmem:[#allocation4 + $0x10] sm:$0xff]
        %v1518 = vld [vmem:[#allocation4 + $0x18] sm:$0xff]
        %v1519 = vld [vmem:[#allocation5] sm:$0xff]
        %v1520 = vld [vmem:[#allocation5 + $0x8] sm:$0xff]
        %v1521 = vld [vmem:[#allocation5 + $0x10] sm:$0xff]
        %v1522 = vld [vmem:[#allocation5 + $0x18] sm:$0xff]
        %s1523 = smul.u32 %s30, 19
        %s1524 = scalar_lea.vmem %s12, %s1523
        %v1525 = vld [vmem:[%s1524] sm:$0x1]
        %v1526 = vld [vmem:[%s1524 + $0x1] sm:$0x1]
        %1527 = vadd.xlane.f32.xlu0 %v1511
        %v1528 = vpop.xlane.xlu0 %1527
        %1529 = vadd.xlane.f32.xlu0 %v1512
        %v1530 = vpop.xlane.xlu0 %1529
        %1531 = vadd.xlane.f32.xlu0 %v1513
        %v1532 = vpop.xlane.xlu0 %1531
        %1533 = vadd.xlane.f32.xlu0 %v1514
        %v1534 = vpop.xlane.xlu0 %1533
        %v1535 = vrcp.pop 128.0
        %v1536 = vmul.f32 128.0, %v1535
        %v1537 = vsub.f32 1.0, %v1536
        %v1538 = vmul.f32 %v1535, %v1537
        %v1539 = vadd.f32 %v1535, %v1538
        %vm1540 = vweird.f32 %v1535
        %v1541 = vsel %vm1540, %v1535, %v1539
        %v1542 = vmul.f32 %v1528, %v1541
        %v1543 = vmul.f32 %v1530, %v1541
        %v1544 = vmul.f32 %v1532, %v1541
        %v1545 = vmul.f32 %v1534, %v1541
        %v1546 = vsub.f32 %v1511, %v1542
        %v1547 = vsub.f32 %v1512, %v1543
        %v1548 = vsub.f32 %v1513, %v1544
        %v1549 = vsub.f32 %v1514, %v1545
        %v1550 = vmul.f32 %v1546, %v1546
        %v1551 = vmul.f32 %v1547, %v1547
        %v1552 = vmul.f32 %v1548, %v1548
        %v1553 = vmul.f32 %v1549, %v1549
        %1554 = vadd.xlane.f32.xlu0 %v1550
        %v1555 = vpop.xlane.xlu0 %1554
        %1556 = vadd.xlane.f32.xlu0 %v1551
        %v1557 = vpop.xlane.xlu0 %1556
        %1558 = vadd.xlane.f32.xlu0 %v1552
        %v1559 = vpop.xlane.xlu0 %1558
        %1560 = vadd.xlane.f32.xlu0 %v1553
        %v1561 = vpop.xlane.xlu0 %1560
        %v1562 = vmul.f32 %v1555, %v1541
        %v1563 = vmul.f32 %v1557, %v1541
        %v1564 = vmul.f32 %v1559, %v1541
        %v1565 = vmul.f32 %v1561, %v1541
        %v1566 = vadd.f32 %v1562, 1e-05
        %v1567 = vadd.f32 %v1563, 1e-05
        %v1568 = vadd.f32 %v1564, 1e-05
        %v1569 = vadd.f32 %v1565, 1e-05
        %v1570 = vrsqrt.pop %v1566
        %v1571 = vmul.f32 %v1570, %v1566
        %v1572 = vmul.f32 %v1571, %v1570
        %v1573 = vmul.f32 0.5, %v1572
        %v1574 = vsub.f32 1.5, %v1573
        %v1575 = vmul.f32 %v1570, %v1574
        %vm1576 = vweird.f32 %v1566
        %vm1577 = vweird.f32 %v1570
        %vm1578 = vmor %vm1576, %vm1577
        %v1579 = vsel %vm1578, %v1570, %v1575
        %v1580 = vrsqrt.pop %v1567
        %v1581 = vmul.f32 %v1580, %v1567
        %v1582 = vmul.f32 %v1581, %v1580
        %v1583 = vmul.f32 0.5, %v1582
        %v1584 = vsub.f32 1.5, %v1583
        %v1585 = vmul.f32 %v1580, %v1584
        %vm1586 = vweird.f32 %v1567
        %vm1587 = vweird.f32 %v1580
        %vm1588 = vmor %vm1586, %vm1587
        %v1589 = vsel %vm1588, %v1580, %v1585
        %v1590 = vrsqrt.pop %v1568
        %v1591 = vmul.f32 %v1590, %v1568
        %v1592 = vmul.f32 %v1591, %v1590
        %v1593 = vmul.f32 0.5, %v1592
        %v1594 = vsub.f32 1.5, %v1593
        %v1595 = vmul.f32 %v1590, %v1594
        %vm1596 = vweird.f32 %v1568
        %vm1597 = vweird.f32 %v1590
        %vm1598 = vmor %vm1596, %vm1597
        %v1599 = vsel %vm1598, %v1590, %v1595
        %v1600 = vrsqrt.pop %v1569
        %v1601 = vmul.f32 %v1600, %v1569
        %v1602 = vmul.f32 %v1601, %v1600
        %v1603 = vmul.f32 0.5, %v1602
        %v1604 = vsub.f32 1.5, %v1603
        %v1605 = vmul.f32 %v1600, %v1604
        %vm1606 = vweird.f32 %v1569
        %vm1607 = vweird.f32 %v1600
        %vm1608 = vmor %vm1606, %vm1607
        %v1609 = vsel %vm1608, %v1600, %v1605
        %v1610 = vmul.f32 %v1546, %v1579
        %v1611 = vmul.f32 %v1547, %v1589
        %v1612 = vmul.f32 %v1548, %v1599
        %v1613 = vmul.f32 %v1549, %v1609
        %v1615 = vperm.slane %v1525, 0
        %v1617 = vmul.f32 %v1610, %v1615
        %v1618 = vmul.f32 %v1611, %v1615
        %v1619 = vmul.f32 %v1612, %v1615
        %v1620 = vmul.f32 %v1613, %v1615
        %v1622 = vperm.slane %v1526, 0
        %v1624 = vadd.f32 %v1617, %v1622
        %v1625 = vadd.f32 %v1618, %v1622
        %v1626 = vadd.f32 %v1619, %v1622
        %v1627 = vadd.f32 %v1620, %v1622
        %v1628 = vpack.c.bf16 %v1625, %v1624
        %v1629 = vpack.c.bf16 %v1627, %v1626
        %s1630 = smul.u32 %s30, 192
        %s1631 = smul.addr %s1630, 4
        %s1632 = scalar_lea.vmem [#allocation6], %s1631
        %v1633 = vld [vmem:[%s1632] sm:$0xff]
        %v1634 = vld [vmem:[%s1632 + $0x8] sm:$0xf]
        %v1635 = vld [vmem:[%s1632 + $0x30] sm:$0xff]
        %v1636 = vld [vmem:[%s1632 + $0x38] sm:$0xf]
        %v1637 = vld [vmem:[%s1632 + $0x60] sm:$0xff]
        %v1638 = vld [vmem:[%s1632 + $0x68] sm:$0xf]
        %v1639 = vld [vmem:[%s1632 + $0x90] sm:$0xff]
        %v1640 = vld [vmem:[%s1632 + $0x98] sm:$0xf]
        %v1641 = vld [vmem:[%s1632 + $0xc0] sm:$0xff]
        %v1642 = vld [vmem:[%s1632 + $0xc8] sm:$0xf]
        %v1643 = vld [vmem:[%s1632 + $0xf0] sm:$0xff]
        %v1644 = vld [vmem:[%s1632 + $0xf8] sm:$0xf]
        %v1645 = vld [vmem:[%s1632 + $0x120] sm:$0xff]
        %v1646 = vld [vmem:[%s1632 + $0x128] sm:$0xf]
        %v1647 = vld [vmem:[%s1632 + $0x150] sm:$0xff]
        %v1648 = vld [vmem:[%s1632 + $0x158] sm:$0xf]
        %v1649 = vld [vmem:[%s1632 + $0x180] sm:$0xff]
        %v1650 = vld [vmem:[%s1632 + $0x188] sm:$0xf]
        %v1651 = vld [vmem:[%s1632 + $0x1b0] sm:$0xff]
        %v1652 = vld [vmem:[%s1632 + $0x1b8] sm:$0xf]
        %v1653 = vld [vmem:[%s1632 + $0x1e0] sm:$0xff]
        %v1654 = vld [vmem:[%s1632 + $0x1e8] sm:$0xf]
        %v1655 = vld [vmem:[%s1632 + $0x210] sm:$0xff]
        %v1656 = vld [vmem:[%s1632 + $0x218] sm:$0xf]
        %v1657 = vld [vmem:[%s1632 + $0x240] sm:$0xff]
        %v1658 = vld [vmem:[%s1632 + $0x248] sm:$0xf]
        %v1659 = vld [vmem:[%s1632 + $0x270] sm:$0xff]
        %v1660 = vld [vmem:[%s1632 + $0x278] sm:$0xf]
        %v1661 = vld [vmem:[%s1632 + $0x2a0] sm:$0xff]
        %v1662 = vld [vmem:[%s1632 + $0x2a8] sm:$0xf]
        %v1663 = vld [vmem:[%s1632 + $0x2d0] sm:$0xff]
        %v1664 = vld [vmem:[%s1632 + $0x2d8] sm:$0xf]
        %v1665 = vld [vmem:[%s1524 + $0x2] sm:$0x7]
        %v1667 = vperm.slane %v1665, 0
        %v1668 = vperm.slane %v1665, 1
        %v1669 = vperm.slane %v1665, 2
        %v1705 = vunpack.c.l.b16 %v1633
        %v1706 = vunpack.c.h.b16 %v1633
        %v1707 = vunpack.c.l.b16 %v1634
        %v1708 = vunpack.c.l.b16 %v1635
        %v1709 = vunpack.c.h.b16 %v1635
        %v1710 = vunpack.c.l.b16 %v1636
        %v1711 = vunpack.c.l.b16 %v1637
        %v1712 = vunpack.c.h.b16 %v1637
        %v1713 = vunpack.c.l.b16 %v1638
        %v1714 = vunpack.c.l.b16 %v1639
        %v1715 = vunpack.c.h.b16 %v1639
        %v1716 = vunpack.c.l.b16 %v1640
        %v1717 = vunpack.c.l.b16 %v1641
        %v1718 = vunpack.c.h.b16 %v1641
        %v1719 = vunpack.c.l.b16 %v1642
        %v1720 = vunpack.c.l.b16 %v1643
        %v1721 = vunpack.c.h.b16 %v1643
        %v1722 = vunpack.c.l.b16 %v1644
        %v1723 = vunpack.c.l.b16 %v1645
        %v1724 = vunpack.c.h.b16 %v1645
        %v1725 = vunpack.c.l.b16 %v1646
        %v1726 = vunpack.c.l.b16 %v1647
        %v1727 = vunpack.c.h.b16 %v1647
        %v1728 = vunpack.c.l.b16 %v1648
        %v1729 = vunpack.c.l.b16 %v1649
        %v1730 = vunpack.c.h.b16 %v1649
        %v1731 = vunpack.c.l.b16 %v1650
        %v1732 = vunpack.c.l.b16 %v1651
        %v1733 = vunpack.c.h.b16 %v1651
        %v1734 = vunpack.c.l.b16 %v1652
        %v1735 = vunpack.c.l.b16 %v1653
        %v1736 = vunpack.c.h.b16 %v1653
        %v1737 = vunpack.c.l.b16 %v1654
        %v1738 = vunpack.c.l.b16 %v1655
        %v1739 = vunpack.c.h.b16 %v1655
        %v1740 = vunpack.c.l.b16 %v1656
        %v1741 = vunpack.c.l.b16 %v1657
        %v1742 = vunpack.c.h.b16 %v1657
        %v1743 = vunpack.c.l.b16 %v1658
        %v1744 = vunpack.c.l.b16 %v1659
        %v1745 = vunpack.c.h.b16 %v1659
        %v1746 = vunpack.c.l.b16 %v1660
        %v1747 = vunpack.c.l.b16 %v1661
        %v1748 = vunpack.c.h.b16 %v1661
        %v1749 = vunpack.c.l.b16 %v1662
        %v1750 = vunpack.c.l.b16 %v1663
        %v1751 = vunpack.c.h.b16 %v1663
        %v1752 = vunpack.c.l.b16 %v1664
        %v1753 = vpack.c.b16 %v1708, %v1705
        %v1754 = vpack.c.b16 %v1709, %v1706
        %v1755 = vpack.c.b16 %v1710, %v1707
        %v1756 = vpack.c.b16 %v1714, %v1711
        %v1757 = vpack.c.b16 %v1715, %v1712
        %v1758 = vpack.c.b16 %v1716, %v1713
        %v1759 = vpack.c.b16 %v1720, %v1717
        %v1760 = vpack.c.b16 %v1721, %v1718
        %v1761 = vpack.c.b16 %v1722, %v1719
        %v1762 = vpack.c.b16 %v1726, %v1723
        %v1763 = vpack.c.b16 %v1727, %v1724
        %v1764 = vpack.c.b16 %v1728, %v1725
        %v1765 = vpack.c.b16 %v1732, %v1729
        %v1766 = vpack.c.b16 %v1733, %v1730
        %v1767 = vpack.c.b16 %v1734, %v1731
        %v1768 = vpack.c.b16 %v1738, %v1735
        %v1769 = vpack.c.b16 %v1739, %v1736
        %v1770 = vpack.c.b16 %v1740, %v1737
        %v1771 = vpack.c.b16 %v1744, %v1741
        %v1772 = vpack.c.b16 %v1745, %v1742
        %v1773 = vpack.c.b16 %v1746, %v1743
        %v1774 = vpack.c.b16 %v1750, %v1747
        %v1775 = vpack.c.b16 %v1751, %v1748
        %v1776 = vpack.c.b16 %v1752, %v1749
        %1801 = vmatpush.bf16.msra.mxu0 %v1774
        %1802 = vmatpush.bf16.msra.mxu0 %v1771
        %1803 = vmatpush.bf16.msra.mxu0 %v1768
        %1804 = vmatpush.bf16.msra.mxu0 %v1765
        %1805 = vmatpush.bf16.msra.mxu0 %v1762
        %1806 = vmatpush.bf16.msra.mxu0 %v1759
        %1807 = vmatpush.bf16.msra.mxu0 %v1756
        %1808 = vmatpush.bf16.msra.mxu0 %v1753
        %1809 = vmatmul.bf16.gmra.mxu0 %v1628
        %v1810 = vpop.f32.mrf.mxu0
        %v1811 = vadd.f32 %v1667, %v1810
        %v1812 = vpop.f32.mrf.mxu0
        %v1813 = vadd.f32 %v1667, %v1812
        %1814 = vmatmul.bf16.gmra.mxu0 %v1629
        %v1815 = vpop.f32.mrf.mxu0
        %v1816 = vadd.f32 %v1667, %v1815
        %v1817 = vpop.f32.mrf.mxu0
        %v1818 = vadd.f32 %v1667, %v1817
        %1819 = vdwg.mxu0
        %1820 = vmatpush.bf16.msra.mxu0 %v1775
        %1821 = vmatpush.bf16.msra.mxu0 %v1772
        %1822 = vmatpush.bf16.msra.mxu0 %v1769
        %1823 = vmatpush.bf16.msra.mxu0 %v1766
        %1824 = vmatpush.bf16.msra.mxu0 %v1763
        %1825 = vmatpush.bf16.msra.mxu0 %v1760
        %1826 = vmatpush.bf16.msra.mxu0 %v1757
        %1827 = vmatpush.bf16.msra.mxu0 %v1754
        %1828 = vmatmul.bf16.gmra.mxu0 %v1628
        %v1829 = vpop.f32.mrf.mxu0
        %v1830 = vadd.f32 %v1668, %v1829
        %v1831 = vpop.f32.mrf.mxu0
        %v1832 = vadd.f32 %v1668, %v1831
        %1833 = vmatmul.bf16.gmra.mxu0 %v1629
        %v1834 = vpop.f32.mrf.mxu0
        %v1835 = vadd.f32 %v1668, %v1834
        %v1836 = vpop.f32.mrf.mxu0
        %v1837 = vadd.f32 %v1668, %v1836
        %1838 = vdwg.mxu0
        %1839 = vmatpush.bf16.msra.mxu0 %v1776
        %1840 = vmatpush.bf16.msra.mxu0 %v1773
        %1841 = vmatpush.bf16.msra.mxu0 %v1770
        %1842 = vmatpush.bf16.msra.mxu0 %v1767
        %1843 = vmatpush.bf16.msra.mxu0 %v1764
        %1844 = vmatpush.bf16.msra.mxu0 %v1761
        %1845 = vmatpush.bf16.msra.mxu0 %v1758
        %1846 = vmatpush.bf16.msra.mxu0 %v1755
        %1847 = vmatmul.bf16.gmra.mxu0 %v1628
        %v1848 = vpop.f32.mrf.mxu0
        %v1849 = vadd.f32 %v1669, %v1848
        %v1850 = vpop.f32.mrf.mxu0
        %v1851 = vadd.f32 %v1669, %v1850
        %1852 = vmatmul.bf16.gmra.mxu0 %v1629
        %v1853 = vpop.f32.mrf.mxu0
        %v1854 = vadd.f32 %v1669, %v1853
        %v1855 = vpop.f32.mrf.mxu0
        %v1856 = vadd.f32 %v1669, %v1855
        %1857 = vdwg.mxu0
        %v1858 = vld [vmem:[%s1632 + $0xc] sm:$0xf]
        %v1859 = vld [vmem:[%s1632 + $0x3c] sm:$0xf]
        %v1860 = vld [vmem:[%s1632 + $0x6c] sm:$0xf]
        %v1861 = vld [vmem:[%s1632 + $0x9c] sm:$0xf]
        %v1862 = vld [vmem:[%s1632 + $0xcc] sm:$0xf]
        %v1863 = vld [vmem:[%s1632 + $0xfc] sm:$0xf]
        %v1864 = vld [vmem:[%s1632 + $0x12c] sm:$0xf]
        %v1865 = vld [vmem:[%s1632 + $0x15c] sm:$0xf]
        %v1866 = vld [vmem:[%s1632 + $0x18c] sm:$0xf]
        %v1867 = vld [vmem:[%s1632 + $0x1bc] sm:$0xf]
        %v1868 = vld [vmem:[%s1632 + $0x1ec] sm:$0xf]
        %v1869 = vld [vmem:[%s1632 + $0x21c] sm:$0xf]
        %v1870 = vld [vmem:[%s1632 + $0x24c] sm:$0xf]
        %v1871 = vld [vmem:[%s1632 + $0x27c] sm:$0xf]
        %v1872 = vld [vmem:[%s1632 + $0x2ac] sm:$0xf]
        %v1873 = vld [vmem:[%s1632 + $0x2dc] sm:$0xf]
        %v1874 = vpack.c.bf16 %v1811, %v1811
        %v1875 = vpack.c.bf16 %v1813, %v1813
        %v1876 = vpack.c.bf16 %v1816, %v1816
        %v1877 = vpack.c.bf16 %v1818, %v1818
        %v1878 = vpack.c.bf16 %v1830, %v1830
        %v1879 = vpack.c.bf16 %v1832, %v1832
        %v1880 = vpack.c.bf16 %v1835, %v1835
        %v1881 = vpack.c.bf16 %v1837, %v1837
        %v1882 = vpack.c.bf16 %v1849, %v1849
        %v1883 = vpack.c.bf16 %v1851, %v1851
        %v1884 = vpack.c.bf16 %v1854, %v1854
        %v1885 = vpack.c.bf16 %v1856, %v1856
        %v1890 = vunpack.c.l.b16 %v1874
        %v1891 = vunpack.c.l.b16 %v1875
        %v1892 = vunpack.c.l.b16 %v1876
        %v1893 = vunpack.c.l.b16 %v1877
        %v1894 = vpack.c.b16 %v1891, %v1890
        %v1895 = vpack.c.b16 %v1893, %v1892
        %v1900 = vunpack.c.l.b16 %v1878
        %v1901 = vunpack.c.l.b16 %v1879
        %v1902 = vunpack.c.l.b16 %v1880
        %v1903 = vunpack.c.l.b16 %v1881
        %v1904 = vpack.c.b16 %v1901, %v1900
        %v1905 = vpack.c.b16 %v1903, %v1902
        %vm1906 = vcmask 261120
        %v1908 = vsel %vm1906, %v1894, 0
        %v1911 = vsel %vm1906, %v1895, 0
        %v1914 = vsel %vm1906, %v1904, 0
        %v1917 = vsel %vm1906, %v1905, 0
        %1919 = vmatpush.bf16.xpose.msra.mxu0 0
        %1920 = vmatpush.bf16.xpose.msra.mxu0 0
        %1921 = vmatpush.bf16.xpose.msra.mxu0 0
        %1922 = vmatpush.bf16.xpose.msra.mxu0 0
        %1923 = vmatpush.bf16.xpose.msra.mxu0 0
        %1924 = vmatpush.bf16.xpose.msra.mxu0 0
        %1925 = vmatpush.bf16.xpose.msra.mxu0 %v1917
        %1926 = vmatpush.bf16.xpose.msra.mxu0 %v1914
        %1927 = vmatmul.bf16.gmra.mxu0 %v1908
        %v1928 = vpop.f32.mrf.mxu0
        %v1929 = vadd.f32 0.0, %v1928
        %v1930 = vpop.f32.mrf.mxu0
        %v1931 = vadd.f32 0.0, %v1930
        %1932 = vmatmul.bf16.gmra.mxu0 %v1911
        %v1933 = vpop.f32.mrf.mxu0
        %v1934 = vadd.f32 0.0, %v1933
        %v1935 = vpop.f32.mrf.mxu0
        %v1936 = vadd.f32 0.0, %v1935
        %1937 = vdwg.mxu0
        %v1938 = vmul.f32 %v1929, 0.17677669
        %v1939 = vmul.f32 %v1931, 0.17677669
        %v1940 = vmul.f32 %v1934, 0.17677669
        %v1941 = vmul.f32 %v1936, 0.17677669
        %v1942 = vadd.f32 %v1938, %v1515
        %v1943 = vadd.f32 %v1939, %v1516
        %v1944 = vadd.f32 %v1940, %v1517
        %v1945 = vadd.f32 %v1941, %v1518
        %v1946 = vsel %vm1906, %v1942, -inf
        %1947 = vmax.xlane.f32.xlu0 %v1946
        %v1948 = vpop.xlane.xlu0 %1947
        %v1949 = vsel %vm1906, %v1943, -inf
        %1950 = vmax.xlane.f32.xlu0 %v1949
        %v1951 = vpop.xlane.xlu0 %1950
        %v1952 = vsel %vm1906, %v1944, -inf
        %1953 = vmax.xlane.f32.xlu0 %v1952
        %v1954 = vpop.xlane.xlu0 %1953
        %v1955 = vsel %vm1906, %v1945, -inf
        %1956 = vmax.xlane.f32.xlu0 %v1955
        %v1957 = vpop.xlane.xlu0 %1956
        %v1958 = vsub.f32 %v1942, %v1948
        %v1959 = vsub.f32 %v1943, %v1951
        %v1960 = vsub.f32 %v1944, %v1954
        %v1961 = vsub.f32 %v1945, %v1957
        %v1962 = vmul.f32 %v1958, 1.442695
        %v1963 = vpow.pop %v1962
        %v1964 = vmul.f32 %v1959, 1.442695
        %v1965 = vpow.pop %v1964
        %v1966 = vmul.f32 %v1960, 1.442695
        %v1967 = vpow.pop %v1966
        %v1968 = vmul.f32 %v1961, 1.442695
        %v1969 = vpow.pop %v1968
        %v1970 = vsel %vm1906, %v1963, 0.0
        %1971 = vadd.xlane.f32.xlu0 %v1970
        %v1972 = vpop.xlane.xlu0 %1971
        %v1973 = vsel %vm1906, %v1965, 0.0
        %1974 = vadd.xlane.f32.xlu0 %v1973
        %v1975 = vpop.xlane.xlu0 %1974
        %v1976 = vsel %vm1906, %v1967, 0.0
        %1977 = vadd.xlane.f32.xlu0 %v1976
        %v1978 = vpop.xlane.xlu0 %1977
        %v1979 = vsel %vm1906, %v1969, 0.0
        %1980 = vadd.xlane.f32.xlu0 %v1979
        %v1981 = vpop.xlane.xlu0 %1980
        %v1982 = vrcp.pop %v1972
        %v1983 = vrcp.pop %v1975
        %v1984 = vrcp.pop %v1978
        %v1985 = vrcp.pop %v1981
        %v1986 = vmul.f32 %v1963, %v1982
        %v1987 = vmul.f32 %v1965, %v1983
        %v1988 = vmul.f32 %v1967, %v1984
        %v1989 = vmul.f32 %v1969, %v1985
        %v1990 = vpack.c.bf16 %v1986, %v1986
        %v1991 = vpack.c.bf16 %v1987, %v1987
        %v1992 = vpack.c.bf16 %v1988, %v1988
        %v1993 = vpack.c.bf16 %v1989, %v1989
        %v1998 = vunpack.c.l.b16 %v1990
        %v1999 = vunpack.c.l.b16 %v1991
        %v2000 = vunpack.c.l.b16 %v1992
        %v2001 = vunpack.c.l.b16 %v1993
        %v2002 = vpack.c.b16 %v1999, %v1998
        %v2003 = vpack.c.b16 %v2001, %v2000
        %v2008 = vunpack.c.l.b16 %v1882
        %v2009 = vunpack.c.l.b16 %v1883
        %v2010 = vunpack.c.l.b16 %v1884
        %v2011 = vunpack.c.l.b16 %v1885
        %v2012 = vpack.c.b16 %v2009, %v2008
        %v2013 = vpack.c.b16 %v2011, %v2010
        %v2017 = vsel %vm1906, %v2002, 0
        %v2020 = vsel %vm1906, %v2003, 0
        %2022 = vmatpush.bf16.msra.mxu0 0
        %2023 = vmatpush.bf16.msra.mxu0 0
        %2024 = vmatpush.bf16.msra.mxu0 0
        %2025 = vmatpush.bf16.msra.mxu0 0
        %2026 = vmatpush.bf16.msra.mxu0 0
        %2027 = vmatpush.bf16.msra.mxu0 0
        %2028 = vmatpush.bf16.msra.mxu0 %v2013
        %2029 = vmatpush.bf16.msra.mxu0 %v2012
        %2030 = vmatmul.bf16.gmra.mxu0 %v2017
        %v2031 = vpop.f32.mrf.mxu0
        %v2032 = vadd.f32 0.0, %v2031
        %v2033 = vpop.f32.mrf.mxu0
        %v2034 = vadd.f32 0.0, %v2033
        %2035 = vmatmul.bf16.gmra.mxu0 %v2020
        %v2036 = vpop.f32.mrf.mxu0
        %v2037 = vadd.f32 0.0, %v2036
        %v2038 = vpop.f32.mrf.mxu0
        %v2039 = vadd.f32 0.0, %v2038
        %2040 = vdwg.mxu0
        %v2041 = vpack.c.bf16 %v2034, %v2032
        %v2042 = vpack.c.bf16 %v2039, %v2037
        %2043 = vrot.lane.b32.xlu0 %v1894, 96
        %v2044 = vpop.permute.xlu0 %2043
        %2045 = vrot.lane.b32.xlu0 %v1895, 96
        %v2046 = vpop.permute.xlu0 %2045
        %2047 = vrot.lane.b32.xlu0 %v1904, 96
        %v2048 = vpop.permute.xlu0 %2047
        %2049 = vrot.lane.b32.xlu0 %v1905, 96
        %v2050 = vpop.permute.xlu0 %2049
        %v2052 = vsel %vm1906, %v2044, 0
        %v2055 = vsel %vm1906, %v2046, 0
        %v2058 = vsel %vm1906, %v2048, 0
        %v2061 = vsel %vm1906, %v2050, 0
        %2063 = vmatpush.bf16.xpose.msra.mxu0 0
        %2064 = vmatpush.bf16.xpose.msra.mxu0 0
        %2065 = vmatpush.bf16.xpose.msra.mxu0 0
        %2066 = vmatpush.bf16.xpose.msra.mxu0 0
        %2067 = vmatpush.bf16.xpose.msra.mxu0 0
        %2068 = vmatpush.bf16.xpose.msra.mxu0 0
        %2069 = vmatpush.bf16.xpose.msra.mxu0 %v2061
        %2070 = vmatpush.bf16.xpose.msra.mxu0 %v2058
        %2071 = vmatmul.bf16.gmra.mxu0 %v2052
        %v2072 = vpop.f32.mrf.mxu0
        %v2073 = vadd.f32 0.0, %v2072
        %v2074 = vpop.f32.mrf.mxu0
        %v2075 = vadd.f32 0.0, %v2074
        %2076 = vmatmul.bf16.gmra.mxu0 %v2055
        %v2077 = vpop.f32.mrf.mxu0
        %v2078 = vadd.f32 0.0, %v2077
        %v2079 = vpop.f32.mrf.mxu0
        %v2080 = vadd.f32 0.0, %v2079
        %2081 = vdwg.mxu0
        %v2082 = vmul.f32 %v2073, 0.17677669
        %v2083 = vmul.f32 %v2075, 0.17677669
        %v2084 = vmul.f32 %v2078, 0.17677669
        %v2085 = vmul.f32 %v2080, 0.17677669
        %v2086 = vadd.f32 %v2082, %v1515
        %v2087 = vadd.f32 %v2083, %v1516
        %v2088 = vadd.f32 %v2084, %v1517
        %v2089 = vadd.f32 %v2085, %v1518
        %v2090 = vsel %vm1906, %v2086, -inf
        %2091 = vmax.xlane.f32.xlu0 %v2090
        %v2092 = vpop.xlane.xlu0 %2091
        %v2093 = vsel %vm1906, %v2087, -inf
        %2094 = vmax.xlane.f32.xlu0 %v2093
        %v2095 = vpop.xlane.xlu0 %2094
        %v2096 = vsel %vm1906, %v2088, -inf
        %2097 = vmax.xlane.f32.xlu0 %v2096
        %v2098 = vpop.xlane.xlu0 %2097
        %v2099 = vsel %vm1906, %v2089, -inf
        %2100 = vmax.xlane.f32.xlu0 %v2099
        %v2101 = vpop.xlane.xlu0 %2100
        %v2102 = vsub.f32 %v2086, %v2092
        %v2103 = vsub.f32 %v2087, %v2095
        %v2104 = vsub.f32 %v2088, %v2098
        %v2105 = vsub.f32 %v2089, %v2101
        %v2106 = vmul.f32 %v2102, 1.442695
        %v2107 = vpow.pop %v2106
        %v2108 = vmul.f32 %v2103, 1.442695
        %v2109 = vpow.pop %v2108
        %v2110 = vmul.f32 %v2104, 1.442695
        %v2111 = vpow.pop %v2110
        %v2112 = vmul.f32 %v2105, 1.442695
        %v2113 = vpow.pop %v2112
        %v2114 = vsel %vm1906, %v2107, 0.0
        %2115 = vadd.xlane.f32.xlu0 %v2114
        %v2116 = vpop.xlane.xlu0 %2115
        %v2117 = vsel %vm1906, %v2109, 0.0
        %2118 = vadd.xlane.f32.xlu0 %v2117
        %v2119 = vpop.xlane.xlu0 %2118
        %v2120 = vsel %vm1906, %v2111, 0.0
        %2121 = vadd.xlane.f32.xlu0 %v2120
        %v2122 = vpop.xlane.xlu0 %2121
        %v2123 = vsel %vm1906, %v2113, 0.0
        %2124 = vadd.xlane.f32.xlu0 %v2123
        %v2125 = vpop.xlane.xlu0 %2124
        %v2126 = vrcp.pop %v2116
        %v2127 = vrcp.pop %v2119
        %v2128 = vrcp.pop %v2122
        %v2129 = vrcp.pop %v2125
        %v2130 = vmul.f32 %v2107, %v2126
        %v2131 = vmul.f32 %v2109, %v2127
        %v2132 = vmul.f32 %v2111, %v2128
        %v2133 = vmul.f32 %v2113, %v2129
        %v2134 = vpack.c.bf16 %v2130, %v2130
        %v2135 = vpack.c.bf16 %v2131, %v2131
        %v2136 = vpack.c.bf16 %v2132, %v2132
        %v2137 = vpack.c.bf16 %v2133, %v2133
        %v2142 = vunpack.c.l.b16 %v2134
        %v2143 = vunpack.c.l.b16 %v2135
        %v2144 = vunpack.c.l.b16 %v2136
        %v2145 = vunpack.c.l.b16 %v2137
        %v2146 = vpack.c.b16 %v2143, %v2142
        %v2147 = vpack.c.b16 %v2145, %v2144
        %2148 = vrot.lane.b32.xlu0 %v2012, 96
        %v2149 = vpop.permute.xlu0 %2148
        %2150 = vrot.lane.b32.xlu0 %v2013, 96
        %v2151 = vpop.permute.xlu0 %2150
        %v2155 = vsel %vm1906, %v2146, 0
        %v2158 = vsel %vm1906, %v2147, 0
        %2160 = vmatpush.bf16.msra.mxu0 0
        %2161 = vmatpush.bf16.msra.mxu0 0
        %2162 = vmatpush.bf16.msra.mxu0 0
        %2163 = vmatpush.bf16.msra.mxu0 0
        %2164 = vmatpush.bf16.msra.mxu0 0
        %2165 = vmatpush.bf16.msra.mxu0 0
        %2166 = vmatpush.bf16.msra.mxu0 %v2151
        %2167 = vmatpush.bf16.msra.mxu0 %v2149
        %2168 = vmatmul.bf16.gmra.mxu0 %v2155
        %v2169 = vpop.f32.mrf.mxu0
        %v2170 = vadd.f32 0.0, %v2169
        %v2171 = vpop.f32.mrf.mxu0
        %v2172 = vadd.f32 0.0, %v2171
        %2173 = vmatmul.bf16.gmra.mxu0 %v2158
        %v2174 = vpop.f32.mrf.mxu0
        %v2175 = vadd.f32 0.0, %v2174
        %v2176 = vpop.f32.mrf.mxu0
        %v2177 = vadd.f32 0.0, %v2176
        %2178 = vdwg.mxu0
        %v2179 = vpack.c.bf16 %v2172, %v2170
        %v2180 = vpack.c.bf16 %v2177, %v2175
        %v2185 = vunpack.c.l.b16 %v1862
        %v2186 = vunpack.c.l.b16 %v1863
        %v2187 = vunpack.c.l.b16 %v1864
        %v2188 = vunpack.c.l.b16 %v1865
        %v2189 = vpack.c.b16 %v2186, %v2185
        %v2190 = vpack.c.b16 %v2188, %v2187
        %v2194 = vsel %vm1906, %v2179, 0
        %v2197 = vsel %vm1906, %v2180, 0
        %2199 = vmatpush.bf16.msra.mxu0 0
        %2200 = vmatpush.bf16.msra.mxu0 0
        %2201 = vmatpush.bf16.msra.mxu0 0
        %2202 = vmatpush.bf16.msra.mxu0 0
        %2203 = vmatpush.bf16.msra.mxu0 0
        %2204 = vmatpush.bf16.msra.mxu0 0
        %2205 = vmatpush.bf16.msra.mxu0 %v2190
        %2206 = vmatpush.bf16.msra.mxu0 %v2189
        %2207 = vmatmul.bf16.gmra.mxu0 %v2194
        %v2208 = vpop.f32.mrf.mxu0
        %v2209 = vadd.f32 0.0, %v2208
        %v2210 = vpop.f32.mrf.mxu0
        %v2211 = vadd.f32 0.0, %v2210
        %2212 = vmatmul.bf16.gmra.mxu0 %v2197
        %v2213 = vpop.f32.mrf.mxu0
        %v2214 = vadd.f32 0.0, %v2213
        %v2215 = vpop.f32.mrf.mxu0
        %v2216 = vadd.f32 0.0, %v2215
        %2217 = vdwg.mxu0
        %v2222 = vunpack.c.l.b16 %v1858
        %v2223 = vunpack.c.l.b16 %v1859
        %v2224 = vunpack.c.l.b16 %v1860
        %v2225 = vunpack.c.l.b16 %v1861
        %v2226 = vpack.c.b16 %v2223, %v2222
        %v2227 = vpack.c.b16 %v2225, %v2224
        %v2231 = vsel %vm1906, %v2041, 0
        %v2234 = vsel %vm1906, %v2042, 0
        %2236 = vmatpush.bf16.msra.mxu0 0
        %2237 = vmatpush.bf16.msra.mxu0 0
        %2238 = vmatpush.bf16.msra.mxu0 0
        %2239 = vmatpush.bf16.msra.mxu0 0
        %2240 = vmatpush.bf16.msra.mxu0 0
        %2241 = vmatpush.bf16.msra.mxu0 0
        %2242 = vmatpush.bf16.msra.mxu0 %v2227
        %2243 = vmatpush.bf16.msra.mxu0 %v2226
        %2244 = vmatmul.bf16.gmra.mxu0 %v2231
        %v2245 = vpop.f32.mrf.mxu0
        %v2246 = vadd.f32 %v2209, %v2245
        %v2247 = vpop.f32.mrf.mxu0
        %v2248 = vadd.f32 %v2211, %v2247
        %2249 = vmatmul.bf16.gmra.mxu0 %v2234
        %v2250 = vpop.f32.mrf.mxu0
        %v2251 = vadd.f32 %v2214, %v2250
        %v2252 = vpop.f32.mrf.mxu0
        %v2253 = vadd.f32 %v2216, %v2252
        %2254 = vdwg.mxu0
        %2255 = vrot.lane.b32.xlu0 %v1894, 64
        %v2256 = vpop.permute.xlu0 %2255
        %2257 = vrot.lane.b32.xlu0 %v1895, 64
        %v2258 = vpop.permute.xlu0 %2257
        %2259 = vrot.lane.b32.xlu0 %v1904, 64
        %v2260 = vpop.permute.xlu0 %2259
        %2261 = vrot.lane.b32.xlu0 %v1905, 64
        %v2262 = vpop.permute.xlu0 %2261
        %v2264 = vsel %vm1906, %v2256, 0
        %v2267 = vsel %vm1906, %v2258, 0
        %v2270 = vsel %vm1906, %v2260, 0
        %v2273 = vsel %vm1906, %v2262, 0
        %2275 = vmatpush.bf16.xpose.msra.mxu0 0
        %2276 = vmatpush.bf16.xpose.msra.mxu0 0
        %2277 = vmatpush.bf16.xpose.msra.mxu0 0
        %2278 = vmatpush.bf16.xpose.msra.mxu0 0
        %2279 = vmatpush.bf16.xpose.msra.mxu0 0
        %2280 = vmatpush.bf16.xpose.msra.mxu0 0
        %2281 = vmatpush.bf16.xpose.msra.mxu0 %v2273
        %2282 = vmatpush.bf16.xpose.msra.mxu0 %v2270
        %2283 = vmatmul.bf16.gmra.mxu0 %v2264
        %v2284 = vpop.f32.mrf.mxu0
        %v2285 = vadd.f32 0.0, %v2284
        %v2286 = vpop.f32.mrf.mxu0
        %v2287 = vadd.f32 0.0, %v2286
        %2288 = vmatmul.bf16.gmra.mxu0 %v2267
        %v2289 = vpop.f32.mrf.mxu0
        %v2290 = vadd.f32 0.0, %v2289
        %v2291 = vpop.f32.mrf.mxu0
        %v2292 = vadd.f32 0.0, %v2291
        %2293 = vdwg.mxu0
        %v2294 = vmul.f32 %v2285, 0.17677669
        %v2295 = vmul.f32 %v2287, 0.17677669
        %v2296 = vmul.f32 %v2290, 0.17677669
        %v2297 = vmul.f32 %v2292, 0.17677669
        %v2298 = vadd.f32 %v2294, %v1515
        %v2299 = vadd.f32 %v2295, %v1516
        %v2300 = vadd.f32 %v2296, %v1517
        %v2301 = vadd.f32 %v2297, %v1518
        %v2302 = vsel %vm1906, %v2298, -inf
        %2303 = vmax.xlane.f32.xlu0 %v2302
        %v2304 = vpop.xlane.xlu0 %2303
        %v2305 = vsel %vm1906, %v2299, -inf
        %2306 = vmax.xlane.f32.xlu0 %v2305
        %v2307 = vpop.xlane.xlu0 %2306
        %v2308 = vsel %vm1906, %v2300, -inf
        %2309 = vmax.xlane.f32.xlu0 %v2308
        %v2310 = vpop.xlane.xlu0 %2309
        %v2311 = vsel %vm1906, %v2301, -inf
        %2312 = vmax.xlane.f32.xlu0 %v2311
        %v2313 = vpop.xlane.xlu0 %2312
        %v2314 = vsub.f32 %v2298, %v2304
        %v2315 = vsub.f32 %v2299, %v2307
        %v2316 = vsub.f32 %v2300, %v2310
        %v2317 = vsub.f32 %v2301, %v2313
        %v2318 = vmul.f32 %v2314, 1.442695
        %v2319 = vpow.pop %v2318
        %v2320 = vmul.f32 %v2315, 1.442695
        %v2321 = vpow.pop %v2320
        %v2322 = vmul.f32 %v2316, 1.442695
        %v2323 = vpow.pop %v2322
        %v2324 = vmul.f32 %v2317, 1.442695
        %v2325 = vpow.pop %v2324
        %v2326 = vsel %vm1906, %v2319, 0.0
        %2327 = vadd.xlane.f32.xlu0 %v2326
        %v2328 = vpop.xlane.xlu0 %2327
        %v2329 = vsel %vm1906, %v2321, 0.0
        %2330 = vadd.xlane.f32.xlu0 %v2329
        %v2331 = vpop.xlane.xlu0 %2330
        %v2332 = vsel %vm1906, %v2323, 0.0
        %2333 = vadd.xlane.f32.xlu0 %v2332
        %v2334 = vpop.xlane.xlu0 %2333
        %v2335 = vsel %vm1906, %v2325, 0.0
        %2336 = vadd.xlane.f32.xlu0 %v2335
        %v2337 = vpop.xlane.xlu0 %2336
        %v2338 = vrcp.pop %v2328
        %v2339 = vrcp.pop %v2331
        %v2340 = vrcp.pop %v2334
        %v2341 = vrcp.pop %v2337
        %v2342 = vmul.f32 %v2319, %v2338
        %v2343 = vmul.f32 %v2321, %v2339
        %v2344 = vmul.f32 %v2323, %v2340
        %v2345 = vmul.f32 %v2325, %v2341
        %v2346 = vpack.c.bf16 %v2342, %v2342
        %v2347 = vpack.c.bf16 %v2343, %v2343
        %v2348 = vpack.c.bf16 %v2344, %v2344
        %v2349 = vpack.c.bf16 %v2345, %v2345
        %v2354 = vunpack.c.l.b16 %v2346
        %v2355 = vunpack.c.l.b16 %v2347
        %v2356 = vunpack.c.l.b16 %v2348
        %v2357 = vunpack.c.l.b16 %v2349
        %v2358 = vpack.c.b16 %v2355, %v2354
        %v2359 = vpack.c.b16 %v2357, %v2356
        %2360 = vrot.lane.b32.xlu0 %v2012, 64
        %v2361 = vpop.permute.xlu0 %2360
        %2362 = vrot.lane.b32.xlu0 %v2013, 64
        %v2363 = vpop.permute.xlu0 %2362
        %v2367 = vsel %vm1906, %v2358, 0
        %v2370 = vsel %vm1906, %v2359, 0
        %2372 = vmatpush.bf16.msra.mxu0 0
        %2373 = vmatpush.bf16.msra.mxu0 0
        %2374 = vmatpush.bf16.msra.mxu0 0
        %2375 = vmatpush.bf16.msra.mxu0 0
        %2376 = vmatpush.bf16.msra.mxu0 0
        %2377 = vmatpush.bf16.msra.mxu0 0
        %2378 = vmatpush.bf16.msra.mxu0 %v2363
        %2379 = vmatpush.bf16.msra.mxu0 %v2361
        %2380 = vmatmul.bf16.gmra.mxu0 %v2367
        %v2381 = vpop.f32.mrf.mxu0
        %v2382 = vadd.f32 0.0, %v2381
        %v2383 = vpop.f32.mrf.mxu0
        %v2384 = vadd.f32 0.0, %v2383
        %2385 = vmatmul.bf16.gmra.mxu0 %v2370
        %v2386 = vpop.f32.mrf.mxu0
        %v2387 = vadd.f32 0.0, %v2386
        %v2388 = vpop.f32.mrf.mxu0
        %v2389 = vadd.f32 0.0, %v2388
        %2390 = vdwg.mxu0
        %v2391 = vpack.c.bf16 %v2384, %v2382
        %v2392 = vpack.c.bf16 %v2389, %v2387
        %v2397 = vunpack.c.l.b16 %v1866
        %v2398 = vunpack.c.l.b16 %v1867
        %v2399 = vunpack.c.l.b16 %v1868
        %v2400 = vunpack.c.l.b16 %v1869
        %v2401 = vpack.c.b16 %v2398, %v2397
        %v2402 = vpack.c.b16 %v2400, %v2399
        %v2406 = vsel %vm1906, %v2391, 0
        %v2409 = vsel %vm1906, %v2392, 0
        %2411 = vmatpush.bf16.msra.mxu0 0
        %2412 = vmatpush.bf16.msra.mxu0 0
        %2413 = vmatpush.bf16.msra.mxu0 0
        %2414 = vmatpush.bf16.msra.mxu0 0
        %2415 = vmatpush.bf16.msra.mxu0 0
        %2416 = vmatpush.bf16.msra.mxu0 0
        %2417 = vmatpush.bf16.msra.mxu0 %v2402
        %2418 = vmatpush.bf16.msra.mxu0 %v2401
        %2419 = vmatmul.bf16.gmra.mxu0 %v2406
        %v2420 = vpop.f32.mrf.mxu0
        %v2421 = vadd.f32 0.0, %v2420
        %v2422 = vpop.f32.mrf.mxu0
        %v2423 = vadd.f32 0.0, %v2422
        %2424 = vmatmul.bf16.gmra.mxu0 %v2409
        %v2425 = vpop.f32.mrf.mxu0
        %v2426 = vadd.f32 0.0, %v2425
        %v2427 = vpop.f32.mrf.mxu0
        %v2428 = vadd.f32 0.0, %v2427
        %2429 = vdwg.mxu0
        %v2430 = vadd.f32 %v2246, %v2421
        %v2431 = vadd.f32 %v2248, %v2423
        %v2432 = vadd.f32 %v2251, %v2426
        %v2433 = vadd.f32 %v2253, %v2428
        %2434 = vrot.lane.b32.xlu0 %v1894, 32
        %v2435 = vpop.permute.xlu0 %2434
        %2436 = vrot.lane.b32.xlu0 %v1895, 32
        %v2437 = vpop.permute.xlu0 %2436
        %2438 = vrot.lane.b32.xlu0 %v1904, 32
        %v2439 = vpop.permute.xlu0 %2438
        %2440 = vrot.lane.b32.xlu0 %v1905, 32
        %v2441 = vpop.permute.xlu0 %2440
        %v2443 = vsel %vm1906, %v2435, 0
        %v2446 = vsel %vm1906, %v2437, 0
        %v2449 = vsel %vm1906, %v2439, 0
        %v2452 = vsel %vm1906, %v2441, 0
        %2454 = vmatpush.bf16.xpose.msra.mxu0 0
        %2455 = vmatpush.bf16.xpose.msra.mxu0 0
        %2456 = vmatpush.bf16.xpose.msra.mxu0 0
        %2457 = vmatpush.bf16.xpose.msra.mxu0 0
        %2458 = vmatpush.bf16.xpose.msra.mxu0 0
        %2459 = vmatpush.bf16.xpose.msra.mxu0 0
        %2460 = vmatpush.bf16.xpose.msra.mxu0 %v2452
        %2461 = vmatpush.bf16.xpose.msra.mxu0 %v2449
        %2462 = vmatmul.bf16.gmra.mxu0 %v2443
        %v2463 = vpop.f32.mrf.mxu0
        %v2464 = vadd.f32 0.0, %v2463
        %v2465 = vpop.f32.mrf.mxu0
        %v2466 = vadd.f32 0.0, %v2465
        %2467 = vmatmul.bf16.gmra.mxu0 %v2446
        %v2468 = vpop.f32.mrf.mxu0
        %v2469 = vadd.f32 0.0, %v2468
        %v2470 = vpop.f32.mrf.mxu0
        %v2471 = vadd.f32 0.0, %v2470
        %2472 = vdwg.mxu0
        %v2473 = vmul.f32 %v2464, 0.17677669
        %v2474 = vmul.f32 %v2466, 0.17677669
        %v2475 = vmul.f32 %v2469, 0.17677669
        %v2476 = vmul.f32 %v2471, 0.17677669
        %v2477 = vadd.f32 %v2473, %v1515
        %v2478 = vadd.f32 %v2474, %v1516
        %v2479 = vadd.f32 %v2475, %v1517
        %v2480 = vadd.f32 %v2476, %v1518
        %v2481 = vsel %vm1906, %v2477, -inf
        %2482 = vmax.xlane.f32.xlu0 %v2481
        %v2483 = vpop.xlane.xlu0 %2482
        %v2484 = vsel %vm1906, %v2478, -inf
        %2485 = vmax.xlane.f32.xlu0 %v2484
        %v2486 = vpop.xlane.xlu0 %2485
        %v2487 = vsel %vm1906, %v2479, -inf
        %2488 = vmax.xlane.f32.xlu0 %v2487
        %v2489 = vpop.xlane.xlu0 %2488
        %v2490 = vsel %vm1906, %v2480, -inf
        %2491 = vmax.xlane.f32.xlu0 %v2490
        %v2492 = vpop.xlane.xlu0 %2491
        %v2493 = vsub.f32 %v2477, %v2483
        %v2494 = vsub.f32 %v2478, %v2486
        %v2495 = vsub.f32 %v2479, %v2489
        %v2496 = vsub.f32 %v2480, %v2492
        %v2497 = vmul.f32 %v2493, 1.442695
        %v2498 = vpow.pop %v2497
        %v2499 = vmul.f32 %v2494, 1.442695
        %v2500 = vpow.pop %v2499
        %v2501 = vmul.f32 %v2495, 1.442695
        %v2502 = vpow.pop %v2501
        %v2503 = vmul.f32 %v2496, 1.442695
        %v2504 = vpow.pop %v2503
        %v2505 = vsel %vm1906, %v2498, 0.0
        %2506 = vadd.xlane.f32.xlu0 %v2505
        %v2507 = vpop.xlane.xlu0 %2506
        %v2508 = vsel %vm1906, %v2500, 0.0
        %2509 = vadd.xlane.f32.xlu0 %v2508
        %v2510 = vpop.xlane.xlu0 %2509
        %v2511 = vsel %vm1906, %v2502, 0.0
        %2512 = vadd.xlane.f32.xlu0 %v2511
        %v2513 = vpop.xlane.xlu0 %2512
        %v2514 = vsel %vm1906, %v2504, 0.0
        %2515 = vadd.xlane.f32.xlu0 %v2514
        %v2516 = vpop.xlane.xlu0 %2515
        %v2517 = vrcp.pop %v2507
        %v2518 = vrcp.pop %v2510
        %v2519 = vrcp.pop %v2513
        %v2520 = vrcp.pop %v2516
        %v2521 = vmul.f32 %v2498, %v2517
        %v2522 = vmul.f32 %v2500, %v2518
        %v2523 = vmul.f32 %v2502, %v2519
        %v2524 = vmul.f32 %v2504, %v2520
        %v2525 = vpack.c.bf16 %v2521, %v2521
        %v2526 = vpack.c.bf16 %v2522, %v2522
        %v2527 = vpack.c.bf16 %v2523, %v2523
        %v2528 = vpack.c.bf16 %v2524, %v2524
        %v2533 = vunpack.c.l.b16 %v2525
        %v2534 = vunpack.c.l.b16 %v2526
        %v2535 = vunpack.c.l.b16 %v2527
        %v2536 = vunpack.c.l.b16 %v2528
        %v2537 = vpack.c.b16 %v2534, %v2533
        %v2538 = vpack.c.b16 %v2536, %v2535
        %2539 = vrot.lane.b32.xlu0 %v2012, 32
        %v2540 = vpop.permute.xlu0 %2539
        %2541 = vrot.lane.b32.xlu0 %v2013, 32
        %v2542 = vpop.permute.xlu0 %2541
        %v2546 = vsel %vm1906, %v2537, 0
        %v2549 = vsel %vm1906, %v2538, 0
        %2551 = vmatpush.bf16.msra.mxu0 0
        %2552 = vmatpush.bf16.msra.mxu0 0
        %2553 = vmatpush.bf16.msra.mxu0 0
        %2554 = vmatpush.bf16.msra.mxu0 0
        %2555 = vmatpush.bf16.msra.mxu0 0
        %2556 = vmatpush.bf16.msra.mxu0 0
        %2557 = vmatpush.bf16.msra.mxu0 %v2542
        %2558 = vmatpush.bf16.msra.mxu0 %v2540
        %2559 = vmatmul.bf16.gmra.mxu0 %v2546
        %v2560 = vpop.f32.mrf.mxu0
        %v2561 = vadd.f32 0.0, %v2560
        %v2562 = vpop.f32.mrf.mxu0
        %v2563 = vadd.f32 0.0, %v2562
        %2564 = vmatmul.bf16.gmra.mxu0 %v2549
        %v2565 = vpop.f32.mrf.mxu0
        %v2566 = vadd.f32 0.0, %v2565
        %v2567 = vpop.f32.mrf.mxu0
        %v2568 = vadd.f32 0.0, %v2567
        %2569 = vdwg.mxu0
        %v2570 = vpack.c.bf16 %v2563, %v2561
        %v2571 = vpack.c.bf16 %v2568, %v2566
        %v2576 = vunpack.c.l.b16 %v1870
        %v2577 = vunpack.c.l.b16 %v1871
        %v2578 = vunpack.c.l.b16 %v1872
        %v2579 = vunpack.c.l.b16 %v1873
        %v2580 = vpack.c.b16 %v2577, %v2576
        %v2581 = vpack.c.b16 %v2579, %v2578
        %v2585 = vsel %vm1906, %v2570, 0
        %v2588 = vsel %vm1906, %v2571, 0
        %2590 = vmatpush.bf16.msra.mxu0 0
        %2591 = vmatpush.bf16.msra.mxu0 0
        %2592 = vmatpush.bf16.msra.mxu0 0
        %2593 = vmatpush.bf16.msra.mxu0 0
        %2594 = vmatpush.bf16.msra.mxu0 0
        %2595 = vmatpush.bf16.msra.mxu0 0
        %2596 = vmatpush.bf16.msra.mxu0 %v2581
        %2597 = vmatpush.bf16.msra.mxu0 %v2580
        %2598 = vmatmul.bf16.gmra.mxu0 %v2585
        %v2599 = vpop.f32.mrf.mxu0
        %v2600 = vadd.f32 0.0, %v2599
        %v2601 = vpop.f32.mrf.mxu0
        %v2602 = vadd.f32 0.0, %v2601
        %2603 = vmatmul.bf16.gmra.mxu0 %v2588
        %v2604 = vpop.f32.mrf.mxu0
        %v2605 = vadd.f32 0.0, %v2604
        %v2606 = vpop.f32.mrf.mxu0
        %v2607 = vadd.f32 0.0, %v2606
        %2608 = vdwg.mxu0
        %v2609 = vadd.f32 %v2430, %v2600
        %v2610 = vadd.f32 %v2431, %v2602
        %v2611 = vadd.f32 %v2432, %v2605
        %v2612 = vadd.f32 %v2433, %v2607
        %v2613 = vadd.f32 %v1511, %v2609
        %v2614 = vadd.f32 %v1512, %v2610
        %v2615 = vadd.f32 %v1513, %v2611
        %v2616 = vadd.f32 %v1514, %v2612
        %v2617 = vld [vmem:[%s1524 + $0x5] sm:$0x1]
        %v2619 = vperm.slane %v2617, 0
        %v2621 = vadd.f32 %v2613, %v2619
        %v2622 = vadd.f32 %v2614, %v2619
        %v2623 = vadd.f32 %v2615, %v2619
        %v2624 = vadd.f32 %v2616, %v2619
        %v2625 = vld [vmem:[%s1524 + $0x6] sm:$0x1]
        %v2626 = vld [vmem:[%s1524 + $0x7] sm:$0x1]
        %2627 = vadd.xlane.f32.xlu0 %v2621
        %v2628 = vpop.xlane.xlu0 %2627
        %2629 = vadd.xlane.f32.xlu0 %v2622
        %v2630 = vpop.xlane.xlu0 %2629
        %2631 = vadd.xlane.f32.xlu0 %v2623
        %v2632 = vpop.xlane.xlu0 %2631
        %2633 = vadd.xlane.f32.xlu0 %v2624
        %v2634 = vpop.xlane.xlu0 %2633
        %v2635 = vmul.f32 %v2628, %v1541
        %v2636 = vmul.f32 %v2630, %v1541
        %v2637 = vmul.f32 %v2632, %v1541
        %v2638 = vmul.f32 %v2634, %v1541
        %v2639 = vsub.f32 %v2621, %v2635
        %v2640 = vsub.f32 %v2622, %v2636
        %v2641 = vsub.f32 %v2623, %v2637
        %v2642 = vsub.f32 %v2624, %v2638
        %v2643 = vmul.f32 %v2639, %v2639
        %v2644 = vmul.f32 %v2640, %v2640
        %v2645 = vmul.f32 %v2641, %v2641
        %v2646 = vmul.f32 %v2642, %v2642
        %2647 = vadd.xlane.f32.xlu0 %v2643
        %v2648 = vpop.xlane.xlu0 %2647
        %2649 = vadd.xlane.f32.xlu0 %v2644
        %v2650 = vpop.xlane.xlu0 %2649
        %2651 = vadd.xlane.f32.xlu0 %v2645
        %v2652 = vpop.xlane.xlu0 %2651
        %2653 = vadd.xlane.f32.xlu0 %v2646
        %v2654 = vpop.xlane.xlu0 %2653
        %v2655 = vmul.f32 %v2648, %v1541
        %v2656 = vmul.f32 %v2650, %v1541
        %v2657 = vmul.f32 %v2652, %v1541
        %v2658 = vmul.f32 %v2654, %v1541
        %v2659 = vadd.f32 %v2655, 1e-05
        %v2660 = vadd.f32 %v2656, 1e-05
        %v2661 = vadd.f32 %v2657, 1e-05
        %v2662 = vadd.f32 %v2658, 1e-05
        %v2663 = vrsqrt.pop %v2659
        %v2664 = vmul.f32 %v2663, %v2659
        %v2665 = vmul.f32 %v2664, %v2663
        %v2666 = vmul.f32 0.5, %v2665
        %v2667 = vsub.f32 1.5, %v2666
        %v2668 = vmul.f32 %v2663, %v2667
        %vm2669 = vweird.f32 %v2659
        %vm2670 = vweird.f32 %v2663
        %vm2671 = vmor %vm2669, %vm2670
        %v2672 = vsel %vm2671, %v2663, %v2668
        %v2673 = vrsqrt.pop %v2660
        %v2674 = vmul.f32 %v2673, %v2660
        %v2675 = vmul.f32 %v2674, %v2673
        %v2676 = vmul.f32 0.5, %v2675
        %v2677 = vsub.f32 1.5, %v2676
        %v2678 = vmul.f32 %v2673, %v2677
        %vm2679 = vweird.f32 %v2660
        %vm2680 = vweird.f32 %v2673
        %vm2681 = vmor %vm2679, %vm2680
        %v2682 = vsel %vm2681, %v2673, %v2678
        %v2683 = vrsqrt.pop %v2661
        %v2684 = vmul.f32 %v2683, %v2661
        %v2685 = vmul.f32 %v2684, %v2683
        %v2686 = vmul.f32 0.5, %v2685
        %v2687 = vsub.f32 1.5, %v2686
        %v2688 = vmul.f32 %v2683, %v2687
        %vm2689 = vweird.f32 %v2661
        %vm2690 = vweird.f32 %v2683
        %vm2691 = vmor %vm2689, %vm2690
        %v2692 = vsel %vm2691, %v2683, %v2688
        %v2693 = vrsqrt.pop %v2662
        %v2694 = vmul.f32 %v2693, %v2662
        %v2695 = vmul.f32 %v2694, %v2693
        %v2696 = vmul.f32 0.5, %v2695
        %v2697 = vsub.f32 1.5, %v2696
        %v2698 = vmul.f32 %v2693, %v2697
        %vm2699 = vweird.f32 %v2662
        %vm2700 = vweird.f32 %v2693
        %vm2701 = vmor %vm2699, %vm2700
        %v2702 = vsel %vm2701, %v2693, %v2698
        %v2703 = vmul.f32 %v2639, %v2672
        %v2704 = vmul.f32 %v2640, %v2682
        %v2705 = vmul.f32 %v2641, %v2692
        %v2706 = vmul.f32 %v2642, %v2702
        %v2708 = vperm.slane %v2625, 0
        %v2710 = vmul.f32 %v2703, %v2708
        %v2711 = vmul.f32 %v2704, %v2708
        %v2712 = vmul.f32 %v2705, %v2708
        %v2713 = vmul.f32 %v2706, %v2708
        %v2715 = vperm.slane %v2626, 0
        %v2717 = vadd.f32 %v2710, %v2715
        %v2718 = vadd.f32 %v2711, %v2715
        %v2719 = vadd.f32 %v2712, %v2715
        %v2720 = vadd.f32 %v2713, %v2715
        %v2721 = vpack.c.bf16 %v2718, %v2717
        %v2722 = vpack.c.bf16 %v2720, %v2719
        %v2723 = vld [vmem:[%s1632 + $0x10] sm:$0xf]
        %v2724 = vld [vmem:[%s1632 + $0x40] sm:$0xf]
        %v2725 = vld [vmem:[%s1632 + $0x70] sm:$0xf]
        %v2726 = vld [vmem:[%s1632 + $0xa0] sm:$0xf]
        %v2727 = vld [vmem:[%s1632 + $0xd0] sm:$0xf]
        %v2728 = vld [vmem:[%s1632 + $0x100] sm:$0xf]
        %v2729 = vld [vmem:[%s1632 + $0x130] sm:$0xf]
        %v2730 = vld [vmem:[%s1632 + $0x160] sm:$0xf]
        %v2731 = vld [vmem:[%s1632 + $0x190] sm:$0xf]
        %v2732 = vld [vmem:[%s1632 + $0x1c0] sm:$0xf]
        %v2733 = vld [vmem:[%s1632 + $0x1f0] sm:$0xf]
        %v2734 = vld [vmem:[%s1632 + $0x220] sm:$0xf]
        %v2735 = vld [vmem:[%s1632 + $0x250] sm:$0xf]
        %v2736 = vld [vmem:[%s1632 + $0x280] sm:$0xf]
        %v2737 = vld [vmem:[%s1632 + $0x2b0] sm:$0xf]
        %v2738 = vld [vmem:[%s1632 + $0x2e0] sm:$0xf]
        %v2739 = vld [vmem:[%s1524 + $0x8] sm:$0x1]
        %v2741 = vperm.slane %v2739, 0
        %v2759 = vunpack.c.l.b16 %v2723
        %v2760 = vunpack.c.l.b16 %v2724
        %v2761 = vunpack.c.l.b16 %v2725
        %v2762 = vunpack.c.l.b16 %v2726
        %v2763 = vunpack.c.l.b16 %v2727
        %v2764 = vunpack.c.l.b16 %v2728
        %v2765 = vunpack.c.l.b16 %v2729
        %v2766 = vunpack.c.l.b16 %v2730
        %v2767 = vunpack.c.l.b16 %v2731
        %v2768 = vunpack.c.l.b16 %v2732
        %v2769 = vunpack.c.l.b16 %v2733
        %v2770 = vunpack.c.l.b16 %v2734
        %v2771 = vunpack.c.l.b16 %v2735
        %v2772 = vunpack.c.l.b16 %v2736
        %v2773 = vunpack.c.l.b16 %v2737
        %v2774 = vunpack.c.l.b16 %v2738
        %v2775 = vpack.c.b16 %v2760, %v2759
        %v2776 = vpack.c.b16 %v2762, %v2761
        %v2777 = vpack.c.b16 %v2764, %v2763
        %v2778 = vpack.c.b16 %v2766, %v2765
        %v2779 = vpack.c.b16 %v2768, %v2767
        %v2780 = vpack.c.b16 %v2770, %v2769
        %v2781 = vpack.c.b16 %v2772, %v2771
        %v2782 = vpack.c.b16 %v2774, %v2773
        %2791 = vmatpush.bf16.msra.mxu0 %v2782
        %2792 = vmatpush.bf16.msra.mxu0 %v2781
        %2793 = vmatpush.bf16.msra.mxu0 %v2780
        %2794 = vmatpush.bf16.msra.mxu0 %v2779
        %2795 = vmatpush.bf16.msra.mxu0 %v2778
        %2796 = vmatpush.bf16.msra.mxu0 %v2777
        %2797 = vmatpush.bf16.msra.mxu0 %v2776
        %2798 = vmatpush.bf16.msra.mxu0 %v2775
        %2799 = vmatmul.bf16.gmra.mxu0 %v2721
        %v2800 = vpop.f32.mrf.mxu0
        %v2801 = vadd.f32 %v2741, %v2800
        %v2802 = vpop.f32.mrf.mxu0
        %v2803 = vadd.f32 %v2741, %v2802
        %2804 = vmatmul.bf16.gmra.mxu0 %v2722
        %v2805 = vpop.f32.mrf.mxu0
        %v2806 = vadd.f32 %v2741, %v2805
        %v2807 = vpop.f32.mrf.mxu0
        %v2808 = vadd.f32 %v2741, %v2807
        %2809 = vdwg.mxu0
        %v2810 = vld [vmem:[#allocation3] sm:$0xff]
        %v2811 = vld [vmem:[#allocation3 + $0x8] sm:$0xff]
        %v2812 = vld [vmem:[#allocation3 + $0x10] sm:$0xff]
        %v2813 = vpack.c.bf16 %v2811, %v2810
        %v2814 = vpack.c.bf16 %v2812, %v2812
        %v2815 = vld [vmem:[%s1632 + $0x14] sm:$0xff]
        %v2816 = vld [vmem:[%s1632 + $0x44] sm:$0xff]
        %v2817 = vld [vmem:[%s1632 + $0x74] sm:$0xff]
        %v2818 = vld [vmem:[%s1632 + $0xa4] sm:$0xff]
        %v2819 = vld [vmem:[%s1632 + $0xd4] sm:$0xff]
        %v2820 = vld [vmem:[%s1632 + $0x104] sm:$0xff]
        %v2821 = vld [vmem:[%s1632 + $0x134] sm:$0xff]
        %v2822 = vld [vmem:[%s1632 + $0x164] sm:$0xff]
        %v2823 = vld [vmem:[%s1632 + $0x194] sm:$0xff]
        %v2824 = vld [vmem:[%s1632 + $0x1c4] sm:$0xff]
        %v2825 = vld [vmem:[%s1632 + $0x1f4] sm:$0xff]
        %v2826 = vld [vmem:[%s1632 + $0x224] sm:$0xff]
        %v2827 = vld [vmem:[%s1632 + $0x254] sm:$0xff]
        %v2828 = vld [vmem:[%s1632 + $0x284] sm:$0xff]
        %v2829 = vld [vmem:[%s1632 + $0x2b4] sm:$0xff]
        %v2830 = vld [vmem:[%s1632 + $0x2e4] sm:$0xff]
        %v2831 = vld [vmem:[%s1524 + $0x9] sm:$0x3]
        %v2833 = vperm.slane %v2831, 0
        %v2834 = vperm.slane %v2831, 1
        %v2853 = vunpack.c.l.b16 %v2815
        %v2854 = vunpack.c.h.b16 %v2815
        %v2855 = vunpack.c.l.b16 %v2816
        %v2856 = vunpack.c.h.b16 %v2816
        %v2857 = vunpack.c.l.b16 %v2817
        %v2858 = vunpack.c.h.b16 %v2817
        %v2859 = vunpack.c.l.b16 %v2818
        %v2860 = vunpack.c.h.b16 %v2818
        %v2861 = vunpack.c.l.b16 %v2819
        %v2862 = vunpack.c.h.b16 %v2819
        %v2863 = vunpack.c.l.b16 %v2820
        %v2864 = vunpack.c.h.b16 %v2820
        %v2865 = vunpack.c.l.b16 %v2821
        %v2866 = vunpack.c.h.b16 %v2821
        %v2867 = vunpack.c.l.b16 %v2822
        %v2868 = vunpack.c.h.b16 %v2822
        %v2869 = vunpack.c.l.b16 %v2823
        %v2870 = vunpack.c.h.b16 %v2823
        %v2871 = vunpack.c.l.b16 %v2824
        %v2872 = vunpack.c.h.b16 %v2824
        %v2873 = vunpack.c.l.b16 %v2825
        %v2874 = vunpack.c.h.b16 %v2825
        %v2875 = vunpack.c.l.b16 %v2826
        %v2876 = vunpack.c.h.b16 %v2826
        %v2877 = vunpack.c.l.b16 %v2827
        %v2878 = vunpack.c.h.b16 %v2827
        %v2879 = vunpack.c.l.b16 %v2828
        %v2880 = vunpack.c.h.b16 %v2828
        %v2881 = vunpack.c.l.b16 %v2829
        %v2882 = vunpack.c.h.b16 %v2829
        %v2883 = vunpack.c.l.b16 %v2830
        %v2884 = vunpack.c.h.b16 %v2830
        %v2885 = vpack.c.b16 %v2855, %v2853
        %v2886 = vpack.c.b16 %v2856, %v2854
        %v2887 = vpack.c.b16 %v2859, %v2857
        %v2888 = vpack.c.b16 %v2860, %v2858
        %v2889 = vpack.c.b16 %v2863, %v2861
        %v2890 = vpack.c.b16 %v2864, %v2862
        %v2891 = vpack.c.b16 %v2867, %v2865
        %v2892 = vpack.c.b16 %v2868, %v2866
        %v2893 = vpack.c.b16 %v2871, %v2869
        %v2894 = vpack.c.b16 %v2872, %v2870
        %v2895 = vpack.c.b16 %v2875, %v2873
        %v2896 = vpack.c.b16 %v2876, %v2874
        %v2897 = vpack.c.b16 %v2879, %v2877
        %v2898 = vpack.c.b16 %v2880, %v2878
        %v2899 = vpack.c.b16 %v2883, %v2881
        %v2900 = vpack.c.b16 %v2884, %v2882
        %2917 = vmatpush.bf16.msra.mxu0 %v2899
        %2918 = vmatpush.bf16.msra.mxu0 %v2897
        %2919 = vmatpush.bf16.msra.mxu0 %v2895
        %2920 = vmatpush.bf16.msra.mxu0 %v2893
        %2921 = vmatpush.bf16.msra.mxu0 %v2891
        %2922 = vmatpush.bf16.msra.mxu0 %v2889
        %2923 = vmatpush.bf16.msra.mxu0 %v2887
        %2924 = vmatpush.bf16.msra.mxu0 %v2885
        %2925 = vmatmul.bf16.gmra.mxu0 %v2813
        %v2926 = vpop.f32.mrf.mxu0
        %v2927 = vadd.f32 %v2833, %v2926
        %v2928 = vpop.f32.mrf.mxu0
        %v2929 = vadd.f32 %v2833, %v2928
        %2930 = vmatmul.bf16.gmra.mxu0 %v2814
        %v2931 = vpop.f32.mrf.mxu0
        %v2932 = vadd.f32 %v2833, %v2931
        %v2933 = vpop.f32.mrf.mxu0
        %2934 = vdwg.mxu0
        %2935 = vmatpush.bf16.msra.mxu0 %v2900
        %2936 = vmatpush.bf16.msra.mxu0 %v2898
        %2937 = vmatpush.bf16.msra.mxu0 %v2896
        %2938 = vmatpush.bf16.msra.mxu0 %v2894
        %2939 = vmatpush.bf16.msra.mxu0 %v2892
        %2940 = vmatpush.bf16.msra.mxu0 %v2890
        %2941 = vmatpush.bf16.msra.mxu0 %v2888
        %2942 = vmatpush.bf16.msra.mxu0 %v2886
        %2943 = vmatmul.bf16.gmra.mxu0 %v2813
        %v2944 = vpop.f32.mrf.mxu0
        %v2945 = vadd.f32 %v2834, %v2944
        %v2946 = vpop.f32.mrf.mxu0
        %v2947 = vadd.f32 %v2834, %v2946
        %2948 = vmatmul.bf16.gmra.mxu0 %v2814
        %v2949 = vpop.f32.mrf.mxu0
        %v2950 = vadd.f32 %v2834, %v2949
        %v2951 = vpop.f32.mrf.mxu0
        %2952 = vdwg.mxu0
        %v2953 = vld [vmem:[%s1632 + $0x1c] sm:$0xf]
        %v2954 = vld [vmem:[%s1632 + $0x4c] sm:$0xf]
        %v2955 = vld [vmem:[%s1632 + $0x7c] sm:$0xf]
        %v2956 = vld [vmem:[%s1632 + $0xac] sm:$0xf]
        %v2957 = vld [vmem:[%s1632 + $0xdc] sm:$0xf]
        %v2958 = vld [vmem:[%s1632 + $0x10c] sm:$0xf]
        %v2959 = vld [vmem:[%s1632 + $0x13c] sm:$0xf]
        %v2960 = vld [vmem:[%s1632 + $0x16c] sm:$0xf]
        %v2961 = vld [vmem:[%s1632 + $0x19c] sm:$0xf]
        %v2962 = vld [vmem:[%s1632 + $0x1cc] sm:$0xf]
        %v2963 = vld [vmem:[%s1632 + $0x1fc] sm:$0xf]
        %v2964 = vld [vmem:[%s1632 + $0x22c] sm:$0xf]
        %v2965 = vld [vmem:[%s1632 + $0x25c] sm:$0xf]
        %v2966 = vld [vmem:[%s1632 + $0x28c] sm:$0xf]
        %v2967 = vld [vmem:[%s1632 + $0x2bc] sm:$0xf]
        %v2968 = vld [vmem:[%s1632 + $0x2ec] sm:$0xf]
        %v2969 = vpack.c.bf16 %v2801, %v2801
        %v2970 = vpack.c.bf16 %v2803, %v2803
        %v2971 = vpack.c.bf16 %v2806, %v2806
        %v2972 = vpack.c.bf16 %v2808, %v2808
        %v2973 = vpack.c.bf16 %v2927, %v2927
        %v2974 = vpack.c.bf16 %v2929, %v2929
        %v2975 = vpack.c.bf16 %v2932, %v2932
        %v2976 = vpack.c.bf16 %v2945, %v2945
        %v2977 = vpack.c.bf16 %v2947, %v2947
        %v2978 = vpack.c.bf16 %v2950, %v2950
        %v2983 = vunpack.c.l.b16 %v2969
        %v2984 = vunpack.c.l.b16 %v2970
        %v2985 = vunpack.c.l.b16 %v2971
        %v2986 = vunpack.c.l.b16 %v2972
        %v2987 = vpack.c.b16 %v2984, %v2983
        %v2988 = vpack.c.b16 %v2986, %v2985
        %v2992 = vunpack.c.l.b16 %v2973
        %v2993 = vunpack.c.l.b16 %v2974
        %v2994 = vunpack.c.l.b16 %v2975
        %v2995 = vpack.c.b16 %v2993, %v2992
        %v2996 = vpack.c.b16 %v2994, %v2994
        %v2998 = vsel %vm1906, %v2987, 0
        %v3001 = vsel %vm1906, %v2988, 0
        %v3004 = vsel %vm1906, %v2995, 0
        %v3007 = vsel %vm1906, %v2996, 0
        %3009 = vmatpush.bf16.xpose.msra.mxu0 0
        %3010 = vmatpush.bf16.xpose.msra.mxu0 0
        %3011 = vmatpush.bf16.xpose.msra.mxu0 0
        %3012 = vmatpush.bf16.xpose.msra.mxu0 0
        %3013 = vmatpush.bf16.xpose.msra.mxu0 0
        %3014 = vmatpush.bf16.xpose.msra.mxu0 0
        %3015 = vmatpush.bf16.xpose.msra.mxu0 %v3007
        %3016 = vmatpush.bf16.xpose.msra.mxu0 %v3004
        %3017 = vmatmul.bf16.gmra.mxu0 %v2998
        %v3018 = vpop.f32.mrf.mxu0
        %v3019 = vadd.f32 0.0, %v3018
        %v3020 = vpop.f32.mrf.mxu0
        %v3021 = vadd.f32 0.0, %v3020
        %3022 = vmatmul.bf16.gmra.mxu0 %v3001
        %v3023 = vpop.f32.mrf.mxu0
        %v3024 = vadd.f32 0.0, %v3023
        %v3025 = vpop.f32.mrf.mxu0
        %v3026 = vadd.f32 0.0, %v3025
        %3027 = vdwg.mxu0
        %v3028 = vmul.f32 %v3019, 0.17677669
        %v3029 = vmul.f32 %v3021, 0.17677669
        %v3030 = vmul.f32 %v3024, 0.17677669
        %v3031 = vmul.f32 %v3026, 0.17677669
        %v3032 = vadd.f32 %v3028, %v1519
        %v3033 = vadd.f32 %v3029, %v1520
        %v3034 = vadd.f32 %v3030, %v1521
        %v3035 = vadd.f32 %v3031, %v1522
        %vm3036 = vcmask 195584
        %v3037 = vsel %vm3036, %v3032, -inf
        %3038 = vmax.xlane.f32.xlu0 %v3037
        %v3039 = vpop.xlane.xlu0 %3038
        %v3040 = vsel %vm3036, %v3033, -inf
        %3041 = vmax.xlane.f32.xlu0 %v3040
        %v3042 = vpop.xlane.xlu0 %3041
        %v3043 = vsel %vm3036, %v3034, -inf
        %3044 = vmax.xlane.f32.xlu0 %v3043
        %v3045 = vpop.xlane.xlu0 %3044
        %v3046 = vsel %vm3036, %v3035, -inf
        %3047 = vmax.xlane.f32.xlu0 %v3046
        %v3048 = vpop.xlane.xlu0 %3047
        %v3049 = vsub.f32 %v3032, %v3039
        %v3050 = vsub.f32 %v3033, %v3042
        %v3051 = vsub.f32 %v3034, %v3045
        %v3052 = vsub.f32 %v3035, %v3048
        %v3053 = vmul.f32 %v3049, 1.442695
        %v3054 = vpow.pop %v3053
        %v3055 = vmul.f32 %v3050, 1.442695
        %v3056 = vpow.pop %v3055
        %v3057 = vmul.f32 %v3051, 1.442695
        %v3058 = vpow.pop %v3057
        %v3059 = vmul.f32 %v3052, 1.442695
        %v3060 = vpow.pop %v3059
        %v3061 = vsel %vm3036, %v3054, 0.0
        %3062 = vadd.xlane.f32.xlu0 %v3061
        %v3063 = vpop.xlane.xlu0 %3062
        %v3064 = vsel %vm3036, %v3056, 0.0
        %3065 = vadd.xlane.f32.xlu0 %v3064
        %v3066 = vpop.xlane.xlu0 %3065
        %v3067 = vsel %vm3036, %v3058, 0.0
        %3068 = vadd.xlane.f32.xlu0 %v3067
        %v3069 = vpop.xlane.xlu0 %3068
        %v3070 = vsel %vm3036, %v3060, 0.0
        %3071 = vadd.xlane.f32.xlu0 %v3070
        %v3072 = vpop.xlane.xlu0 %3071
        %v3073 = vrcp.pop %v3063
        %v3074 = vrcp.pop %v3066
        %v3075 = vrcp.pop %v3069
        %v3076 = vrcp.pop %v3072
        %v3077 = vmul.f32 %v3054, %v3073
        %v3078 = vmul.f32 %v3056, %v3074
        %v3079 = vmul.f32 %v3058, %v3075
        %v3080 = vmul.f32 %v3060, %v3076
        %v3081 = vpack.c.bf16 %v3077, %v3077
        %v3082 = vpack.c.bf16 %v3078, %v3078
        %v3083 = vpack.c.bf16 %v3079, %v3079
        %v3084 = vpack.c.bf16 %v3080, %v3080
        %v3089 = vunpack.c.l.b16 %v3081
        %v3090 = vunpack.c.l.b16 %v3082
        %v3091 = vunpack.c.l.b16 %v3083
        %v3092 = vunpack.c.l.b16 %v3084
        %v3093 = vpack.c.b16 %v3090, %v3089
        %v3094 = vpack.c.b16 %v3092, %v3091
        %v3098 = vunpack.c.l.b16 %v2976
        %v3099 = vunpack.c.l.b16 %v2977
        %v3100 = vunpack.c.l.b16 %v2978
        %v3101 = vpack.c.b16 %v3099, %v3098
        %v3102 = vpack.c.b16 %v3100, %v3100
        %v3105 = vsel %vm3036, %v3093, 0
        %v3108 = vsel %vm3036, %v3094, 0
        %vm3110 = vcmask 1043456
        %v3112 = vsel %vm3110, %v3102, 0
        %3114 = vmatpush.bf16.msra.mxu0 0
        %3115 = vmatpush.bf16.msra.mxu0 0
        %3116 = vmatpush.bf16.msra.mxu0 0
        %3117 = vmatpush.bf16.msra.mxu0 0
        %3118 = vmatpush.bf16.msra.mxu0 0
        %3119 = vmatpush.bf16.msra.mxu0 0
        %3120 = vmatpush.bf16.msra.mxu0 %v3112
        %3121 = vmatpush.bf16.msra.mxu0 %v3101
        %3122 = vmatmul.bf16.gmra.mxu0 %v3105
        %v3123 = vpop.f32.mrf.mxu0
        %v3124 = vadd.f32 0.0, %v3123
        %v3125 = vpop.f32.mrf.mxu0
        %v3126 = vadd.f32 0.0, %v3125
        %3127 = vmatmul.bf16.gmra.mxu0 %v3108
        %v3128 = vpop.f32.mrf.mxu0
        %v3129 = vadd.f32 0.0, %v3128
        %v3130 = vpop.f32.mrf.mxu0
        %v3131 = vadd.f32 0.0, %v3130
        %3132 = vdwg.mxu0
        %v3133 = vpack.c.bf16 %v3126, %v3124
        %v3134 = vpack.c.bf16 %v3131, %v3129
        %3135 = vrot.lane.b32.xlu0 %v2987, 96
        %v3136 = vpop.permute.xlu0 %3135
        %3137 = vrot.lane.b32.xlu0 %v2988, 96
        %v3138 = vpop.permute.xlu0 %3137
        %3139 = vrot.lane.b32.xlu0 %v2995, 96
        %v3140 = vpop.permute.xlu0 %3139
        %3141 = vrot.lane.b32.xlu0 %v2996, 96
        %v3142 = vpop.permute.xlu0 %3141
        %v3144 = vsel %vm1906, %v3136, 0
        %v3147 = vsel %vm1906, %v3138, 0
        %v3150 = vsel %vm1906, %v3140, 0
        %v3153 = vsel %vm1906, %v3142, 0
        %3155 = vmatpush.bf16.xpose.msra.mxu0 0
        %3156 = vmatpush.bf16.xpose.msra.mxu0 0
        %3157 = vmatpush.bf16.xpose.msra.mxu0 0
        %3158 = vmatpush.bf16.xpose.msra.mxu0 0
        %3159 = vmatpush.bf16.xpose.msra.mxu0 0
        %3160 = vmatpush.bf16.xpose.msra.mxu0 0
        %3161 = vmatpush.bf16.xpose.msra.mxu0 %v3153
        %3162 = vmatpush.bf16.xpose.msra.mxu0 %v3150
        %3163 = vmatmul.bf16.gmra.mxu0 %v3144
        %v3164 = vpop.f32.mrf.mxu0
        %v3165 = vadd.f32 0.0, %v3164
        %v3166 = vpop.f32.mrf.mxu0
        %v3167 = vadd.f32 0.0, %v3166
        %3168 = vmatmul.bf16.gmra.mxu0 %v3147
        %v3169 = vpop.f32.mrf.mxu0
        %v3170 = vadd.f32 0.0, %v3169
        %v3171 = vpop.f32.mrf.mxu0
        %v3172 = vadd.f32 0.0, %v3171
        %3173 = vdwg.mxu0
        %v3174 = vmul.f32 %v3165, 0.17677669
        %v3175 = vmul.f32 %v3167, 0.17677669
        %v3176 = vmul.f32 %v3170, 0.17677669
        %v3177 = vmul.f32 %v3172, 0.17677669
        %v3178 = vadd.f32 %v3174, %v1519
        %v3179 = vadd.f32 %v3175, %v1520
        %v3180 = vadd.f32 %v3176, %v1521
        %v3181 = vadd.f32 %v3177, %v1522
        %v3182 = vsel %vm3036, %v3178, -inf
        %3183 = vmax.xlane.f32.xlu0 %v3182
        %v3184 = vpop.xlane.xlu0 %3183
        %v3185 = vsel %vm3036, %v3179, -inf
        %3186 = vmax.xlane.f32.xlu0 %v3185
        %v3187 = vpop.xlane.xlu0 %3186
        %v3188 = vsel %vm3036, %v3180, -inf
        %3189 = vmax.xlane.f32.xlu0 %v3188
        %v3190 = vpop.xlane.xlu0 %3189
        %v3191 = vsel %vm3036, %v3181, -inf
        %3192 = vmax.xlane.f32.xlu0 %v3191
        %v3193 = vpop.xlane.xlu0 %3192
        %v3194 = vsub.f32 %v3178, %v3184
        %v3195 = vsub.f32 %v3179, %v3187
        %v3196 = vsub.f32 %v3180, %v3190
        %v3197 = vsub.f32 %v3181, %v3193
        %v3198 = vmul.f32 %v3194, 1.442695
        %v3199 = vpow.pop %v3198
        %v3200 = vmul.f32 %v3195, 1.442695
        %v3201 = vpow.pop %v3200
        %v3202 = vmul.f32 %v3196, 1.442695
        %v3203 = vpow.pop %v3202
        %v3204 = vmul.f32 %v3197, 1.442695
        %v3205 = vpow.pop %v3204
        %v3206 = vsel %vm3036, %v3199, 0.0
        %3207 = vadd.xlane.f32.xlu0 %v3206
        %v3208 = vpop.xlane.xlu0 %3207
        %v3209 = vsel %vm3036, %v3201, 0.0
        %3210 = vadd.xlane.f32.xlu0 %v3209
        %v3211 = vpop.xlane.xlu0 %3210
        %v3212 = vsel %vm3036, %v3203, 0.0
        %3213 = vadd.xlane.f32.xlu0 %v3212
        %v3214 = vpop.xlane.xlu0 %3213
        %v3215 = vsel %vm3036, %v3205, 0.0
        %3216 = vadd.xlane.f32.xlu0 %v3215
        %v3217 = vpop.xlane.xlu0 %3216
        %v3218 = vrcp.pop %v3208
        %v3219 = vrcp.pop %v3211
        %v3220 = vrcp.pop %v3214
        %v3221 = vrcp.pop %v3217
        %v3222 = vmul.f32 %v3199, %v3218
        %v3223 = vmul.f32 %v3201, %v3219
        %v3224 = vmul.f32 %v3203, %v3220
        %v3225 = vmul.f32 %v3205, %v3221
        %v3226 = vpack.c.bf16 %v3222, %v3222
        %v3227 = vpack.c.bf16 %v3223, %v3223
        %v3228 = vpack.c.bf16 %v3224, %v3224
        %v3229 = vpack.c.bf16 %v3225, %v3225
        %v3234 = vunpack.c.l.b16 %v3226
        %v3235 = vunpack.c.l.b16 %v3227
        %v3236 = vunpack.c.l.b16 %v3228
        %v3237 = vunpack.c.l.b16 %v3229
        %v3238 = vpack.c.b16 %v3235, %v3234
        %v3239 = vpack.c.b16 %v3237, %v3236
        %3240 = vrot.lane.b32.xlu0 %v3101, 96
        %v3241 = vpop.permute.xlu0 %3240
        %3242 = vrot.lane.b32.xlu0 %v3102, 96
        %v3243 = vpop.permute.xlu0 %3242
        %v3246 = vsel %vm3036, %v3238, 0
        %v3249 = vsel %vm3036, %v3239, 0
        %v3252 = vsel %vm3110, %v3243, 0
        %3254 = vmatpush.bf16.msra.mxu0 0
        %3255 = vmatpush.bf16.msra.mxu0 0
        %3256 = vmatpush.bf16.msra.mxu0 0
        %3257 = vmatpush.bf16.msra.mxu0 0
        %3258 = vmatpush.bf16.msra.mxu0 0
        %3259 = vmatpush.bf16.msra.mxu0 0
        %3260 = vmatpush.bf16.msra.mxu0 %v3252
        %3261 = vmatpush.bf16.msra.mxu0 %v3241
        %3262 = vmatmul.bf16.gmra.mxu0 %v3246
        %v3263 = vpop.f32.mrf.mxu0
        %v3264 = vadd.f32 0.0, %v3263
        %v3265 = vpop.f32.mrf.mxu0
        %v3266 = vadd.f32 0.0, %v3265
        %3267 = vmatmul.bf16.gmra.mxu0 %v3249
        %v3268 = vpop.f32.mrf.mxu0
        %v3269 = vadd.f32 0.0, %v3268
        %v3270 = vpop.f32.mrf.mxu0
        %v3271 = vadd.f32 0.0, %v3270
        %3272 = vdwg.mxu0
        %v3273 = vpack.c.bf16 %v3266, %v3264
        %v3274 = vpack.c.bf16 %v3271, %v3269
        %v3279 = vunpack.c.l.b16 %v2957
        %v3280 = vunpack.c.l.b16 %v2958
        %v3281 = vunpack.c.l.b16 %v2959
        %v3282 = vunpack.c.l.b16 %v2960
        %v3283 = vpack.c.b16 %v3280, %v3279
        %v3284 = vpack.c.b16 %v3282, %v3281
        %v3288 = vsel %vm1906, %v3273, 0
        %v3291 = vsel %vm1906, %v3274, 0
        %3293 = vmatpush.bf16.msra.mxu0 0
        %3294 = vmatpush.bf16.msra.mxu0 0
        %3295 = vmatpush.bf16.msra.mxu0 0
        %3296 = vmatpush.bf16.msra.mxu0 0
        %3297 = vmatpush.bf16.msra.mxu0 0
        %3298 = vmatpush.bf16.msra.mxu0 0
        %3299 = vmatpush.bf16.msra.mxu0 %v3284
        %3300 = vmatpush.bf16.msra.mxu0 %v3283
        %3301 = vmatmul.bf16.gmra.mxu0 %v3288
        %v3302 = vpop.f32.mrf.mxu0
        %v3303 = vadd.f32 0.0, %v3302
        %v3304 = vpop.f32.mrf.mxu0
        %v3305 = vadd.f32 0.0, %v3304
        %3306 = vmatmul.bf16.gmra.mxu0 %v3291
        %v3307 = vpop.f32.mrf.mxu0
        %v3308 = vadd.f32 0.0, %v3307
        %v3309 = vpop.f32.mrf.mxu0
        %v3310 = vadd.f32 0.0, %v3309
        %3311 = vdwg.mxu0
        %v3316 = vunpack.c.l.b16 %v2953
        %v3317 = vunpack.c.l.b16 %v2954
        %v3318 = vunpack.c.l.b16 %v2955
        %v3319 = vunpack.c.l.b16 %v2956
        %v3320 = vpack.c.b16 %v3317, %v3316
        %v3321 = vpack.c.b16 %v3319, %v3318
        %v3325 = vsel %vm1906, %v3133, 0
        %v3328 = vsel %vm1906, %v3134, 0
        %3330 = vmatpush.bf16.msra.mxu0 0
        %3331 = vmatpush.bf16.msra.mxu0 0
        %3332 = vmatpush.bf16.msra.mxu0 0
        %3333 = vmatpush.bf16.msra.mxu0 0
        %3334 = vmatpush.bf16.msra.mxu0 0
        %3335 = vmatpush.bf16.msra.mxu0 0
        %3336 = vmatpush.bf16.msra.mxu0 %v3321
        %3337 = vmatpush.bf16.msra.mxu0 %v3320
        %3338 = vmatmul.bf16.gmra.mxu0 %v3325
        %v3339 = vpop.f32.mrf.mxu0
        %v3340 = vadd.f32 %v3303, %v3339
        %v3341 = vpop.f32.mrf.mxu0
        %v3342 = vadd.f32 %v3305, %v3341
        %3343 = vmatmul.bf16.gmra.mxu0 %v3328
        %v3344 = vpop.f32.mrf.mxu0
        %v3345 = vadd.f32 %v3308, %v3344
        %v3346 = vpop.f32.mrf.mxu0
        %v3347 = vadd.f32 %v3310, %v3346
        %3348 = vdwg.mxu0
        %3349 = vrot.lane.b32.xlu0 %v2987, 64
        %v3350 = vpop.permute.xlu0 %3349
        %3351 = vrot.lane.b32.xlu0 %v2988, 64
        %v3352 = vpop.permute.xlu0 %3351
        %3353 = vrot.lane.b32.xlu0 %v2995, 64
        %v3354 = vpop.permute.xlu0 %3353
        %3355 = vrot.lane.b32.xlu0 %v2996, 64
        %v3356 = vpop.permute.xlu0 %3355
        %v3358 = vsel %vm1906, %v3350, 0
        %v3361 = vsel %vm1906, %v3352, 0
        %v3364 = vsel %vm1906, %v3354, 0
        %v3367 = vsel %vm1906, %v3356, 0
        %3369 = vmatpush.bf16.xpose.msra.mxu0 0
        %3370 = vmatpush.bf16.xpose.msra.mxu0 0
        %3371 = vmatpush.bf16.xpose.msra.mxu0 0
        %3372 = vmatpush.bf16.xpose.msra.mxu0 0
        %3373 = vmatpush.bf16.xpose.msra.mxu0 0
        %3374 = vmatpush.bf16.xpose.msra.mxu0 0
        %3375 = vmatpush.bf16.xpose.msra.mxu0 %v3367
        %3376 = vmatpush.bf16.xpose.msra.mxu0 %v3364
        %3377 = vmatmul.bf16.gmra.mxu0 %v3358
        %v3378 = vpop.f32.mrf.mxu0
        %v3379 = vadd.f32 0.0, %v3378
        %v3380 = vpop.f32.mrf.mxu0
        %v3381 = vadd.f32 0.0, %v3380
        %3382 = vmatmul.bf16.gmra.mxu0 %v3361
        %v3383 = vpop.f32.mrf.mxu0
        %v3384 = vadd.f32 0.0, %v3383
        %v3385 = vpop.f32.mrf.mxu0
        %v3386 = vadd.f32 0.0, %v3385
        %3387 = vdwg.mxu0
        %v3388 = vmul.f32 %v3379, 0.17677669
        %v3389 = vmul.f32 %v3381, 0.17677669
        %v3390 = vmul.f32 %v3384, 0.17677669
        %v3391 = vmul.f32 %v3386, 0.17677669
        %v3392 = vadd.f32 %v3388, %v1519
        %v3393 = vadd.f32 %v3389, %v1520
        %v3394 = vadd.f32 %v3390, %v1521
        %v3395 = vadd.f32 %v3391, %v1522
        %v3396 = vsel %vm3036, %v3392, -inf
        %3397 = vmax.xlane.f32.xlu0 %v3396
        %v3398 = vpop.xlane.xlu0 %3397
        %v3399 = vsel %vm3036, %v3393, -inf
        %3400 = vmax.xlane.f32.xlu0 %v3399
        %v3401 = vpop.xlane.xlu0 %3400
        %v3402 = vsel %vm3036, %v3394, -inf
        %3403 = vmax.xlane.f32.xlu0 %v3402
        %v3404 = vpop.xlane.xlu0 %3403
        %v3405 = vsel %vm3036, %v3395, -inf
        %3406 = vmax.xlane.f32.xlu0 %v3405
        %v3407 = vpop.xlane.xlu0 %3406
        %v3408 = vsub.f32 %v3392, %v3398
        %v3409 = vsub.f32 %v3393, %v3401
        %v3410 = vsub.f32 %v3394, %v3404
        %v3411 = vsub.f32 %v3395, %v3407
        %v3412 = vmul.f32 %v3408, 1.442695
        %v3413 = vpow.pop %v3412
        %v3414 = vmul.f32 %v3409, 1.442695
        %v3415 = vpow.pop %v3414
        %v3416 = vmul.f32 %v3410, 1.442695
        %v3417 = vpow.pop %v3416
        %v3418 = vmul.f32 %v3411, 1.442695
        %v3419 = vpow.pop %v3418
        %v3420 = vsel %vm3036, %v3413, 0.0
        %3421 = vadd.xlane.f32.xlu0 %v3420
        %v3422 = vpop.xlane.xlu0 %3421
        %v3423 = vsel %vm3036, %v3415, 0.0
        %3424 = vadd.xlane.f32.xlu0 %v3423
        %v3425 = vpop.xlane.xlu0 %3424
        %v3426 = vsel %vm3036, %v3417, 0.0
        %3427 = vadd.xlane.f32.xlu0 %v3426
        %v3428 = vpop.xlane.xlu0 %3427
        %v3429 = vsel %vm3036, %v3419, 0.0
        %3430 = vadd.xlane.f32.xlu0 %v3429
        %v3431 = vpop.xlane.xlu0 %3430
        %v3432 = vrcp.pop %v3422
        %v3433 = vrcp.pop %v3425
        %v3434 = vrcp.pop %v3428
        %v3435 = vrcp.pop %v3431
        %v3436 = vmul.f32 %v3413, %v3432
        %v3437 = vmul.f32 %v3415, %v3433
        %v3438 = vmul.f32 %v3417, %v3434
        %v3439 = vmul.f32 %v3419, %v3435
        %v3440 = vpack.c.bf16 %v3436, %v3436
        %v3441 = vpack.c.bf16 %v3437, %v3437
        %v3442 = vpack.c.bf16 %v3438, %v3438
        %v3443 = vpack.c.bf16 %v3439, %v3439
        %v3448 = vunpack.c.l.b16 %v3440
        %v3449 = vunpack.c.l.b16 %v3441
        %v3450 = vunpack.c.l.b16 %v3442
        %v3451 = vunpack.c.l.b16 %v3443
        %v3452 = vpack.c.b16 %v3449, %v3448
        %v3453 = vpack.c.b16 %v3451, %v3450
        %3454 = vrot.lane.b32.xlu0 %v3101, 64
        %v3455 = vpop.permute.xlu0 %3454
        %3456 = vrot.lane.b32.xlu0 %v3102, 64
        %v3457 = vpop.permute.xlu0 %3456
        %v3460 = vsel %vm3036, %v3452, 0
        %v3463 = vsel %vm3036, %v3453, 0
        %v3466 = vsel %vm3110, %v3457, 0
        %3468 = vmatpush.bf16.msra.mxu0 0
        %3469 = vmatpush.bf16.msra.mxu0 0
        %3470 = vmatpush.bf16.msra.mxu0 0
        %3471 = vmatpush.bf16.msra.mxu0 0
        %3472 = vmatpush.bf16.msra.mxu0 0
        %3473 = vmatpush.bf16.msra.mxu0 0
        %3474 = vmatpush.bf16.msra.mxu0 %v3466
        %3475 = vmatpush.bf16.msra.mxu0 %v3455
        %3476 = vmatmul.bf16.gmra.mxu0 %v3460
        %v3477 = vpop.f32.mrf.mxu0
        %v3478 = vadd.f32 0.0, %v3477
        %v3479 = vpop.f32.mrf.mxu0
        %v3480 = vadd.f32 0.0, %v3479
        %3481 = vmatmul.bf16.gmra.mxu0 %v3463
        %v3482 = vpop.f32.mrf.mxu0
        %v3483 = vadd.f32 0.0, %v3482
        %v3484 = vpop.f32.mrf.mxu0
        %v3485 = vadd.f32 0.0, %v3484
        %3486 = vdwg.mxu0
        %v3487 = vpack.c.bf16 %v3480, %v3478
        %v3488 = vpack.c.bf16 %v3485, %v3483
        %v3493 = vunpack.c.l.b16 %v2961
        %v3494 = vunpack.c.l.b16 %v2962
        %v3495 = vunpack.c.l.b16 %v2963
        %v3496 = vunpack.c.l.b16 %v2964
        %v3497 = vpack.c.b16 %v3494, %v3493
        %v3498 = vpack.c.b16 %v3496, %v3495
        %v3502 = vsel %vm1906, %v3487, 0
        %v3505 = vsel %vm1906, %v3488, 0
        %3507 = vmatpush.bf16.msra.mxu0 0
        %3508 = vmatpush.bf16.msra.mxu0 0
        %3509 = vmatpush.bf16.msra.mxu0 0
        %3510 = vmatpush.bf16.msra.mxu0 0
        %3511 = vmatpush.bf16.msra.mxu0 0
        %3512 = vmatpush.bf16.msra.mxu0 0
        %3513 = vmatpush.bf16.msra.mxu0 %v3498
        %3514 = vmatpush.bf16.msra.mxu0 %v3497
        %3515 = vmatmul.bf16.gmra.mxu0 %v3502
        %v3516 = vpop.f32.mrf.mxu0
        %v3517 = vadd.f32 0.0, %v3516
        %v3518 = vpop.f32.mrf.mxu0
        %v3519 = vadd.f32 0.0, %v3518
        %3520 = vmatmul.bf16.gmra.mxu0 %v3505
        %v3521 = vpop.f32.mrf.mxu0
        %v3522 = vadd.f32 0.0, %v3521
        %v3523 = vpop.f32.mrf.mxu0
        %v3524 = vadd.f32 0.0, %v3523
        %3525 = vdwg.mxu0
        %v3526 = vadd.f32 %v3340, %v3517
        %v3527 = vadd.f32 %v3342, %v3519
        %v3528 = vadd.f32 %v3345, %v3522
        %v3529 = vadd.f32 %v3347, %v3524
        %3530 = vrot.lane.b32.xlu0 %v2987, 32
        %v3531 = vpop.permute.xlu0 %3530
        %3532 = vrot.lane.b32.xlu0 %v2988, 32
        %v3533 = vpop.permute.xlu0 %3532
        %3534 = vrot.lane.b32.xlu0 %v2995, 32
        %v3535 = vpop.permute.xlu0 %3534
        %3536 = vrot.lane.b32.xlu0 %v2996, 32
        %v3537 = vpop.permute.xlu0 %3536
        %v3539 = vsel %vm1906, %v3531, 0
        %v3542 = vsel %vm1906, %v3533, 0
        %v3545 = vsel %vm1906, %v3535, 0
        %v3548 = vsel %vm1906, %v3537, 0
        %3550 = vmatpush.bf16.xpose.msra.mxu0 0
        %3551 = vmatpush.bf16.xpose.msra.mxu0 0
        %3552 = vmatpush.bf16.xpose.msra.mxu0 0
        %3553 = vmatpush.bf16.xpose.msra.mxu0 0
        %3554 = vmatpush.bf16.xpose.msra.mxu0 0
        %3555 = vmatpush.bf16.xpose.msra.mxu0 0
        %3556 = vmatpush.bf16.xpose.msra.mxu0 %v3548
        %3557 = vmatpush.bf16.xpose.msra.mxu0 %v3545
        %3558 = vmatmul.bf16.gmra.mxu0 %v3539
        %v3559 = vpop.f32.mrf.mxu0
        %v3560 = vadd.f32 0.0, %v3559
        %v3561 = vpop.f32.mrf.mxu0
        %v3562 = vadd.f32 0.0, %v3561
        %3563 = vmatmul.bf16.gmra.mxu0 %v3542
        %v3564 = vpop.f32.mrf.mxu0
        %v3565 = vadd.f32 0.0, %v3564
        %v3566 = vpop.f32.mrf.mxu0
        %v3567 = vadd.f32 0.0, %v3566
        %3568 = vdwg.mxu0
        %v3569 = vmul.f32 %v3560, 0.17677669
        %v3570 = vmul.f32 %v3562, 0.17677669
        %v3571 = vmul.f32 %v3565, 0.17677669
        %v3572 = vmul.f32 %v3567, 0.17677669
        %v3573 = vadd.f32 %v3569, %v1519
        %v3574 = vadd.f32 %v3570, %v1520
        %v3575 = vadd.f32 %v3571, %v1521
        %v3576 = vadd.f32 %v3572, %v1522
        %v3577 = vsel %vm3036, %v3573, -inf
        %3578 = vmax.xlane.f32.xlu0 %v3577
        %v3579 = vpop.xlane.xlu0 %3578
        %v3580 = vsel %vm3036, %v3574, -inf
        %3581 = vmax.xlane.f32.xlu0 %v3580
        %v3582 = vpop.xlane.xlu0 %3581
        %v3583 = vsel %vm3036, %v3575, -inf
        %3584 = vmax.xlane.f32.xlu0 %v3583
        %v3585 = vpop.xlane.xlu0 %3584
        %v3586 = vsel %vm3036, %v3576, -inf
        %3587 = vmax.xlane.f32.xlu0 %v3586
        %v3588 = vpop.xlane.xlu0 %3587
        %v3589 = vsub.f32 %v3573, %v3579
        %v3590 = vsub.f32 %v3574, %v3582
        %v3591 = vsub.f32 %v3575, %v3585
        %v3592 = vsub.f32 %v3576, %v3588
        %v3593 = vmul.f32 %v3589, 1.442695
        %v3594 = vpow.pop %v3593
        %v3595 = vmul.f32 %v3590, 1.442695
        %v3596 = vpow.pop %v3595
        %v3597 = vmul.f32 %v3591, 1.442695
        %v3598 = vpow.pop %v3597
        %v3599 = vmul.f32 %v3592, 1.442695
        %v3600 = vpow.pop %v3599
        %v3601 = vsel %vm3036, %v3594, 0.0
        %3602 = vadd.xlane.f32.xlu0 %v3601
        %v3603 = vpop.xlane.xlu0 %3602
        %v3604 = vsel %vm3036, %v3596, 0.0
        %3605 = vadd.xlane.f32.xlu0 %v3604
        %v3606 = vpop.xlane.xlu0 %3605
        %v3607 = vsel %vm3036, %v3598, 0.0
        %3608 = vadd.xlane.f32.xlu0 %v3607
        %v3609 = vpop.xlane.xlu0 %3608
        %v3610 = vsel %vm3036, %v3600, 0.0
        %3611 = vadd.xlane.f32.xlu0 %v3610
        %v3612 = vpop.xlane.xlu0 %3611
        %v3613 = vrcp.pop %v3603
        %v3614 = vrcp.pop %v3606
        %v3615 = vrcp.pop %v3609
        %v3616 = vrcp.pop %v3612
        %v3617 = vmul.f32 %v3594, %v3613
        %v3618 = vmul.f32 %v3596, %v3614
        %v3619 = vmul.f32 %v3598, %v3615
        %v3620 = vmul.f32 %v3600, %v3616
        %v3621 = vpack.c.bf16 %v3617, %v3617
        %v3622 = vpack.c.bf16 %v3618, %v3618
        %v3623 = vpack.c.bf16 %v3619, %v3619
        %v3624 = vpack.c.bf16 %v3620, %v3620
        %v3629 = vunpack.c.l.b16 %v3621
        %v3630 = vunpack.c.l.b16 %v3622
        %v3631 = vunpack.c.l.b16 %v3623
        %v3632 = vunpack.c.l.b16 %v3624
        %v3633 = vpack.c.b16 %v3630, %v3629
        %v3634 = vpack.c.b16 %v3632, %v3631
        %3635 = vrot.lane.b32.xlu0 %v3101, 32
        %v3636 = vpop.permute.xlu0 %3635
        %3637 = vrot.lane.b32.xlu0 %v3102, 32
        %v3638 = vpop.permute.xlu0 %3637
        %v3641 = vsel %vm3036, %v3633, 0
        %v3644 = vsel %vm3036, %v3634, 0
        %v3647 = vsel %vm3110, %v3638, 0
        %3649 = vmatpush.bf16.msra.mxu0 0
        %3650 = vmatpush.bf16.msra.mxu0 0
        %3651 = vmatpush.bf16.msra.mxu0 0
        %3652 = vmatpush.bf16.msra.mxu0 0
        %3653 = vmatpush.bf16.msra.mxu0 0
        %3654 = vmatpush.bf16.msra.mxu0 0
        %3655 = vmatpush.bf16.msra.mxu0 %v3647
        %3656 = vmatpush.bf16.msra.mxu0 %v3636
        %3657 = vmatmul.bf16.gmra.mxu0 %v3641
        %v3658 = vpop.f32.mrf.mxu0
        %v3659 = vadd.f32 0.0, %v3658
        %v3660 = vpop.f32.mrf.mxu0
        %v3661 = vadd.f32 0.0, %v3660
        %3662 = vmatmul.bf16.gmra.mxu0 %v3644
        %v3663 = vpop.f32.mrf.mxu0
        %v3664 = vadd.f32 0.0, %v3663
        %v3665 = vpop.f32.mrf.mxu0
        %v3666 = vadd.f32 0.0, %v3665
        %3667 = vdwg.mxu0
        %v3668 = vpack.c.bf16 %v3661, %v3659
        %v3669 = vpack.c.bf16 %v3666, %v3664
        %v3674 = vunpack.c.l.b16 %v2965
        %v3675 = vunpack.c.l.b16 %v2966
        %v3676 = vunpack.c.l.b16 %v2967
        %v3677 = vunpack.c.l.b16 %v2968
        %v3678 = vpack.c.b16 %v3675, %v3674
        %v3679 = vpack.c.b16 %v3677, %v3676
        %v3683 = vsel %vm1906, %v3668, 0
        %v3686 = vsel %vm1906, %v3669, 0
        %3688 = vmatpush.bf16.msra.mxu0 0
        %3689 = vmatpush.bf16.msra.mxu0 0
        %3690 = vmatpush.bf16.msra.mxu0 0
        %3691 = vmatpush.bf16.msra.mxu0 0
        %3692 = vmatpush.bf16.msra.mxu0 0
        %3693 = vmatpush.bf16.msra.mxu0 0
        %3694 = vmatpush.bf16.msra.mxu0 %v3679
        %3695 = vmatpush.bf16.msra.mxu0 %v3678
        %3696 = vmatmul.bf16.gmra.mxu0 %v3683
        %v3697 = vpop.f32.mrf.mxu0
        %v3698 = vadd.f32 0.0, %v3697
        %v3699 = vpop.f32.mrf.mxu0
        %v3700 = vadd.f32 0.0, %v3699
        %3701 = vmatmul.bf16.gmra.mxu0 %v3686
        %v3702 = vpop.f32.mrf.mxu0
        %v3703 = vadd.f32 0.0, %v3702
        %v3704 = vpop.f32.mrf.mxu0
        %v3705 = vadd.f32 0.0, %v3704
        %3706 = vdwg.mxu0
        %v3707 = vadd.f32 %v3526, %v3698
        %v3708 = vadd.f32 %v3527, %v3700
        %v3709 = vadd.f32 %v3528, %v3703
        %v3710 = vadd.f32 %v3529, %v3705
        %v3711 = vadd.f32 %v2621, %v3707
        %v3712 = vadd.f32 %v2622, %v3708
        %v3713 = vadd.f32 %v2623, %v3709
        %v3714 = vadd.f32 %v2624, %v3710
        %v3715 = vld [vmem:[%s1524 + $0xb] sm:$0x1]
        %v3717 = vperm.slane %v3715, 0
        %v3719 = vadd.f32 %v3711, %v3717
        %v3720 = vadd.f32 %v3712, %v3717
        %v3721 = vadd.f32 %v3713, %v3717
        %v3722 = vadd.f32 %v3714, %v3717
        %v3723 = vld [vmem:[%s1524 + $0xc] sm:$0x1]
        %v3724 = vld [vmem:[%s1524 + $0xd] sm:$0x1]
        %3725 = vadd.xlane.f32.xlu0 %v3719
        %v3726 = vpop.xlane.xlu0 %3725
        %3727 = vadd.xlane.f32.xlu0 %v3720
        %v3728 = vpop.xlane.xlu0 %3727
        %3729 = vadd.xlane.f32.xlu0 %v3721
        %v3730 = vpop.xlane.xlu0 %3729
        %3731 = vadd.xlane.f32.xlu0 %v3722
        %v3732 = vpop.xlane.xlu0 %3731
        %v3733 = vmul.f32 %v3726, %v1541
        %v3734 = vmul.f32 %v3728, %v1541
        %v3735 = vmul.f32 %v3730, %v1541
        %v3736 = vmul.f32 %v3732, %v1541
        %v3737 = vsub.f32 %v3719, %v3733
        %v3738 = vsub.f32 %v3720, %v3734
        %v3739 = vsub.f32 %v3721, %v3735
        %v3740 = vsub.f32 %v3722, %v3736
        %v3741 = vmul.f32 %v3737, %v3737
        %v3742 = vmul.f32 %v3738, %v3738
        %v3743 = vmul.f32 %v3739, %v3739
        %v3744 = vmul.f32 %v3740, %v3740
        %3745 = vadd.xlane.f32.xlu0 %v3741
        %v3746 = vpop.xlane.xlu0 %3745
        %3747 = vadd.xlane.f32.xlu0 %v3742
        %v3748 = vpop.xlane.xlu0 %3747
        %3749 = vadd.xlane.f32.xlu0 %v3743
        %v3750 = vpop.xlane.xlu0 %3749
        %3751 = vadd.xlane.f32.xlu0 %v3744
        %v3752 = vpop.xlane.xlu0 %3751
        %v3753 = vmul.f32 %v3746, %v1541
        %v3754 = vmul.f32 %v3748, %v1541
        %v3755 = vmul.f32 %v3750, %v1541
        %v3756 = vmul.f32 %v3752, %v1541
        %v3757 = vadd.f32 %v3753, 1e-05
        %v3758 = vadd.f32 %v3754, 1e-05
        %v3759 = vadd.f32 %v3755, 1e-05
        %v3760 = vadd.f32 %v3756, 1e-05
        %v3761 = vrsqrt.pop %v3757
        %v3762 = vmul.f32 %v3761, %v3757
        %v3763 = vmul.f32 %v3762, %v3761
        %v3764 = vmul.f32 0.5, %v3763
        %v3765 = vsub.f32 1.5, %v3764
        %v3766 = vmul.f32 %v3761, %v3765
        %vm3767 = vweird.f32 %v3757
        %vm3768 = vweird.f32 %v3761
        %vm3769 = vmor %vm3767, %vm3768
        %v3770 = vsel %vm3769, %v3761, %v3766
        %v3771 = vrsqrt.pop %v3758
        %v3772 = vmul.f32 %v3771, %v3758
        %v3773 = vmul.f32 %v3772, %v3771
        %v3774 = vmul.f32 0.5, %v3773
        %v3775 = vsub.f32 1.5, %v3774
        %v3776 = vmul.f32 %v3771, %v3775
        %vm3777 = vweird.f32 %v3758
        %vm3778 = vweird.f32 %v3771
        %vm3779 = vmor %vm3777, %vm3778
        %v3780 = vsel %vm3779, %v3771, %v3776
        %v3781 = vrsqrt.pop %v3759
        %v3782 = vmul.f32 %v3781, %v3759
        %v3783 = vmul.f32 %v3782, %v3781
        %v3784 = vmul.f32 0.5, %v3783
        %v3785 = vsub.f32 1.5, %v3784
        %v3786 = vmul.f32 %v3781, %v3785
        %vm3787 = vweird.f32 %v3759
        %vm3788 = vweird.f32 %v3781
        %vm3789 = vmor %vm3787, %vm3788
        %v3790 = vsel %vm3789, %v3781, %v3786
        %v3791 = vrsqrt.pop %v3760
        %v3792 = vmul.f32 %v3791, %v3760
        %v3793 = vmul.f32 %v3792, %v3791
        %v3794 = vmul.f32 0.5, %v3793
        %v3795 = vsub.f32 1.5, %v3794
        %v3796 = vmul.f32 %v3791, %v3795
        %vm3797 = vweird.f32 %v3760
        %vm3798 = vweird.f32 %v3791
        %vm3799 = vmor %vm3797, %vm3798
        %v3800 = vsel %vm3799, %v3791, %v3796
        %v3801 = vmul.f32 %v3737, %v3770
        %v3802 = vmul.f32 %v3738, %v3780
        %v3803 = vmul.f32 %v3739, %v3790
        %v3804 = vmul.f32 %v3740, %v3800
        %v3806 = vperm.slane %v3723, 0
        %v3808 = vmul.f32 %v3801, %v3806
        %v3809 = vmul.f32 %v3802, %v3806
        %v3810 = vmul.f32 %v3803, %v3806
        %v3811 = vmul.f32 %v3804, %v3806
        %v3813 = vperm.slane %v3724, 0
        %v3815 = vadd.f32 %v3808, %v3813
        %v3816 = vadd.f32 %v3809, %v3813
        %v3817 = vadd.f32 %v3810, %v3813
        %v3818 = vadd.f32 %v3811, %v3813
        %v3819 = vpack.c.bf16 %v3816, %v3815
        %v3820 = vpack.c.bf16 %v3818, %v3817
        %v3821 = vld [vmem:[%s1632 + $0x20] sm:$0xff]
        %v3822 = vld [vmem:[%s1632 + $0x28] sm:$0xff]
        %v3823 = vld [vmem:[%s1632 + $0x50] sm:$0xff]
        %v3824 = vld [vmem:[%s1632 + $0x58] sm:$0xff]
        %v3825 = vld [vmem:[%s1632 + $0x80] sm:$0xff]
        %v3826 = vld [vmem:[%s1632 + $0x88] sm:$0xff]
        %v3827 = vld [vmem:[%s1632 + $0xb0] sm:$0xff]
        %v3828 = vld [vmem:[%s1632 + $0xb8] sm:$0xff]
        %v3829 = vld [vmem:[%s1632 + $0xe0] sm:$0xff]
        %v3830 = vld [vmem:[%s1632 + $0xe8] sm:$0xff]
        %v3831 = vld [vmem:[%s1632 + $0x110] sm:$0xff]
        %v3832 = vld [vmem:[%s1632 + $0x118] sm:$0xff]
        %v3833 = vld [vmem:[%s1632 + $0x140] sm:$0xff]
        %v3834 = vld [vmem:[%s1632 + $0x148] sm:$0xff]
        %v3835 = vld [vmem:[%s1632 + $0x170] sm:$0xff]
        %v3836 = vld [vmem:[%s1632 + $0x178] sm:$0xff]
        %v3837 = vld [vmem:[%s1632 + $0x1a0] sm:$0xff]
        %v3838 = vld [vmem:[%s1632 + $0x1a8] sm:$0xff]
        %v3839 = vld [vmem:[%s1632 + $0x1d0] sm:$0xff]
        %v3840 = vld [vmem:[%s1632 + $0x1d8] sm:$0xff]
        %v3841 = vld [vmem:[%s1632 + $0x200] sm:$0xff]
        %v3842 = vld [vmem:[%s1632 + $0x208] sm:$0xff]
        %v3843 = vld [vmem:[%s1632 + $0x230] sm:$0xff]
        %v3844 = vld [vmem:[%s1632 + $0x238] sm:$0xff]
        %v3845 = vld [vmem:[%s1632 + $0x260] sm:$0xff]
        %v3846 = vld [vmem:[%s1632 + $0x268] sm:$0xff]
        %v3847 = vld [vmem:[%s1632 + $0x290] sm:$0xff]
        %v3848 = vld [vmem:[%s1632 + $0x298] sm:$0xff]
        %v3849 = vld [vmem:[%s1632 + $0x2c0] sm:$0xff]
        %v3850 = vld [vmem:[%s1632 + $0x2c8] sm:$0xff]
        %v3851 = vld [vmem:[%s1632 + $0x2f0] sm:$0xff]
        %v3852 = vld [vmem:[%s1632 + $0x2f8] sm:$0xff]
        %v3853 = vld [vmem:[%s1524 + $0xe] sm:$0xf]
        %v3855 = vperm.slane %v3853, 0
        %v3856 = vperm.slane %v3853, 1
        %v3857 = vperm.slane %v3853, 2
        %v3858 = vperm.slane %v3853, 3
        %v3895 = vunpack.c.l.b16 %v3821
        %v3896 = vunpack.c.h.b16 %v3821
        %v3897 = vunpack.c.l.b16 %v3822
        %v3898 = vunpack.c.h.b16 %v3822
        %v3899 = vunpack.c.l.b16 %v3823
        %v3900 = vunpack.c.h.b16 %v3823
        %v3901 = vunpack.c.l.b16 %v3824
        %v3902 = vunpack.c.h.b16 %v3824
        %v3903 = vunpack.c.l.b16 %v3825
        %v3904 = vunpack.c.h.b16 %v3825
        %v3905 = vunpack.c.l.b16 %v3826
        %v3906 = vunpack.c.h.b16 %v3826
        %v3907 = vunpack.c.l.b16 %v3827
        %v3908 = vunpack.c.h.b16 %v3827
        %v3909 = vunpack.c.l.b16 %v3828
        %v3910 = vunpack.c.h.b16 %v3828
        %v3911 = vunpack.c.l.b16 %v3829
        %v3912 = vunpack.c.h.b16 %v3829
        %v3913 = vunpack.c.l.b16 %v3830
        %v3914 = vunpack.c.h.b16 %v3830
        %v3915 = vunpack.c.l.b16 %v3831
        %v3916 = vunpack.c.h.b16 %v3831
        %v3917 = vunpack.c.l.b16 %v3832
        %v3918 = vunpack.c.h.b16 %v3832
        %v3919 = vunpack.c.l.b16 %v3833
        %v3920 = vunpack.c.h.b16 %v3833
        %v3921 = vunpack.c.l.b16 %v3834
        %v3922 = vunpack.c.h.b16 %v3834
        %v3923 = vunpack.c.l.b16 %v3835
        %v3924 = vunpack.c.h.b16 %v3835
        %v3925 = vunpack.c.l.b16 %v3836
        %v3926 = vunpack.c.h.b16 %v3836
        %v3927 = vunpack.c.l.b16 %v3837
        %v3928 = vunpack.c.h.b16 %v3837
        %v3929 = vunpack.c.l.b16 %v3838
        %v3930 = vunpack.c.h.b16 %v3838
        %v3931 = vunpack.c.l.b16 %v3839
        %v3932 = vunpack.c.h.b16 %v3839
        %v3933 = vunpack.c.l.b16 %v3840
        %v3934 = vunpack.c.h.b16 %v3840
        %v3935 = vunpack.c.l.b16 %v3841
        %v3936 = vunpack.c.h.b16 %v3841
        %v3937 = vunpack.c.l.b16 %v3842
        %v3938 = vunpack.c.h.b16 %v3842
        %v3939 = vunpack.c.l.b16 %v3843
        %v3940 = vunpack.c.h.b16 %v3843
        %v3941 = vunpack.c.l.b16 %v3844
        %v3942 = vunpack.c.h.b16 %v3844
        %v3943 = vunpack.c.l.b16 %v3845
        %v3944 = vunpack.c.h.b16 %v3845
        %v3945 = vunpack.c.l.b16 %v3846
        %v3946 = vunpack.c.h.b16 %v3846
        %v3947 = vunpack.c.l.b16 %v3847
        %v3948 = vunpack.c.h.b16 %v3847
        %v3949 = vunpack.c.l.b16 %v3848
        %v3950 = vunpack.c.h.b16 %v3848
        %v3951 = vunpack.c.l.b16 %v3849
        %v3952 = vunpack.c.h.b16 %v3849
        %v3953 = vunpack.c.l.b16 %v3850
        %v3954 = vunpack.c.h.b16 %v3850
        %v3955 = vunpack.c.l.b16 %v3851
        %v3956 = vunpack.c.h.b16 %v3851
        %v3957 = vunpack.c.l.b16 %v3852
        %v3958 = vunpack.c.h.b16 %v3852
        %v3959 = vpack.c.b16 %v3899, %v3895
        %v3960 = vpack.c.b16 %v3900, %v3896
        %v3961 = vpack.c.b16 %v3901, %v3897
        %v3962 = vpack.c.b16 %v3902, %v3898
        %v3963 = vpack.c.b16 %v3907, %v3903
        %v3964 = vpack.c.b16 %v3908, %v3904
        %v3965 = vpack.c.b16 %v3909, %v3905
        %v3966 = vpack.c.b16 %v3910, %v3906
        %v3967 = vpack.c.b16 %v3915, %v3911
        %v3968 = vpack.c.b16 %v3916, %v3912
        %v3969 = vpack.c.b16 %v3917, %v3913
        %v3970 = vpack.c.b16 %v3918, %v3914
        %v3971 = vpack.c.b16 %v3923, %v3919
        %v3972 = vpack.c.b16 %v3924, %v3920
        %v3973 = vpack.c.b16 %v3925, %v3921
        %v3974 = vpack.c.b16 %v3926, %v3922
        %v3975 = vpack.c.b16 %v3931, %v3927
        %v3976 = vpack.c.b16 %v3932, %v3928
        %v3977 = vpack.c.b16 %v3933, %v3929
        %v3978 = vpack.c.b16 %v3934, %v3930
        %v3979 = vpack.c.b16 %v3939, %v3935
        %v3980 = vpack.c.b16 %v3940, %v3936
        %v3981 = vpack.c.b16 %v3941, %v3937
        %v3982 = vpack.c.b16 %v3942, %v3938
        %v3983 = vpack.c.b16 %v3947, %v3943
        %v3984 = vpack.c.b16 %v3948, %v3944
        %v3985 = vpack.c.b16 %v3949, %v3945
        %v3986 = vpack.c.b16 %v3950, %v3946
        %v3987 = vpack.c.b16 %v3955, %v3951
        %v3988 = vpack.c.b16 %v3956, %v3952
        %v3989 = vpack.c.b16 %v3957, %v3953
        %v3990 = vpack.c.b16 %v3958, %v3954
        %4023 = vmatpush.bf16.msra.mxu0 %v3987
        %4024 = vmatpush.bf16.msra.mxu0 %v3983
        %4025 = vmatpush.bf16.msra.mxu0 %v3979
        %4026 = vmatpush.bf16.msra.mxu0 %v3975
        %4027 = vmatpush.bf16.msra.mxu0 %v3971
        %4028 = vmatpush.bf16.msra.mxu0 %v3967
        %4029 = vmatpush.bf16.msra.mxu0 %v3963
        %4030 = vmatpush.bf16.msra.mxu0 %v3959
        %4031 = vmatmul.bf16.gmra.mxu0 %v3819
        %v4032 = vpop.f32.mrf.mxu0
        %v4033 = vadd.f32 %v3855, %v4032
        %v4034 = vpop.f32.mrf.mxu0
        %v4035 = vadd.f32 %v3855, %v4034
        %4036 = vmatmul.bf16.gmra.mxu0 %v3820
        %v4037 = vpop.f32.mrf.mxu0
        %v4038 = vadd.f32 %v3855, %v4037
        %v4039 = vpop.f32.mrf.mxu0
        %v4040 = vadd.f32 %v3855, %v4039
        %4041 = vdwg.mxu0
        %4042 = vmatpush.bf16.msra.mxu0 %v3988
        %4043 = vmatpush.bf16.msra.mxu0 %v3984
        %4044 = vmatpush.bf16.msra.mxu0 %v3980
        %4045 = vmatpush.bf16.msra.mxu0 %v3976
        %4046 = vmatpush.bf16.msra.mxu0 %v3972
        %4047 = vmatpush.bf16.msra.mxu0 %v3968
        %4048 = vmatpush.bf16.msra.mxu0 %v3964
        %4049 = vmatpush.bf16.msra.mxu0 %v3960
        %4050 = vmatmul.bf16.gmra.mxu0 %v3819
        %v4051 = vpop.f32.mrf.mxu0
        %v4052 = vadd.f32 %v3856, %v4051
        %v4053 = vpop.f32.mrf.mxu0
        %v4054 = vadd.f32 %v3856, %v4053
        %4055 = vmatmul.bf16.gmra.mxu0 %v3820
        %v4056 = vpop.f32.mrf.mxu0
        %v4057 = vadd.f32 %v3856, %v4056
        %v4058 = vpop.f32.mrf.mxu0
        %v4059 = vadd.f32 %v3856, %v4058
        %4060 = vdwg.mxu0
        %4061 = vmatpush.bf16.msra.mxu0 %v3989
        %4062 = vmatpush.bf16.msra.mxu0 %v3985
        %4063 = vmatpush.bf16.msra.mxu0 %v3981
        %4064 = vmatpush.bf16.msra.mxu0 %v3977
        %4065 = vmatpush.bf16.msra.mxu0 %v3973
        %4066 = vmatpush.bf16.msra.mxu0 %v3969
        %4067 = vmatpush.bf16.msra.mxu0 %v3965
        %4068 = vmatpush.bf16.msra.mxu0 %v3961
        %4069 = vmatmul.bf16.gmra.mxu0 %v3819
        %v4070 = vpop.f32.mrf.mxu0
        %v4071 = vadd.f32 %v3857, %v4070
        %v4072 = vpop.f32.mrf.mxu0
        %v4073 = vadd.f32 %v3857, %v4072
        %4074 = vmatmul.bf16.gmra.mxu0 %v3820
        %v4075 = vpop.f32.mrf.mxu0
        %v4076 = vadd.f32 %v3857, %v4075
        %v4077 = vpop.f32.mrf.mxu0
        %v4078 = vadd.f32 %v3857, %v4077
        %4079 = vdwg.mxu0
        %4080 = vmatpush.bf16.msra.mxu0 %v3990
        %4081 = vmatpush.bf16.msra.mxu0 %v3986
        %4082 = vmatpush.bf16.msra.mxu0 %v3982
        %4083 = vmatpush.bf16.msra.mxu0 %v3978
        %4084 = vmatpush.bf16.msra.mxu0 %v3974
        %4085 = vmatpush.bf16.msra.mxu0 %v3970
        %4086 = vmatpush.bf16.msra.mxu0 %v3966
        %4087 = vmatpush.bf16.msra.mxu0 %v3962
        %4088 = vmatmul.bf16.gmra.mxu0 %v3819
        %v4089 = vpop.f32.mrf.mxu0
        %v4090 = vadd.f32 %v3858, %v4089
        %v4091 = vpop.f32.mrf.mxu0
        %v4092 = vadd.f32 %v3858, %v4091
        %4093 = vmatmul.bf16.gmra.mxu0 %v3820
        %v4094 = vpop.f32.mrf.mxu0
        %v4095 = vadd.f32 %v3858, %v4094
        %v4096 = vpop.f32.mrf.mxu0
        %v4097 = vadd.f32 %v3858, %v4096
        %4098 = vdwg.mxu0
        %v4099 = vmul.f32 %v4033, 0.5
        %v4100 = vmul.f32 %v4052, 0.5
        %v4101 = vmul.f32 %v4071, 0.5
        %v4102 = vmul.f32 %v4090, 0.5
        %v4103 = vmul.f32 %v4035, 0.5
        %v4104 = vmul.f32 %v4054, 0.5
        %v4105 = vmul.f32 %v4073, 0.5
        %v4106 = vmul.f32 %v4092, 0.5
        %v4107 = vmul.f32 %v4038, 0.5
        %v4108 = vmul.f32 %v4057, 0.5
        %v4109 = vmul.f32 %v4076, 0.5
        %v4110 = vmul.f32 %v4095, 0.5
        %v4111 = vmul.f32 %v4040, 0.5
        %v4112 = vmul.f32 %v4059, 0.5
        %v4113 = vmul.f32 %v4078, 0.5
        %v4114 = vmul.f32 %v4097, 0.5
        %v4115 = vmul.f32 %v4033, 0.044715
        %v4116 = vmul.f32 %v4052, 0.044715
        %v4117 = vmul.f32 %v4071, 0.044715
        %v4118 = vmul.f32 %v4090, 0.044715
        %v4119 = vmul.f32 %v4035, 0.044715
        %v4120 = vmul.f32 %v4054, 0.044715
        %v4121 = vmul.f32 %v4073, 0.044715
        %v4122 = vmul.f32 %v4092, 0.044715
        %v4123 = vmul.f32 %v4038, 0.044715
        %v4124 = vmul.f32 %v4057, 0.044715
        %v4125 = vmul.f32 %v4076, 0.044715
        %v4126 = vmul.f32 %v4095, 0.044715
        %v4127 = vmul.f32 %v4040, 0.044715
        %v4128 = vmul.f32 %v4059, 0.044715
        %v4129 = vmul.f32 %v4078, 0.044715
        %v4130 = vmul.f32 %v4097, 0.044715
        %v4131 = vmul.f32 %v4115, %v4033
        %v4132 = vmul.f32 %v4116, %v4052
        %v4133 = vmul.f32 %v4117, %v4071
        %v4134 = vmul.f32 %v4118, %v4090
        %v4135 = vmul.f32 %v4119, %v4035
        %v4136 = vmul.f32 %v4120, %v4054
        %v4137 = vmul.f32 %v4121, %v4073
        %v4138 = vmul.f32 %v4122, %v4092
        %v4139 = vmul.f32 %v4123, %v4038
        %v4140 = vmul.f32 %v4124, %v4057
        %v4141 = vmul.f32 %v4125, %v4076
        %v4142 = vmul.f32 %v4126, %v4095
        %v4143 = vmul.f32 %v4127, %v4040
        %v4144 = vmul.f32 %v4128, %v4059
        %v4145 = vmul.f32 %v4129, %v4078
        %v4146 = vmul.f32 %v4130, %v4097
        %v4147 = vmul.f32 %v4131, %v4033
        %v4148 = vmul.f32 %v4132, %v4052
        %v4149 = vmul.f32 %v4133, %v4071
        %v4150 = vmul.f32 %v4134, %v4090
        %v4151 = vmul.f32 %v4135, %v4035
        %v4152 = vmul.f32 %v4136, %v4054
        %v4153 = vmul.f32 %v4137, %v4073
        %v4154 = vmul.f32 %v4138, %v4092
        %v4155 = vmul.f32 %v4139, %v4038
        %v4156 = vmul.f32 %v4140, %v4057
        %v4157 = vmul.f32 %v4141, %v4076
        %v4158 = vmul.f32 %v4142, %v4095
        %v4159 = vmul.f32 %v4143, %v4040
        %v4160 = vmul.f32 %v4144, %v4059
        %v4161 = vmul.f32 %v4145, %v4078
        %v4162 = vmul.f32 %v4146, %v4097
        %v4163 = vadd.f32 %v4033, %v4147
        %v4164 = vadd.f32 %v4052, %v4148
        %v4165 = vadd.f32 %v4071, %v4149
        %v4166 = vadd.f32 %v4090, %v4150
        %v4167 = vadd.f32 %v4035, %v4151
        %v4168 = vadd.f32 %v4054, %v4152
        %v4169 = vadd.f32 %v4073, %v4153
        %v4170 = vadd.f32 %v4092, %v4154
        %v4171 = vadd.f32 %v4038, %v4155
        %v4172 = vadd.f32 %v4057, %v4156
        %v4173 = vadd.f32 %v4076, %v4157
        %v4174 = vadd.f32 %v4095, %v4158
        %v4175 = vadd.f32 %v4040, %v4159
        %v4176 = vadd.f32 %v4059, %v4160
        %v4177 = vadd.f32 %v4078, %v4161
        %v4178 = vadd.f32 %v4097, %v4162
        %v4179 = vmul.f32 %v4163, 0.7978846
        %v4180 = vmul.f32 %v4164, 0.7978846
        %v4181 = vmul.f32 %v4165, 0.7978846
        %v4182 = vmul.f32 %v4166, 0.7978846
        %v4183 = vmul.f32 %v4167, 0.7978846
        %v4184 = vmul.f32 %v4168, 0.7978846
        %v4185 = vmul.f32 %v4169, 0.7978846
        %v4186 = vmul.f32 %v4170, 0.7978846
        %v4187 = vmul.f32 %v4171, 0.7978846
        %v4188 = vmul.f32 %v4172, 0.7978846
        %v4189 = vmul.f32 %v4173, 0.7978846
        %v4190 = vmul.f32 %v4174, 0.7978846
        %v4191 = vmul.f32 %v4175, 0.7978846
        %v4192 = vmul.f32 %v4176, 0.7978846
        %v4193 = vmul.f32 %v4177, 0.7978846
        %v4194 = vmul.f32 %v4178, 0.7978846
        %v4195 = vtanh.pop %v4179
        %v4196 = vtanh.pop %v4180
        %v4197 = vtanh.pop %v4181
        %v4198 = vtanh.pop %v4182
        %v4199 = vtanh.pop %v4183
        %v4200 = vtanh.pop %v4184
        %v4201 = vtanh.pop %v4185
        %v4202 = vtanh.pop %v4186
        %v4203 = vtanh.pop %v4187
        %v4204 = vtanh.pop %v4188
        %v4205 = vtanh.pop %v4189
        %v4206 = vtanh.pop %v4190
        %v4207 = vtanh.pop %v4191
        %v4208 = vtanh.pop %v4192
        %v4209 = vtanh.pop %v4193
        %v4210 = vtanh.pop %v4194
        %v4211 = vadd.f32 %v4195, 1.0
        %v4212 = vadd.f32 %v4196, 1.0
        %v4213 = vadd.f32 %v4197, 1.0
        %v4214 = vadd.f32 %v4198, 1.0
        %v4215 = vadd.f32 %v4199, 1.0
        %v4216 = vadd.f32 %v4200, 1.0
        %v4217 = vadd.f32 %v4201, 1.0
        %v4218 = vadd.f32 %v4202, 1.0
        %v4219 = vadd.f32 %v4203, 1.0
        %v4220 = vadd.f32 %v4204, 1.0
        %v4221 = vadd.f32 %v4205, 1.0
        %v4222 = vadd.f32 %v4206, 1.0
        %v4223 = vadd.f32 %v4207, 1.0
        %v4224 = vadd.f32 %v4208, 1.0
        %v4225 = vadd.f32 %v4209, 1.0
        %v4226 = vadd.f32 %v4210, 1.0
        %v4227 = vmul.f32 %v4099, %v4211
        %v4228 = vmul.f32 %v4100, %v4212
        %v4229 = vmul.f32 %v4101, %v4213
        %v4230 = vmul.f32 %v4102, %v4214
        %v4231 = vmul.f32 %v4103, %v4215
        %v4232 = vmul.f32 %v4104, %v4216
        %v4233 = vmul.f32 %v4105, %v4217
        %v4234 = vmul.f32 %v4106, %v4218
        %v4235 = vmul.f32 %v4107, %v4219
        %v4236 = vmul.f32 %v4108, %v4220
        %v4237 = vmul.f32 %v4109, %v4221
        %v4238 = vmul.f32 %v4110, %v4222
        %v4239 = vmul.f32 %v4111, %v4223
        %v4240 = vmul.f32 %v4112, %v4224
        %v4241 = vmul.f32 %v4113, %v4225
        %v4242 = vmul.f32 %v4114, %v4226
        %v4243 = vpack.c.bf16 %v4231, %v4227
        %v4244 = vpack.c.bf16 %v4232, %v4228
        %v4245 = vpack.c.bf16 %v4233, %v4229
        %v4246 = vpack.c.bf16 %v4234, %v4230
        %v4247 = vpack.c.bf16 %v4239, %v4235
        %v4248 = vpack.c.bf16 %v4240, %v4236
        %v4249 = vpack.c.bf16 %v4241, %v4237
        %v4250 = vpack.c.bf16 %v4242, %v4238
        %s4251 = smul.u32 %s30, 64
        %s4252 = smul.addr %s4251, 4
        %s4253 = scalar_lea.vmem %s11, %s4252
        %v4254 = vld [vmem:[%s4253] sm:$0xf]
        %v4255 = vld [vmem:[%s4253 + $0x4] sm:$0xf]
        %v4256 = vld [vmem:[%s4253 + $0x8] sm:$0xf]
        %v4257 = vld [vmem:[%s4253 + $0xc] sm:$0xf]
        %v4258 = vld [vmem:[%s4253 + $0x10] sm:$0xf]
        %v4259 = vld [vmem:[%s4253 + $0x14] sm:$0xf]
        %v4260 = vld [vmem:[%s4253 + $0x18] sm:$0xf]
        %v4261 = vld [vmem:[%s4253 + $0x1c] sm:$0xf]
        %v4262 = vld [vmem:[%s4253 + $0x20] sm:$0xf]
        %v4263 = vld [vmem:[%s4253 + $0x24] sm:$0xf]
        %v4264 = vld [vmem:[%s4253 + $0x28] sm:$0xf]
        %v4265 = vld [vmem:[%s4253 + $0x2c] sm:$0xf]
        %v4266 = vld [vmem:[%s4253 + $0x30] sm:$0xf]
        %v4267 = vld [vmem:[%s4253 + $0x34] sm:$0xf]
        %v4268 = vld [vmem:[%s4253 + $0x38] sm:$0xf]
        %v4269 = vld [vmem:[%s4253 + $0x3c] sm:$0xf]
        %v4270 = vld [vmem:[%s4253 + $0x40] sm:$0xf]
        %v4271 = vld [vmem:[%s4253 + $0x44] sm:$0xf]
        %v4272 = vld [vmem:[%s4253 + $0x48] sm:$0xf]
        %v4273 = vld [vmem:[%s4253 + $0x4c] sm:$0xf]
        %v4274 = vld [vmem:[%s4253 + $0x50] sm:$0xf]
        %v4275 = vld [vmem:[%s4253 + $0x54] sm:$0xf]
        %v4276 = vld [vmem:[%s4253 + $0x58] sm:$0xf]
        %v4277 = vld [vmem:[%s4253 + $0x5c] sm:$0xf]
        %v4278 = vld [vmem:[%s4253 + $0x60] sm:$0xf]
        %v4279 = vld [vmem:[%s4253 + $0x64] sm:$0xf]
        %v4280 = vld [vmem:[%s4253 + $0x68] sm:$0xf]
        %v4281 = vld [vmem:[%s4253 + $0x6c] sm:$0xf]
        %v4282 = vld [vmem:[%s4253 + $0x70] sm:$0xf]
        %v4283 = vld [vmem:[%s4253 + $0x74] sm:$0xf]
        %v4284 = vld [vmem:[%s4253 + $0x78] sm:$0xf]
        %v4285 = vld [vmem:[%s4253 + $0x7c] sm:$0xf]
        %v4286 = vld [vmem:[%s4253 + $0x80] sm:$0xf]
        %v4287 = vld [vmem:[%s4253 + $0x84] sm:$0xf]
        %v4288 = vld [vmem:[%s4253 + $0x88] sm:$0xf]
        %v4289 = vld [vmem:[%s4253 + $0x8c] sm:$0xf]
        %v4290 = vld [vmem:[%s4253 + $0x90] sm:$0xf]
        %v4291 = vld [vmem:[%s4253 + $0x94] sm:$0xf]
        %v4292 = vld [vmem:[%s4253 + $0x98] sm:$0xf]
        %v4293 = vld [vmem:[%s4253 + $0x9c] sm:$0xf]
        %v4294 = vld [vmem:[%s4253 + $0xa0] sm:$0xf]
        %v4295 = vld [vmem:[%s4253 + $0xa4] sm:$0xf]
        %v4296 = vld [vmem:[%s4253 + $0xa8] sm:$0xf]
        %v4297 = vld [vmem:[%s4253 + $0xac] sm:$0xf]
        %v4298 = vld [vmem:[%s4253 + $0xb0] sm:$0xf]
        %v4299 = vld [vmem:[%s4253 + $0xb4] sm:$0xf]
        %v4300 = vld [vmem:[%s4253 + $0xb8] sm:$0xf]
        %v4301 = vld [vmem:[%s4253 + $0xbc] sm:$0xf]
        %v4302 = vld [vmem:[%s4253 + $0xc0] sm:$0xf]
        %v4303 = vld [vmem:[%s4253 + $0xc4] sm:$0xf]
        %v4304 = vld [vmem:[%s4253 + $0xc8] sm:$0xf]
        %v4305 = vld [vmem:[%s4253 + $0xcc] sm:$0xf]
        %v4306 = vld [vmem:[%s4253 + $0xd0] sm:$0xf]
        %v4307 = vld [vmem:[%s4253 + $0xd4] sm:$0xf]
        %v4308 = vld [vmem:[%s4253 + $0xd8] sm:$0xf]
        %v4309 = vld [vmem:[%s4253 + $0xdc] sm:$0xf]
        %v4310 = vld [vmem:[%s4253 + $0xe0] sm:$0xf]
        %v4311 = vld [vmem:[%s4253 + $0xe4] sm:$0xf]
        %v4312 = vld [vmem:[%s4253 + $0xe8] sm:$0xf]
        %v4313 = vld [vmem:[%s4253 + $0xec] sm:$0xf]
        %v4314 = vld [vmem:[%s4253 + $0xf0] sm:$0xf]
        %v4315 = vld [vmem:[%s4253 + $0xf4] sm:$0xf]
        %v4316 = vld [vmem:[%s4253 + $0xf8] sm:$0xf]
        %v4317 = vld [vmem:[%s4253 + $0xfc] sm:$0xf]
        %v4318 = vld [vmem:[%s1524 + $0x12] sm:$0x1]
        %v4320 = vperm.slane %v4318, 0
        %v4386 = vunpack.c.l.b16 %v4254
        %v4387 = vunpack.c.l.b16 %v4255
        %v4388 = vunpack.c.l.b16 %v4256
        %v4389 = vunpack.c.l.b16 %v4257
        %v4390 = vunpack.c.l.b16 %v4258
        %v4391 = vunpack.c.l.b16 %v4259
        %v4392 = vunpack.c.l.b16 %v4260
        %v4393 = vunpack.c.l.b16 %v4261
        %v4394 = vunpack.c.l.b16 %v4262
        %v4395 = vunpack.c.l.b16 %v4263
        %v4396 = vunpack.c.l.b16 %v4264
        %v4397 = vunpack.c.l.b16 %v4265
        %v4398 = vunpack.c.l.b16 %v4266
        %v4399 = vunpack.c.l.b16 %v4267
        %v4400 = vunpack.c.l.b16 %v4268
        %v4401 = vunpack.c.l.b16 %v4269
        %v4402 = vunpack.c.l.b16 %v4270
        %v4403 = vunpack.c.l.b16 %v4271
        %v4404 = vunpack.c.l.b16 %v4272
        %v4405 = vunpack.c.l.b16 %v4273
        %v4406 = vunpack.c.l.b16 %v4274
        %v4407 = vunpack.c.l.b16 %v4275
        %v4408 = vunpack.c.l.b16 %v4276
        %v4409 = vunpack.c.l.b16 %v4277
        %v4410 = vunpack.c.l.b16 %v4278
        %v4411 = vunpack.c.l.b16 %v4279
        %v4412 = vunpack.c.l.b16 %v4280
        %v4413 = vunpack.c.l.b16 %v4281
        %v4414 = vunpack.c.l.b16 %v4282
        %v4415 = vunpack.c.l.b16 %v4283
        %v4416 = vunpack.c.l.b16 %v4284
        %v4417 = vunpack.c.l.b16 %v4285
        %v4418 = vunpack.c.l.b16 %v4286
        %v4419 = vunpack.c.l.b16 %v4287
        %v4420 = vunpack.c.l.b16 %v4288
        %v4421 = vunpack.c.l.b16 %v4289
        %v4422 = vunpack.c.l.b16 %v4290
        %v4423 = vunpack.c.l.b16 %v4291
        %v4424 = vunpack.c.l.b16 %v4292
        %v4425 = vunpack.c.l.b16 %v4293
        %v4426 = vunpack.c.l.b16 %v4294
        %v4427 = vunpack.c.l.b16 %v4295
        %v4428 = vunpack.c.l.b16 %v4296
        %v4429 = vunpack.c.l.b16 %v4297
        %v4430 = vunpack.c.l.b16 %v4298
        %v4431 = vunpack.c.l.b16 %v4299
        %v4432 = vunpack.c.l.b16 %v4300
        %v4433 = vunpack.c.l.b16 %v4301
        %v4434 = vunpack.c.l.b16 %v4302
        %v4435 = vunpack.c.l.b16 %v4303
        %v4436 = vunpack.c.l.b16 %v4304
        %v4437 = vunpack.c.l.b16 %v4305
        %v4438 = vunpack.c.l.b16 %v4306
        %v4439 = vunpack.c.l.b16 %v4307
        %v4440 = vunpack.c.l.b16 %v4308
        %v4441 = vunpack.c.l.b16 %v4309
        %v4442 = vunpack.c.l.b16 %v4310
        %v4443 = vunpack.c.l.b16 %v4311
        %v4444 = vunpack.c.l.b16 %v4312
        %v4445 = vunpack.c.l.b16 %v4313
        %v4446 = vunpack.c.l.b16 %v4314
        %v4447 = vunpack.c.l.b16 %v4315
        %v4448 = vunpack.c.l.b16 %v4316
        %v4449 = vunpack.c.l.b16 %v4317
        %v4450 = vpack.c.b16 %v4387, %v4386
        %v4451 = vpack.c.b16 %v4389, %v4388
        %v4452 = vpack.c.b16 %v4391, %v4390
        %v4453 = vpack.c.b16 %v4393, %v4392
        %v4454 = vpack.c.b16 %v4395, %v4394
        %v4455 = vpack.c.b16 %v4397, %v4396
        %v4456 = vpack.c.b16 %v4399, %v4398
        %v4457 = vpack.c.b16 %v4401, %v4400
        %v4458 = vpack.c.b16 %v4403, %v4402
        %v4459 = vpack.c.b16 %v4405, %v4404
        %v4460 = vpack.c.b16 %v4407, %v4406
        %v4461 = vpack.c.b16 %v4409, %v4408
        %v4462 = vpack.c.b16 %v4411, %v4410
        %v4463 = vpack.c.b16 %v4413, %v4412
        %v4464 = vpack.c.b16 %v4415, %v4414
        %v4465 = vpack.c.b16 %v4417, %v4416
        %v4466 = vpack.c.b16 %v4419, %v4418
        %v4467 = vpack.c.b16 %v4421, %v4420
        %v4468 = vpack.c.b16 %v4423, %v4422
        %v4469 = vpack.c.b16 %v4425, %v4424
        %v4470 = vpack.c.b16 %v4427, %v4426
        %v4471 = vpack.c.b16 %v4429, %v4428
        %v4472 = vpack.c.b16 %v4431, %v4430
        %v4473 = vpack.c.b16 %v4433, %v4432
        %v4474 = vpack.c.b16 %v4435, %v4434
        %v4475 = vpack.c.b16 %v4437, %v4436
        %v4476 = vpack.c.b16 %v4439, %v4438
        %v4477 = vpack.c.b16 %v4441, %v4440
        %v4478 = vpack.c.b16 %v4443, %v4442
        %v4479 = vpack.c.b16 %v4445, %v4444
        %v4480 = vpack.c.b16 %v4447, %v4446
        %v4481 = vpack.c.b16 %v4449, %v4448
        %4514 = vmatpush.bf16.msra.mxu0 %v4457
        %4515 = vmatpush.bf16.msra.mxu0 %v4456
        %4516 = vmatpush.bf16.msra.mxu0 %v4455
        %4517 = vmatpush.bf16.msra.mxu0 %v4454
        %4518 = vmatpush.bf16.msra.mxu0 %v4453
        %4519 = vmatpush.bf16.msra.mxu0 %v4452
        %4520 = vmatpush.bf16.msra.mxu0 %v4451
        %4521 = vmatpush.bf16.msra.mxu0 %v4450
        %4522 = vmatmul.bf16.gmra.mxu0 %v4243
        %v4523 = vpop.f32.mrf.mxu0
        %v4524 = vadd.f32 %v4320, %v4523
        %v4525 = vpop.f32.mrf.mxu0
        %v4526 = vadd.f32 %v4320, %v4525
        %4527 = vmatmul.bf16.gmra.mxu0 %v4247
        %v4528 = vpop.f32.mrf.mxu0
        %v4529 = vadd.f32 %v4320, %v4528
        %v4530 = vpop.f32.mrf.mxu0
        %v4531 = vadd.f32 %v4320, %v4530
        %4532 = vdwg.mxu0
        %4533 = vmatpush.bf16.msra.mxu0 %v4465
        %4534 = vmatpush.bf16.msra.mxu0 %v4464
        %4535 = vmatpush.bf16.msra.mxu0 %v4463
        %4536 = vmatpush.bf16.msra.mxu0 %v4462
        %4537 = vmatpush.bf16.msra.mxu0 %v4461
        %4538 = vmatpush.bf16.msra.mxu0 %v4460
        %4539 = vmatpush.bf16.msra.mxu0 %v4459
        %4540 = vmatpush.bf16.msra.mxu0 %v4458
        %4541 = vmatmul.bf16.gmra.mxu0 %v4244
        %v4542 = vpop.f32.mrf.mxu0
        %v4543 = vadd.f32 %v4524, %v4542
        %v4544 = vpop.f32.mrf.mxu0
        %v4545 = vadd.f32 %v4526, %v4544
        %4546 = vmatmul.bf16.gmra.mxu0 %v4248
        %v4547 = vpop.f32.mrf.mxu0
        %v4548 = vadd.f32 %v4529, %v4547
        %v4549 = vpop.f32.mrf.mxu0
        %v4550 = vadd.f32 %v4531, %v4549
        %4551 = vdwg.mxu0
        %4552 = vmatpush.bf16.msra.mxu0 %v4473
        %4553 = vmatpush.bf16.msra.mxu0 %v4472
        %4554 = vmatpush.bf16.msra.mxu0 %v4471
        %4555 = vmatpush.bf16.msra.mxu0 %v4470
        %4556 = vmatpush.bf16.msra.mxu0 %v4469
        %4557 = vmatpush.bf16.msra.mxu0 %v4468
        %4558 = vmatpush.bf16.msra.mxu0 %v4467
        %4559 = vmatpush.bf16.msra.mxu0 %v4466
        %4560 = vmatmul.bf16.gmra.mxu0 %v4245
        %v4561 = vpop.f32.mrf.mxu0
        %v4562 = vadd.f32 %v4543, %v4561
        %v4563 = vpop.f32.mrf.mxu0
        %v4564 = vadd.f32 %v4545, %v4563
        %4565 = vmatmul.bf16.gmra.mxu0 %v4249
        %v4566 = vpop.f32.mrf.mxu0
        %v4567 = vadd.f32 %v4548, %v4566
        %v4568 = vpop.f32.mrf.mxu0
        %v4569 = vadd.f32 %v4550, %v4568
        %4570 = vdwg.mxu0
        %4571 = vmatpush.bf16.msra.mxu0 %v4481
        %4572 = vmatpush.bf16.msra.mxu0 %v4480
        %4573 = vmatpush.bf16.msra.mxu0 %v4479
        %4574 = vmatpush.bf16.msra.mxu0 %v4478
        %4575 = vmatpush.bf16.msra.mxu0 %v4477
        %4576 = vmatpush.bf16.msra.mxu0 %v4476
        %4577 = vmatpush.bf16.msra.mxu0 %v4475
        %4578 = vmatpush.bf16.msra.mxu0 %v4474
        %4579 = vmatmul.bf16.gmra.mxu0 %v4246
        %v4580 = vpop.f32.mrf.mxu0
        %v4581 = vadd.f32 %v4562, %v4580
        %v4582 = vpop.f32.mrf.mxu0
        %v4583 = vadd.f32 %v4564, %v4582
        %4584 = vmatmul.bf16.gmra.mxu0 %v4250
        %v4585 = vpop.f32.mrf.mxu0
        %v4586 = vadd.f32 %v4567, %v4585
        %v4587 = vpop.f32.mrf.mxu0
        %v4588 = vadd.f32 %v4569, %v4587
        %4589 = vdwg.mxu0
        %v4590 = vadd.f32 %v3719, %v4581
        %v4591 = vadd.f32 %v3720, %v4583
        %v4592 = vadd.f32 %v3721, %v4586
        %v4593 = vadd.f32 %v3722, %v4588
        %4594 = vst [vmem:[#allocation2] sm:$0xff] %v4590
        %4595 = vst [vmem:[#allocation2 + $0x8] sm:$0xff] %v4591
        %4596 = vst [vmem:[#allocation2 + $0x10] sm:$0xff] %v4592
        %4597 = vst [vmem:[#allocation2 + $0x18] sm:$0xff] %v4593
        %p4598 = scmp.eq.s32.totalorder %s30, 1
        // Predicated region
        $region81: #{traj_predict_policy_forward.1} parent=71 // pred_check
          %p4599 = pneg %p4598
        $region82: #{traj_predict_policy_forward.1} parent=71 // pred_check_branch
          %4601 = sbr.rel (%p4599) target = $region84
        $region83: #{traj_predict_policy_forward.1} parent=71 // pred_region
          %v4602 = vld [vmem:[%s9 + $0x7] sm:$0x1]
          %v4603 = vld [vmem:[%s9 + $0x8] sm:$0x1]
          %4604 = vadd.xlane.f32.xlu0 %v4590
          %v4605 = vpop.xlane.xlu0 %4604
          %4606 = vadd.xlane.f32.xlu0 %v4591
          %v4607 = vpop.xlane.xlu0 %4606
          %4608 = vadd.xlane.f32.xlu0 %v4592
          %v4609 = vpop.xlane.xlu0 %4608
          %4610 = vadd.xlane.f32.xlu0 %v4593
          %v4611 = vpop.xlane.xlu0 %4610
          %v4612 = vmul.f32 %v4605, %v1541
          %v4613 = vmul.f32 %v4607, %v1541
          %v4614 = vmul.f32 %v4609, %v1541
          %v4615 = vmul.f32 %v4611, %v1541
          %v4616 = vsub.f32 %v4590, %v4612
          %v4617 = vsub.f32 %v4591, %v4613
          %v4618 = vsub.f32 %v4592, %v4614
          %v4619 = vsub.f32 %v4593, %v4615
          %v4620 = vmul.f32 %v4616, %v4616
          %v4621 = vmul.f32 %v4617, %v4617
          %v4622 = vmul.f32 %v4618, %v4618
          %v4623 = vmul.f32 %v4619, %v4619
          %4624 = vadd.xlane.f32.xlu0 %v4620
          %v4625 = vpop.xlane.xlu0 %4624
          %4626 = vadd.xlane.f32.xlu0 %v4621
          %v4627 = vpop.xlane.xlu0 %4626
          %4628 = vadd.xlane.f32.xlu0 %v4622
          %v4629 = vpop.xlane.xlu0 %4628
          %4630 = vadd.xlane.f32.xlu0 %v4623
          %v4631 = vpop.xlane.xlu0 %4630
          %v4632 = vmul.f32 %v4625, %v1541
          %v4633 = vmul.f32 %v4627, %v1541
          %v4634 = vmul.f32 %v4629, %v1541
          %v4635 = vmul.f32 %v4631, %v1541
          %v4636 = vadd.f32 %v4632, 1e-05
          %v4637 = vadd.f32 %v4633, 1e-05
          %v4638 = vadd.f32 %v4634, 1e-05
          %v4639 = vadd.f32 %v4635, 1e-05
          %v4640 = vrsqrt.pop %v4636
          %v4641 = vmul.f32 %v4640, %v4636
          %v4642 = vmul.f32 %v4641, %v4640
          %v4643 = vmul.f32 0.5, %v4642
          %v4644 = vsub.f32 1.5, %v4643
          %v4645 = vmul.f32 %v4640, %v4644
          %vm4646 = vweird.f32 %v4636
          %vm4647 = vweird.f32 %v4640
          %vm4648 = vmor %vm4646, %vm4647
          %v4649 = vsel %vm4648, %v4640, %v4645
          %v4650 = vrsqrt.pop %v4637
          %v4651 = vmul.f32 %v4650, %v4637
          %v4652 = vmul.f32 %v4651, %v4650
          %v4653 = vmul.f32 0.5, %v4652
          %v4654 = vsub.f32 1.5, %v4653
          %v4655 = vmul.f32 %v4650, %v4654
          %vm4656 = vweird.f32 %v4637
          %vm4657 = vweird.f32 %v4650
          %vm4658 = vmor %vm4656, %vm4657
          %v4659 = vsel %vm4658, %v4650, %v4655
          %v4660 = vrsqrt.pop %v4638
          %v4661 = vmul.f32 %v4660, %v4638
          %v4662 = vmul.f32 %v4661, %v4660
          %v4663 = vmul.f32 0.5, %v4662
          %v4664 = vsub.f32 1.5, %v4663
          %v4665 = vmul.f32 %v4660, %v4664
          %vm4666 = vweird.f32 %v4638
          %vm4667 = vweird.f32 %v4660
          %vm4668 = vmor %vm4666, %vm4667
          %v4669 = vsel %vm4668, %v4660, %v4665
          %v4670 = vrsqrt.pop %v4639
          %v4671 = vmul.f32 %v4670, %v4639
          %v4672 = vmul.f32 %v4671, %v4670
          %v4673 = vmul.f32 0.5, %v4672
          %v4674 = vsub.f32 1.5, %v4673
          %v4675 = vmul.f32 %v4670, %v4674
          %vm4676 = vweird.f32 %v4639
          %vm4677 = vweird.f32 %v4670
          %vm4678 = vmor %vm4676, %vm4677
          %v4679 = vsel %vm4678, %v4670, %v4675
          %v4680 = vmul.f32 %v4616, %v4649
          %v4681 = vmul.f32 %v4617, %v4659
          %v4682 = vmul.f32 %v4618, %v4669
          %v4683 = vmul.f32 %v4619, %v4679
          %v4685 = vperm.slane %v4602, 0
          %v4687 = vmul.f32 %v4680, %v4685
          %v4688 = vmul.f32 %v4681, %v4685
          %v4689 = vmul.f32 %v4682, %v4685
          %v4690 = vmul.f32 %v4683, %v4685
          %v4692 = vperm.slane %v4603, 0
          %v4694 = vadd.f32 %v4687, %v4692
          %v4695 = vadd.f32 %v4688, %v4692
          %v4696 = vadd.f32 %v4689, %v4692
          %v4697 = vadd.f32 %v4690, %v4692
          %v4698 = vpack.c.bf16 %v4695, %v4694
          %v4699 = vpack.c.bf16 %v4697, %v4696
          %v4700 = vld [vmem:[%s8] sm:$0xf]
          %v4701 = vld [vmem:[%s8 + $0x4] sm:$0xf]
          %v4702 = vld [vmem:[%s8 + $0x8] sm:$0xf]
          %v4703 = vld [vmem:[%s8 + $0xc] sm:$0xf]
          %v4704 = vld [vmem:[%s8 + $0x10] sm:$0xf]
          %v4705 = vld [vmem:[%s8 + $0x14] sm:$0xf]
          %v4706 = vld [vmem:[%s8 + $0x18] sm:$0xf]
          %v4707 = vld [vmem:[%s8 + $0x1c] sm:$0xf]
          %v4708 = vld [vmem:[%s8 + $0x20] sm:$0xf]
          %v4709 = vld [vmem:[%s8 + $0x24] sm:$0xf]
          %v4710 = vld [vmem:[%s8 + $0x28] sm:$0xf]
          %v4711 = vld [vmem:[%s8 + $0x2c] sm:$0xf]
          %v4712 = vld [vmem:[%s8 + $0x30] sm:$0xf]
          %v4713 = vld [vmem:[%s8 + $0x34] sm:$0xf]
          %v4714 = vld [vmem:[%s8 + $0x38] sm:$0xf]
          %v4715 = vld [vmem:[%s8 + $0x3c] sm:$0xf]
          %v4716 = vld [vmem:[%s9 + $0x9] sm:$0x1]
          %v4718 = vperm.slane %v4716, 0
          %v4736 = vunpack.c.l.b16 %v4700
          %v4737 = vunpack.c.l.b16 %v4701
          %v4738 = vunpack.c.l.b16 %v4702
          %v4739 = vunpack.c.l.b16 %v4703
          %v4740 = vunpack.c.l.b16 %v4704
          %v4741 = vunpack.c.l.b16 %v4705
          %v4742 = vunpack.c.l.b16 %v4706
          %v4743 = vunpack.c.l.b16 %v4707
          %v4744 = vunpack.c.l.b16 %v4708
          %v4745 = vunpack.c.l.b16 %v4709
          %v4746 = vunpack.c.l.b16 %v4710
          %v4747 = vunpack.c.l.b16 %v4711
          %v4748 = vunpack.c.l.b16 %v4712
          %v4749 = vunpack.c.l.b16 %v4713
          %v4750 = vunpack.c.l.b16 %v4714
          %v4751 = vunpack.c.l.b16 %v4715
          %v4752 = vpack.c.b16 %v4737, %v4736
          %v4753 = vpack.c.b16 %v4739, %v4738
          %v4754 = vpack.c.b16 %v4741, %v4740
          %v4755 = vpack.c.b16 %v4743, %v4742
          %v4756 = vpack.c.b16 %v4745, %v4744
          %v4757 = vpack.c.b16 %v4747, %v4746
          %v4758 = vpack.c.b16 %v4749, %v4748
          %v4759 = vpack.c.b16 %v4751, %v4750
          %4768 = vmatpush.bf16.msra.mxu0 %v4759
          %4769 = vmatpush.bf16.msra.mxu0 %v4758
          %4770 = vmatpush.bf16.msra.mxu0 %v4757
          %4771 = vmatpush.bf16.msra.mxu0 %v4756
          %4772 = vmatpush.bf16.msra.mxu0 %v4755
          %4773 = vmatpush.bf16.msra.mxu0 %v4754
          %4774 = vmatpush.bf16.msra.mxu0 %v4753
          %4775 = vmatpush.bf16.msra.mxu0 %v4752
          %4776 = vmatmul.bf16.gmra.mxu0 %v4698
          %v4777 = vpop.f32.mrf.mxu0
          %v4778 = vadd.f32 %v4718, %v4777
          %v4779 = vpop.f32.mrf.mxu0
          %v4780 = vadd.f32 %v4718, %v4779
          %4781 = vmatmul.bf16.gmra.mxu0 %v4699
          %v4782 = vpop.f32.mrf.mxu0
          %v4783 = vadd.f32 %v4718, %v4782
          %v4784 = vpop.f32.mrf.mxu0
          %v4785 = vadd.f32 %v4718, %v4784
          %4786 = vdwg.mxu0
          %4787 = vst [vmem:[%s503] sm:$0xff] %v4778
          %4788 = vst [vmem:[%s503 + $0x8] sm:$0xff] %v4780
          %4789 = vst [vmem:[%s503 + $0x10] sm:$0xff] %v4783
          %4790 = vst [vmem:[%s503 + $0x18] sm:$0xff] %v4785
        $region84: #{traj_predict_policy_forward.1} parent=71 // pred_fallthru
          _
        %p4791 = scmp.lt.s32.totalorder %s29, 1
        %s4792 = scalar_select %p4791, %s29, 1
        %s4793 = smul.addr %s4792, 4
        %s4794 = smul.addr %s4793, 8
        %s4795 = scalar_lea.vmem %s13, %s4794
        // Predicated region
        $region85: #{traj_predict_policy_forward.1} parent=71 // pred_check
          %p4796 = pneg %p343
        $region86: #{traj_predict_policy_forward.1} parent=71 // pred_check_branch
          %4798 = sbr.rel (%p4796) target = $region88
        $region87: #{traj_predict_policy_forward.1} parent=71 // pred_region
          _
        $region88: #{traj_predict_policy_forward.1} parent=71 // pred_fallthru
          _
      $region72: #{traj_predict_policy_forward.1} parent=5 // pred_fallthru
        _
      %p4799 = scmp.le.s32.totalorder 2, %s20
      // Predicated region
      $region89: #{traj_predict_policy_forward.1} parent=5 // pred_check
        %p4800 = pneg %p4799
      $region90: #{traj_predict_policy_forward.1} parent=5 // pred_check_branch
        %4802 = sbr.rel (%p4800) target = $region92
      $region91: #{traj_predict_policy_forward.1} parent=5 // pred_region
        %s4803 = ssub.s32 %s20, 2
        // Predicated region
        $region93: #{traj_predict_policy_forward.1} parent=91 // pred_check
          %p4804 = pneg %p349
        $region94: #{traj_predict_policy_forward.1} parent=91 // pred_check_branch
          %4806 = sbr.rel (%p4804) target = $region96
        $region95: #{traj_predict_policy_forward.1} parent=91 // pred_region
          %p4807 = scmp.lt.s32.totalorder %s31, 1
          %s4808 = scalar_select %p4807, %s31, 1
          %s4809 = smul.addr %s4808, 4
          %s4810 = smul.addr %s4809, 8
          %s4811 = scalar_lea.vmem %s13, %s4810
        $region96: #{traj_predict_policy_forward.1} parent=91 // pred_fallthru
          _
      $region92: #{traj_predict_policy_forward.1} parent=5 // pred_fallthru
        _
    $region6: #{traj_predict_policy_forward.1} parent=1 // loop_footer
      %s24 = sadd.s32 1, %s20
    $region7: #{traj_predict_policy_forward.1} parent=1 // loop_footer_branch
      %19 = sbr.rel target = $region3
    $region8: #{traj_predict_policy_forward.1} parent=1 // loop_exit
      _
    %4812 = vsyncpa [#allocation7], 1
    %s4813 = scalar_lea.sflag [#allocation7], 1
    %4814 = vsyncpa %s4813, 1

</llo_original>
